<compile_context>
chip_gen: v6e
topology: v6e:2x2x1
jax: 0.10.0
libtpu: 0.0.40
codegen_flags: <defaults>
</compile_context>

<pallas_src>
import functools

import jax
import jax.numpy as jnp
from jax.experimental import pallas as pl
from jax.experimental.pallas import tpu as pltpu

# ----------------------------- config ---------------------------------------
KERNEL_SIZE = 5
PADDING = 2
STRIDE = 2            # config.stride       (EncoderBlock)
STRIDE_GAN = 2        # config.stride_gan   (first discriminator conv)
DISCRIM_CHANNELS = [8, 16, 32, 64]
RECON_LEVEL = 3
FC_INPUT_GAN = 1
FC_OUTPUT_GAN = 32
BN_EPS = 1e-5
IN_SIZE = 16          # 16 -> 8 -> 4 -> 2 -> 1 under four stride-2 convs

_VMEM_SPEC = pl.BlockSpec(memory_space=pltpu.MemorySpace.VMEM)


# ----------------------- in-kernel building blocks ---------------------------
def _pool_mats(pc, c):
    """0/1 pooling (pc,c) and broadcast (c,pc) matrices for the flat (p*C + c)
    activation layout, generated in-kernel from iota (no DMA)."""
    f32, i32 = jnp.float32, jnp.int32
    r = jax.lax.broadcasted_iota(i32, (pc, c), 0) % c
    k = jax.lax.broadcasted_iota(i32, (pc, c), 1)
    s = (r == k).astype(f32)                        # (pc, c): sum spatial copies
    rt = jax.lax.broadcasted_iota(i32, (c, pc), 1) % c
    kt = jax.lax.broadcasted_iota(i32, (c, pc), 0)
    st = (rt == kt).astype(f32)                     # (c, pc): broadcast back
    return s, st


def _bn_relu_flat(h, mask, s, st, gamma_c, beta_c, inv_count):
    """Training-mode BatchNorm2d + ReLU on a flat (N, P*C) activation.

    Two MXU ops total: one pooling matmul of the stacked [sum, sum-of-squares]
    and one broadcast matmul of the stacked [scale, shift] (gamma folded into
    scale, beta+mean folded into shift).  Padded batch rows (mask==0) are
    excluded from the statistics; inv_count uses the real batch size.
    """
    hm = h if mask is None else h * mask
    stats = jnp.concatenate(
        [jnp.sum(hm, axis=0, keepdims=True),
         jnp.sum(hm * h, axis=0, keepdims=True)], axis=0)             # (2, P*C)
    pooled = jnp.dot(stats, s, preferred_element_type=jnp.float32) * inv_count
    mean_c = pooled[0:1, :]                                           # (1, C)
    var_c = pooled[1:2, :] - mean_c * mean_c                          # biased (PyTorch)
    scale_c = jax.lax.rsqrt(var_c + BN_EPS) * gamma_c
    shift_c = beta_c - mean_c * scale_c
    bc = jnp.dot(jnp.concatenate([scale_c, shift_c], axis=0), st,
                 preferred_element_type=jnp.float32)                  # (2, P*C)
    return jnp.maximum(h * bc[0:1, :] + bc[1:2, :], 0.0)


def _bn_relu_cols(h, mask, gamma, beta, inv_count):
    """Training-mode BN with spatial size 1 (BN2d on 1x1 / BN1d): per-column stats."""
    hm = h if mask is None else h * mask
    mean = jnp.sum(hm, axis=0, keepdims=True) * inv_count
    var = jnp.sum(hm * h, axis=0, keepdims=True) * inv_count - mean * mean
    scale = jax.lax.rsqrt(var + BN_EPS) * gamma
    shift = beta - mean * scale
    return jnp.maximum(h * scale + shift, 0.0)


def _make_kernel(n_real, n_pad):
    """Whole-network kernel: conv stack -> recon-level output AND GAN head."""
    f32, bf16 = jnp.float32, jnp.bfloat16

    def kernel(x_ref, t0, t1, t2, t3, small, fcw, rec_ref, gan_ref):
        mask = None
        if n_pad != n_real:   # zero-padded batch rows -> mask them out of BN stats
            mask = (jax.lax.broadcasted_iota(jnp.int32, (n_pad, 1), 0)
                    < n_real).astype(f32)

        # layer 0: Conv2d(3 -> 8, k=5, stride_gan, pad=2, bias) + ReLU ; (N, 8*8*8)
        h = jnp.dot(x_ref[...], t0[...], preferred_element_type=f32) + small[0:1, :]
        h = jnp.maximum(h, 0.0)

        # layer 1: EncoderBlock(8 -> 16): conv (no bias) + BN + ReLU ; (N, 4*4*16)
        h = jnp.dot(h.astype(bf16), t1[...], preferred_element_type=f32)
        s1, st1 = _pool_mats(256, 16)
        h = _bn_relu_flat(h, mask, s1, st1, small[1:2, 0:16], small[2:3, 0:16],
                          1.0 / (n_real * 16))

        # layer 2: EncoderBlock(16 -> 32) ; (N, 2*2*32)
        h = jnp.dot(h.astype(bf16), t2[...], preferred_element_type=f32)
        s2, st2 = _pool_mats(128, 32)
        h = _bn_relu_flat(h, mask, s2, st2, small[3:4, 0:32], small[4:5, 0:32],
                          1.0 / (n_real * 4))

        # layer 3 conv (recon level), spatial 1x1, output padded 64 -> 128 lanes
        h = jnp.dot(h.astype(bf16), t3[...], preferred_element_type=f32)   # (N, 128)
        rec_ref[...] = h                 # REC output (lane-dense; cols 64.. are 0)

        # GAN head: layer-3 BN + ReLU (zero-padded gamma/beta keep pad cols at 0)
        h = _bn_relu_cols(h, mask, small[5:6, 0:128], small[6:7, 0:128], 1.0 / n_real)
        # fc1 (128->32, zero-padded rows), BN1d + ReLU, fc2 (32->1) + bias, sigmoid
        h = jnp.dot(h, fcw[0:128, :], preferred_element_type=f32)          # (N, 32)
        h = _bn_relu_cols(h, mask, small[7:8, 0:32], small[8:9, 0:32], 1.0 / n_real)
        logits = (jnp.dot(h, fcw[128:160, 0:1], preferred_element_type=f32)
                  + small[9:10, 0:1])                                      # (N, 1)
        gan_ref[...] = jnp.broadcast_to(jax.nn.sigmoid(logits), (n_pad, 128))

    return kernel


# ----------------------- one-time parameter preparation ----------------------
def _conv_as_matmul(w_oihw, h_in, w_in, stride, pad, in_order):
    """Dense T with flatten_out_nhwc(conv2d(x, w)) == flatten_in(x) @ T."""
    cout, cin, _, _ = w_oihw.shape
    feat_in = cin * h_in * w_in
    eye = jnp.eye(feat_in, dtype=jnp.float32)
    if in_order == "NCHW":
        basis = eye.reshape(feat_in, cin, h_in, w_in)
    else:  # "NHWC" flat layout of intermediate activations
        basis = eye.reshape(feat_in, h_in, w_in, cin).transpose(0, 3, 1, 2)
    out = jax.lax.conv_general_dilated(
        basis, w_oihw, window_strides=(stride, stride),
        padding=[(pad, pad), (pad, pad)],
        dimension_numbers=("NCHW", "OIHW", "NCHW"),
        precision=jax.lax.Precision.HIGHEST)
    return out.transpose(0, 2, 3, 1).reshape(feat_in, -1)   # (feat_in, Ho*Wo*Cout)


def prepare_params(raw, in_size=IN_SIZE):
    """Precompute kernel-ready weight layouts (runs once, outside the forward)."""
    sp0 = in_size                # conv0 input spatial (16)
    sp1 = sp0 // STRIDE_GAN      # (8)
    sp2 = sp1 // STRIDE          # (4)
    sp3 = sp2 // STRIDE          # (2)
    assert sp3 // STRIDE == FC_INPUT_GAN
    bf16 = jnp.bfloat16

    t3 = _conv_as_matmul(raw["enc3_w"], sp3, sp3, STRIDE, PADDING, "NHWC")  # (128, 64)
    t3 = jnp.pad(t3, ((0, 0), (0, 128 - t3.shape[1])))                      # (128, 128)
    p = {
        "t0": _conv_as_matmul(raw["conv0_w"], sp0, sp0, STRIDE_GAN, PADDING,
                              "NCHW").astype(bf16),                         # (768, 512)
        "t1": _conv_as_matmul(raw["enc1_w"], sp1, sp1, STRIDE, PADDING,
                              "NHWC").astype(bf16),                         # (512, 256)
        "t2": _conv_as_matmul(raw["enc2_w"], sp2, sp2, STRIDE, PADDING,
                              "NHWC").astype(bf16),                         # (256, 128)
        "t3": t3.astype(bf16),                                              # (128, 128)
    }

    def row(v, width=512):
        v = jnp.asarray(v, jnp.float32).reshape(-1)
        return jnp.pad(v, (0, width - v.shape[0])).reshape(1, width)

    # All small parameters packed into ONE f32 buffer (row-aligned slices only).
    p["small"] = jnp.concatenate([
        row(jnp.tile(raw["conv0_b"], sp1 * sp1)),       # row 0: conv0 bias tiled (512)
        row(raw["enc1_gamma"]), row(raw["enc1_beta"]),  # rows 1-2 (16)
        row(raw["enc2_gamma"]), row(raw["enc2_beta"]),  # rows 3-4 (32)
        row(raw["enc3_gamma"]), row(raw["enc3_beta"]),  # rows 5-6 (64, zero-padded)
        row(raw["bn1d_gamma"]), row(raw["bn1d_beta"]),  # rows 7-8 (32)
        row(raw["fc2_b"]),                              # row 9  (1)
    ], axis=0)                                          # (10, 512) f32

    # fc weights packed into one buffer: w_fc1 (rows padded 64->128) over w_fc2.
    w_fc1 = jnp.pad(raw["fc1_w"].T, ((0, 64), (0, 0)))  # (128, 32)
    w_fc2 = jnp.pad(raw["fc2_w"].T, ((0, 0), (0, 31)))  # (32, 32), col 0 real
    p["fcw"] = jnp.concatenate([w_fc1, w_fc2], axis=0).astype(jnp.float32)  # (160, 32)
    return p


# --------------------------- parameter init ----------------------------------
def init_params(key):
    """Raw parameters in PyTorch layouts (Conv2d OIHW, Linear (out,in))."""
    ks = KERNEL_SIZE
    chans = DISCRIM_CHANNELS
    keys = jax.random.split(key, 16)
    p = {}
    p["conv0_w"] = 0.05 * jax.random.normal(keys[0], (chans[0], 3, ks, ks), jnp.float32)
    p["conv0_b"] = 0.05 * jax.random.normal(keys[1], (chans[0],), jnp.float32)
    cin = chans[0]
    for i, cout in enumerate(chans[1:], start=1):
        p[f"enc{i}_w"] = 0.05 * jax.random.normal(keys[2 * i], (cout, cin, ks, ks), jnp.float32)
        p[f"enc{i}_gamma"] = 1.0 + 0.1 * jax.random.normal(keys[2 * i + 1], (cout,), jnp.float32)
        p[f"enc{i}_beta"] = 0.1 * jax.random.normal(keys[8 + i], (cout,), jnp.float32)
        cin = cout
    fc_in_feat = FC_INPUT_GAN * FC_INPUT_GAN * chans[3]
    p["fc1_w"] = 0.05 * jax.random.normal(keys[12], (FC_OUTPUT_GAN, fc_in_feat), jnp.float32)
    p["bn1d_gamma"] = 1.0 + 0.1 * jax.random.normal(keys[13], (FC_OUTPUT_GAN,), jnp.float32)
    p["bn1d_beta"] = 0.1 * jax.random.normal(keys[14], (FC_OUTPUT_GAN,), jnp.float32)
    p["fc2_w"] = 0.05 * jax.random.normal(keys[15], (1, FC_OUTPUT_GAN), jnp.float32)
    p["fc2_b"] = jnp.zeros((1,), jnp.float32)
    return p


# ------------------------------ forward --------------------------------------
@functools.partial(jax.jit, static_argnames=("mode",))
def discriminator_forward(prep, ten_orig, ten_predicted, ten_sampled, mode="REC"):
    ten = jnp.concatenate([ten_orig, ten_predicted, ten_sampled], axis=0)  # cat on batch
    n = ten.shape[0]
    n_pad = ((n + 7) // 8) * 8                          # (8,128)-friendly batch
    x = ten.reshape(n, -1).astype(jnp.bfloat16)         # NCHW flatten (matches t0)
    if n_pad != n:
        x = jnp.pad(x, ((0, n_pad - n), (0, 0)))

    rec, gan = pl.pallas_call(
        _make_kernel(n, n_pad),
        out_shape=(jax.ShapeDtypeStruct((n_pad, 128), jnp.float32),   # recon features
                   jax.ShapeDtypeStruct((n_pad, 128), jnp.float32)),  # gan probability
        in_specs=[_VMEM_SPEC] * 7,
        out_specs=(_VMEM_SPEC, _VMEM_SPEC),
    )(x, prep["t0"], prep["t1"], prep["t2"], prep["t3"], prep["small"], prep["fcw"])

    rec = rec[:n, :DISCRIM_CHANNELS[3] * FC_INPUT_GAN * FC_INPUT_GAN]
    gan = gan[:n, :1]
    if mode == "REC":
        return rec
    if mode == "GAN":
        return gan
    return rec, gan      # mode == "BOTH": one fused call, both results


# ------------------------- plain-XLA reference (for checking) ----------------
def reference_forward(raw, ten_orig, ten_predicted, ten_sampled, mode="REC"):
    x = jnp.concatenate([ten_orig, ten_predicted, ten_sampled], axis=0)

    def conv(x, w, stride):
        return jax.lax.conv_general_dilated(
            x, w, (stride, stride), [(PADDING, PADDING)] * 2,
            dimension_numbers=("NCHW", "OIHW", "NCHW"),
            precision=jax.lax.Precision.HIGHEST)

    def bn(x, g, b, axes):
        mean = x.mean(axis=axes, keepdims=True)
        var = ((x - mean) ** 2).mean(axis=axes, keepdims=True)
        shape = [1] * x.ndim
        shape[1] = -1
        return (x - mean) * jax.lax.rsqrt(var + BN_EPS) * g.reshape(shape) + b.reshape(shape)

    h = jax.nn.relu(conv(x, raw["conv0_w"], STRIDE_GAN) + raw["conv0_b"].reshape(1, -1, 1, 1))
    for i in (1, 2, 3):
        c = conv(h, raw[f"enc{i}_w"], STRIDE)
        if mode == "REC" and i == RECON_LEVEL:
            return c.reshape(c.shape[0], -1)
        h = jax.nn.relu(bn(c, raw[f"enc{i}_gamma"], raw[f"enc{i}_beta"], (0, 2, 3)))
    h = h.reshape(h.shape[0], -1)
    h = jnp.dot(h, raw["fc1_w"].T, precision=jax.lax.Precision.HIGHEST)
    h = jax.nn.relu(bn(h, raw["bn1d_gamma"], raw["bn1d_beta"], (0,)))
    logits = jnp.dot(h, raw["fc2_w"].T, precision=jax.lax.Precision.HIGHEST) + raw["fc2_b"]
    return jax.nn.sigmoid(logits)


# -------------------------------- main ---------------------------------------
if __name__ == "__main__":
    key = jax.random.PRNGKey(0)
    kp, k1, k2, k3 = jax.random.split(key, 4)
    raw = init_params(kp)
    prep = prepare_params(raw)   # one-time weight preprocessing (bf16 + packing)

    B, C, S = 2, 3, IN_SIZE
    ten_orig = jax.random.normal(k1, (B, C, S, S), jnp.float32)
    ten_pred = jax.random.normal(k2, (B, C, S, S), jnp.float32)
    ten_samp = jax.random.normal(k3, (B, C, S, S), jnp.float32)

    # One fused pallas_call produces BOTH the recon-level features and the GAN
    # probability (weights DMAed / conv stack computed exactly once).
    rec, gan = discriminator_forward(prep, ten_orig, ten_pred, ten_samp, mode="BOTH")
    rec, gan = jax.block_until_ready((rec, gan))

    assert rec.shape == (3 * B, DISCRIM_CHANNELS[3] * FC_INPUT_GAN * FC_INPUT_GAN)
    assert gan.shape == (3 * B, 1)
    assert bool(jnp.all((gan >= 0.0) & (gan <= 1.0)))

    # Numerical check of the fused bf16-weight kernel against a plain-XLA f32 reference.
    rec_ref = reference_forward(raw, ten_orig, ten_pred, ten_samp, mode="REC")
    gan_ref = reference_forward(raw, ten_orig, ten_pred, ten_samp, mode="GAN")
    assert jnp.allclose(rec, rec_ref, rtol=3e-2, atol=3e-2), \
        float(jnp.max(jnp.abs(rec - rec_ref)))
    assert jnp.allclose(gan, gan_ref, rtol=3e-2, atol=3e-2), \
        float(jnp.max(jnp.abs(gan - gan_ref)))

    print("KERNEL_OK")
</pallas_src>

<mosaic_0001>
module attributes {stable_mosaic.version = 11 : i64} {
  func.func @kernel(%arg0: memref<8x768xbf16, #tpu.memory_space<vmem>>, %arg1: memref<768x512xbf16, #tpu.memory_space<vmem>>, %arg2: memref<512x256xbf16, #tpu.memory_space<vmem>>, %arg3: memref<256x128xbf16, #tpu.memory_space<vmem>>, %arg4: memref<128x128xbf16, #tpu.memory_space<vmem>>, %arg5: memref<10x512xf32, #tpu.memory_space<vmem>>, %arg6: memref<160x32xf32, #tpu.memory_space<vmem>>, %arg7: memref<8x128xf32, #tpu.memory_space<vmem>>, %arg8: memref<8x128xf32, #tpu.memory_space<vmem>>) attributes {dimension_semantics = [], scalar_prefetch = 0 : i64, scratch_operands = 0 : i64, tpu.core_type = #tpu.core_type<tc>} {
    %0 = tpu.iota {dimensions = array<i32: 0>} : vector<8x1xi32>
    %c6_i32 = arith.constant 6 : i32
    %1 = vector.broadcast %c6_i32 : i32 to vector<8x1xi32>
    %2 = arith.cmpi slt, %0, %1 : vector<8x1xi32>
    %3 = arith.extui %2 : vector<8x1xi1> to vector<8x1xi32>
    %4 = arith.sitofp %3 : vector<8x1xi32> to vector<8x1xf32>
    %c0 = arith.constant 0 : index
    %c0_0 = arith.constant 0 : index
    %5 = vector.load %arg0[%c0, %c0_0] : memref<8x768xbf16, #tpu.memory_space<vmem>>, vector<8x768xbf16>
    %c0_1 = arith.constant 0 : index
    %c0_2 = arith.constant 0 : index
    %6 = vector.load %arg1[%c0_1, %c0_2] : memref<768x512xbf16, #tpu.memory_space<vmem>>, vector<768x512xbf16>
    %cst = arith.constant dense<0.000000e+00> : vector<8x512xf32>
    %7 = tpu.matmul %5, %6, %cst {dimension_numbers = #tpu.dot_dimension_numbers<[1], [0], [0], [1], [0, 0, 1, 1], [], []>} : vector<8x768xbf16>, vector<768x512xbf16>, vector<8x512xf32> -> vector<8x512xf32>
    %c0_3 = arith.constant 0 : index
    %c0_4 = arith.constant 0 : index
    %8 = vector.load %arg5[%c0_3, %c0_4] : memref<10x512xf32, #tpu.memory_space<vmem>>, vector<1x512xf32>
    %9 = vector.broadcast %8 : vector<1x512xf32> to vector<8x512xf32>
    %10 = arith.addf %7, %9 : vector<8x512xf32>
    %cst_5 = arith.constant 0.000000e+00 : f32
    %11 = vector.broadcast %cst_5 : f32 to vector<8x512xf32>
    %12 = arith.maximumf %10, %11 : vector<8x512xf32>
    %13 = arith.truncf %12 : vector<8x512xf32> to vector<8x512xbf16>
    %c0_6 = arith.constant 0 : index
    %c0_7 = arith.constant 0 : index
    %14 = vector.load %arg2[%c0_6, %c0_7] : memref<512x256xbf16, #tpu.memory_space<vmem>>, vector<512x256xbf16>
    %cst_8 = arith.constant dense<0.000000e+00> : vector<8x256xf32>
    %15 = tpu.matmul %13, %14, %cst_8 {dimension_numbers = #tpu.dot_dimension_numbers<[1], [0], [0], [1], [0, 0, 1, 1], [], []>} : vector<8x512xbf16>, vector<512x256xbf16>, vector<8x256xf32> -> vector<8x256xf32>
    %16 = tpu.iota {dimensions = array<i32: 0>} : vector<256x16xi32>
    %c16_i32 = arith.constant 16 : i32
    %c0_i32 = arith.constant 0 : i32
    %17 = arith.cmpi eq, %c16_i32, %c0_i32 : i32
    %c1_i32 = arith.constant 1 : i32
    %18 = arith.select %17, %c1_i32, %c16_i32 : i32
    %19 = vector.broadcast %18 : i32 to vector<256x16xi32>
    %20 = arith.remsi %16, %19 : vector<256x16xi32>
    %c0_i32_9 = arith.constant 0 : i32
    %21 = vector.broadcast %c0_i32_9 : i32 to vector<256x16xi32>
    %22 = arith.cmpi ne, %20, %21 : vector<256x16xi32>
    %c0_i32_10 = arith.constant 0 : i32
    %23 = vector.broadcast %c0_i32_10 : i32 to vector<256x16xi32>
    %24 = arith.cmpi slt, %20, %23 : vector<256x16xi32>
    %c0_i32_11 = arith.constant 0 : i32
    %25 = arith.cmpi slt, %18, %c0_i32_11 : i32
    %26 = vector.broadcast %25 : i1 to vector<256x16xi1>
    %27 = vector.broadcast %26 : vector<256x16xi1> to vector<256x16xi1>
    %28 = arith.xori %24, %27 : vector<256x16xi1>
    %29 = arith.andi %28, %22 : vector<256x16xi1>
    %30 = vector.broadcast %18 : i32 to vector<256x16xi32>
    %31 = arith.addi %20, %30 : vector<256x16xi32>
    %32 = arith.select %29, %31, %20 : vector<256x16xi1>, vector<256x16xi32>
    %33 = tpu.iota {dimensions = array<i32: 1>} : vector<256x16xi32>
    %34 = arith.cmpi eq, %32, %33 : vector<256x16xi32>
    %35 = arith.extui %34 : vector<256x16xi1> to vector<256x16xi32>
    %36 = arith.sitofp %35 : vector<256x16xi32> to vector<256x16xf32>
    %37 = tpu.iota {dimensions = array<i32: 1>} : vector<16x256xi32>
    %c16_i32_12 = arith.constant 16 : i32
    %c0_i32_13 = arith.constant 0 : i32
    %38 = arith.cmpi eq, %c16_i32_12, %c0_i32_13 : i32
    %c1_i32_14 = arith.constant 1 : i32
    %39 = arith.select %38, %c1_i32_14, %c16_i32_12 : i32
    %40 = vector.broadcast %39 : i32 to vector<16x256xi32>
    %41 = arith.remsi %37, %40 : vector<16x256xi32>
    %c0_i32_15 = arith.constant 0 : i32
    %42 = vector.broadcast %c0_i32_15 : i32 to vector<16x256xi32>
    %43 = arith.cmpi ne, %41, %42 : vector<16x256xi32>
    %c0_i32_16 = arith.constant 0 : i32
    %44 = vector.broadcast %c0_i32_16 : i32 to vector<16x256xi32>
    %45 = arith.cmpi slt, %41, %44 : vector<16x256xi32>
    %c0_i32_17 = arith.constant 0 : i32
    %46 = arith.cmpi slt, %39, %c0_i32_17 : i32
    %47 = vector.broadcast %46 : i1 to vector<16x256xi1>
    %48 = vector.broadcast %47 : vector<16x256xi1> to vector<16x256xi1>
    %49 = arith.xori %45, %48 : vector<16x256xi1>
    %50 = arith.andi %49, %43 : vector<16x256xi1>
    %51 = vector.broadcast %39 : i32 to vector<16x256xi32>
    %52 = arith.addi %41, %51 : vector<16x256xi32>
    %53 = arith.select %50, %52, %41 : vector<16x256xi1>, vector<16x256xi32>
    %54 = tpu.iota {dimensions = array<i32: 0>} : vector<16x256xi32>
    %55 = arith.cmpi eq, %53, %54 : vector<16x256xi32>
    %56 = arith.extui %55 : vector<16x256xi1> to vector<16x256xi32>
    %57 = arith.sitofp %56 : vector<16x256xi32> to vector<16x256xf32>
    %c1 = arith.constant 1 : index
    %c0_18 = arith.constant 0 : index
    %58 = vector.load %arg5[%c1, %c0_18] : memref<10x512xf32, #tpu.memory_space<vmem>>, vector<1x16xf32>
    %c2 = arith.constant 2 : index
    %c0_19 = arith.constant 0 : index
    %59 = vector.load %arg5[%c2, %c0_19] : memref<10x512xf32, #tpu.memory_space<vmem>>, vector<1x16xf32>
    %60 = vector.broadcast %4 : vector<8x1xf32> to vector<8x256xf32>
    %61 = arith.mulf %15, %60 : vector<8x256xf32>
    %cst_20 = arith.constant dense<0.000000e+00> : vector<256xf32>
    %62 = vector.multi_reduction <add>, %61, %cst_20 [0] : vector<8x256xf32> to vector<256xf32>
    %63 = vector.shape_cast %62 : vector<256xf32> to vector<1x256xf32>
    %64 = arith.mulf %61, %15 : vector<8x256xf32>
    %cst_21 = arith.constant dense<0.000000e+00> : vector<256xf32>
    %65 = vector.multi_reduction <add>, %64, %cst_21 [0] : vector<8x256xf32> to vector<256xf32>
    %66 = vector.shape_cast %65 : vector<256xf32> to vector<1x256xf32>
    %67 = tpu.concatenate %63, %66 in 0 : vector<1x256xf32>, vector<1x256xf32> -> vector<2x256xf32>
    %cst_22 = arith.constant dense<0.000000e+00> : vector<2x16xf32>
    %68 = tpu.matmul %67, %36, %cst_22 {dimension_numbers = #tpu.dot_dimension_numbers<[1], [0], [0], [1], [0, 0, 1, 1], [], []>} : vector<2x256xf32>, vector<256x16xf32>, vector<2x16xf32> -> vector<2x16xf32>
    %cst_23 = arith.constant 0.010416667 : f32
    %69 = vector.broadcast %cst_23 : f32 to vector<2x16xf32>
    %70 = arith.mulf %68, %69 : vector<2x16xf32>
    %71 = vector.extract_strided_slice %70 {offsets = [0, 0], sizes = [1, 16], strides = [1, 1]} : vector<2x16xf32> to vector<1x16xf32>
    %72 = vector.extract_strided_slice %70 {offsets = [1, 0], sizes = [1, 16], strides = [1, 1]} : vector<2x16xf32> to vector<1x16xf32>
    %73 = arith.mulf %71, %71 : vector<1x16xf32>
    %74 = arith.subf %72, %73 : vector<1x16xf32>
    %cst_24 = arith.constant 9.99999974E-6 : f32
    %75 = vector.broadcast %cst_24 : f32 to vector<1x16xf32>
    %76 = arith.addf %74, %75 : vector<1x16xf32>
    %77 = math.rsqrt %76 : vector<1x16xf32>
    %78 = arith.mulf %77, %58 : vector<1x16xf32>
    %79 = arith.mulf %71, %78 : vector<1x16xf32>
    %80 = arith.subf %59, %79 : vector<1x16xf32>
    %81 = tpu.concatenate %78, %80 in 0 : vector<1x16xf32>, vector<1x16xf32> -> vector<2x16xf32>
    %cst_25 = arith.constant dense<0.000000e+00> : vector<2x256xf32>
    %82 = tpu.matmul %81, %57, %cst_25 {dimension_numbers = #tpu.dot_dimension_numbers<[1], [0], [0], [1], [0, 0, 1, 1], [], []>} : vector<2x16xf32>, vector<16x256xf32>, vector<2x256xf32> -> vector<2x256xf32>
    %83 = vector.extract_strided_slice %82 {offsets = [0, 0], sizes = [1, 256], strides = [1, 1]} : vector<2x256xf32> to vector<1x256xf32>
    %84 = vector.broadcast %83 : vector<1x256xf32> to vector<8x256xf32>
    %85 = arith.mulf %15, %84 : vector<8x256xf32>
    %86 = vector.extract_strided_slice %82 {offsets = [1, 0], sizes = [1, 256], strides = [1, 1]} : vector<2x256xf32> to vector<1x256xf32>
    %87 = vector.broadcast %86 : vector<1x256xf32> to vector<8x256xf32>
    %88 = arith.addf %85, %87 : vector<8x256xf32>
    %cst_26 = arith.constant 0.000000e+00 : f32
    %89 = vector.broadcast %cst_26 : f32 to vector<8x256xf32>
    %90 = arith.maximumf %88, %89 : vector<8x256xf32>
    %91 = arith.truncf %90 : vector<8x256xf32> to vector<8x256xbf16>
    %c0_27 = arith.constant 0 : index
    %c0_28 = arith.constant 0 : index
    %92 = vector.load %arg3[%c0_27, %c0_28] : memref<256x128xbf16, #tpu.memory_space<vmem>>, vector<256x128xbf16>
    %cst_29 = arith.constant dense<0.000000e+00> : vector<8x128xf32>
    %93 = tpu.matmul %91, %92, %cst_29 {dimension_numbers = #tpu.dot_dimension_numbers<[1], [0], [0], [1], [0, 0, 1, 1], [], []>} : vector<8x256xbf16>, vector<256x128xbf16>, vector<8x128xf32> -> vector<8x128xf32>
    %94 = tpu.iota {dimensions = array<i32: 0>} : vector<128x32xi32>
    %c32_i32 = arith.constant 32 : i32
    %c0_i32_30 = arith.constant 0 : i32
    %95 = arith.cmpi eq, %c32_i32, %c0_i32_30 : i32
    %c1_i32_31 = arith.constant 1 : i32
    %96 = arith.select %95, %c1_i32_31, %c32_i32 : i32
    %97 = vector.broadcast %96 : i32 to vector<128x32xi32>
    %98 = arith.remsi %94, %97 : vector<128x32xi32>
    %c0_i32_32 = arith.constant 0 : i32
    %99 = vector.broadcast %c0_i32_32 : i32 to vector<128x32xi32>
    %100 = arith.cmpi ne, %98, %99 : vector<128x32xi32>
    %c0_i32_33 = arith.constant 0 : i32
    %101 = vector.broadcast %c0_i32_33 : i32 to vector<128x32xi32>
    %102 = arith.cmpi slt, %98, %101 : vector<128x32xi32>
    %c0_i32_34 = arith.constant 0 : i32
    %103 = arith.cmpi slt, %96, %c0_i32_34 : i32
    %104 = vector.broadcast %103 : i1 to vector<128x32xi1>
    %105 = vector.broadcast %104 : vector<128x32xi1> to vector<128x32xi1>
    %106 = arith.xori %102, %105 : vector<128x32xi1>
    %107 = arith.andi %106, %100 : vector<128x32xi1>
    %108 = vector.broadcast %96 : i32 to vector<128x32xi32>
    %109 = arith.addi %98, %108 : vector<128x32xi32>
    %110 = arith.select %107, %109, %98 : vector<128x32xi1>, vector<128x32xi32>
    %111 = tpu.iota {dimensions = array<i32: 1>} : vector<128x32xi32>
    %112 = arith.cmpi eq, %110, %111 : vector<128x32xi32>
    %113 = arith.extui %112 : vector<128x32xi1> to vector<128x32xi32>
    %114 = arith.sitofp %113 : vector<128x32xi32> to vector<128x32xf32>
    %115 = tpu.iota {dimensions = array<i32: 1>} : vector<32x128xi32>
    %c32_i32_35 = arith.constant 32 : i32
    %c0_i32_36 = arith.constant 0 : i32
    %116 = arith.cmpi eq, %c32_i32_35, %c0_i32_36 : i32
    %c1_i32_37 = arith.constant 1 : i32
    %117 = arith.select %116, %c1_i32_37, %c32_i32_35 : i32
    %118 = vector.broadcast %117 : i32 to vector<32x128xi32>
    %119 = arith.remsi %115, %118 : vector<32x128xi32>
    %c0_i32_38 = arith.constant 0 : i32
    %120 = vector.broadcast %c0_i32_38 : i32 to vector<32x128xi32>
    %121 = arith.cmpi ne, %119, %120 : vector<32x128xi32>
    %c0_i32_39 = arith.constant 0 : i32
    %122 = vector.broadcast %c0_i32_39 : i32 to vector<32x128xi32>
    %123 = arith.cmpi slt, %119, %122 : vector<32x128xi32>
    %c0_i32_40 = arith.constant 0 : i32
    %124 = arith.cmpi slt, %117, %c0_i32_40 : i32
    %125 = vector.broadcast %124 : i1 to vector<32x128xi1>
    %126 = vector.broadcast %125 : vector<32x128xi1> to vector<32x128xi1>
    %127 = arith.xori %123, %126 : vector<32x128xi1>
    %128 = arith.andi %127, %121 : vector<32x128xi1>
    %129 = vector.broadcast %117 : i32 to vector<32x128xi32>
    %130 = arith.addi %119, %129 : vector<32x128xi32>
    %131 = arith.select %128, %130, %119 : vector<32x128xi1>, vector<32x128xi32>
    %132 = tpu.iota {dimensions = array<i32: 0>} : vector<32x128xi32>
    %133 = arith.cmpi eq, %131, %132 : vector<32x128xi32>
    %134 = arith.extui %133 : vector<32x128xi1> to vector<32x128xi32>
    %135 = arith.sitofp %134 : vector<32x128xi32> to vector<32x128xf32>
    %c3 = arith.constant 3 : index
    %c0_41 = arith.constant 0 : index
    %136 = vector.load %arg5[%c3, %c0_41] : memref<10x512xf32, #tpu.memory_space<vmem>>, vector<1x32xf32>
    %c4 = arith.constant 4 : index
    %c0_42 = arith.constant 0 : index
    %137 = vector.load %arg5[%c4, %c0_42] : memref<10x512xf32, #tpu.memory_space<vmem>>, vector<1x32xf32>
    %138 = vector.broadcast %4 : vector<8x1xf32> to vector<8x128xf32>
    %139 = arith.mulf %93, %138 : vector<8x128xf32>
    %cst_43 = arith.constant dense<0.000000e+00> : vector<128xf32>
    %140 = vector.multi_reduction <add>, %139, %cst_43 [0] : vector<8x128xf32> to vector<128xf32>
    %141 = vector.shape_cast %140 : vector<128xf32> to vector<1x128xf32>
    %142 = arith.mulf %139, %93 : vector<8x128xf32>
    %cst_44 = arith.constant dense<0.000000e+00> : vector<128xf32>
    %143 = vector.multi_reduction <add>, %142, %cst_44 [0] : vector<8x128xf32> to vector<128xf32>
    %144 = vector.shape_cast %143 : vector<128xf32> to vector<1x128xf32>
    %145 = tpu.concatenate %141, %144 in 0 : vector<1x128xf32>, vector<1x128xf32> -> vector<2x128xf32>
    %cst_45 = arith.constant dense<0.000000e+00> : vector<2x32xf32>
    %146 = tpu.matmul %145, %114, %cst_45 {dimension_numbers = #tpu.dot_dimension_numbers<[1], [0], [0], [1], [0, 0, 1, 1], [], []>} : vector<2x128xf32>, vector<128x32xf32>, vector<2x32xf32> -> vector<2x32xf32>
    %cst_46 = arith.constant 0.0416666679 : f32
    %147 = vector.broadcast %cst_46 : f32 to vector<2x32xf32>
    %148 = arith.mulf %146, %147 : vector<2x32xf32>
    %149 = vector.extract_strided_slice %148 {offsets = [0, 0], sizes = [1, 32], strides = [1, 1]} : vector<2x32xf32> to vector<1x32xf32>
    %150 = vector.extract_strided_slice %148 {offsets = [1, 0], sizes = [1, 32], strides = [1, 1]} : vector<2x32xf32> to vector<1x32xf32>
    %151 = arith.mulf %149, %149 : vector<1x32xf32>
    %152 = arith.subf %150, %151 : vector<1x32xf32>
    %cst_47 = arith.constant 9.99999974E-6 : f32
    %153 = vector.broadcast %cst_47 : f32 to vector<1x32xf32>
    %154 = arith.addf %152, %153 : vector<1x32xf32>
    %155 = math.rsqrt %154 : vector<1x32xf32>
    %156 = arith.mulf %155, %136 : vector<1x32xf32>
    %157 = arith.mulf %149, %156 : vector<1x32xf32>
    %158 = arith.subf %137, %157 : vector<1x32xf32>
    %159 = tpu.concatenate %156, %158 in 0 : vector<1x32xf32>, vector<1x32xf32> -> vector<2x32xf32>
    %cst_48 = arith.constant dense<0.000000e+00> : vector<2x128xf32>
    %160 = tpu.matmul %159, %135, %cst_48 {dimension_numbers = #tpu.dot_dimension_numbers<[1], [0], [0], [1], [0, 0, 1, 1], [], []>} : vector<2x32xf32>, vector<32x128xf32>, vector<2x128xf32> -> vector<2x128xf32>
    %161 = vector.extract_strided_slice %160 {offsets = [0, 0], sizes = [1, 128], strides = [1, 1]} : vector<2x128xf32> to vector<1x128xf32>
    %162 = vector.broadcast %161 : vector<1x128xf32> to vector<8x128xf32>
    %163 = arith.mulf %93, %162 : vector<8x128xf32>
    %164 = vector.extract_strided_slice %160 {offsets = [1, 0], sizes = [1, 128], strides = [1, 1]} : vector<2x128xf32> to vector<1x128xf32>
    %165 = vector.broadcast %164 : vector<1x128xf32> to vector<8x128xf32>
    %166 = arith.addf %163, %165 : vector<8x128xf32>
    %cst_49 = arith.constant 0.000000e+00 : f32
    %167 = vector.broadcast %cst_49 : f32 to vector<8x128xf32>
    %168 = arith.maximumf %166, %167 : vector<8x128xf32>
    %169 = arith.truncf %168 : vector<8x128xf32> to vector<8x128xbf16>
    %c0_50 = arith.constant 0 : index
    %c0_51 = arith.constant 0 : index
    %170 = vector.load %arg4[%c0_50, %c0_51] : memref<128x128xbf16, #tpu.memory_space<vmem>>, vector<128x128xbf16>
    %cst_52 = arith.constant dense<0.000000e+00> : vector<8x128xf32>
    %171 = tpu.matmul %169, %170, %cst_52 {dimension_numbers = #tpu.dot_dimension_numbers<[1], [0], [0], [1], [0, 0, 1, 1], [], []>} : vector<8x128xbf16>, vector<128x128xbf16>, vector<8x128xf32> -> vector<8x128xf32>
    %c0_53 = arith.constant 0 : index
    %c0_54 = arith.constant 0 : index
    %172 = vector.load %arg7[%c0_53, %c0_54] : memref<8x128xf32, #tpu.memory_space<vmem>>, vector<8x128xf32>
    tpu.vector_store %arg7[%c0_53, %c0_54], %171 {strides = array<i32>} : memref<8x128xf32, #tpu.memory_space<vmem>>, vector<8x128xf32>,
    %c5 = arith.constant 5 : index
    %c0_55 = arith.constant 0 : index
    %173 = vector.load %arg5[%c5, %c0_55] : memref<10x512xf32, #tpu.memory_space<vmem>>, vector<1x128xf32>
    %c6 = arith.constant 6 : index
    %c0_56 = arith.constant 0 : index
    %174 = vector.load %arg5[%c6, %c0_56] : memref<10x512xf32, #tpu.memory_space<vmem>>, vector<1x128xf32>
    %175 = vector.broadcast %4 : vector<8x1xf32> to vector<8x128xf32>
    %176 = arith.mulf %171, %175 : vector<8x128xf32>
    %cst_57 = arith.constant dense<0.000000e+00> : vector<128xf32>
    %177 = vector.multi_reduction <add>, %176, %cst_57 [0] : vector<8x128xf32> to vector<128xf32>
    %178 = vector.shape_cast %177 : vector<128xf32> to vector<1x128xf32>
    %cst_58 = arith.constant 0.166666672 : f32
    %179 = vector.broadcast %cst_58 : f32 to vector<1x128xf32>
    %180 = arith.mulf %178, %179 : vector<1x128xf32>
    %181 = arith.mulf %176, %171 : vector<8x128xf32>
    %cst_59 = arith.constant dense<0.000000e+00> : vector<128xf32>
    %182 = vector.multi_reduction <add>, %181, %cst_59 [0] : vector<8x128xf32> to vector<128xf32>
    %183 = vector.shape_cast %182 : vector<128xf32> to vector<1x128xf32>
    %cst_60 = arith.constant 0.166666672 : f32
    %184 = vector.broadcast %cst_60 : f32 to vector<1x128xf32>
    %185 = arith.mulf %183, %184 : vector<1x128xf32>
    %186 = arith.mulf %180, %180 : vector<1x128xf32>
    %187 = arith.subf %185, %186 : vector<1x128xf32>
    %cst_61 = arith.constant 9.99999974E-6 : f32
    %188 = vector.broadcast %cst_61 : f32 to vector<1x128xf32>
    %189 = arith.addf %187, %188 : vector<1x128xf32>
    %190 = math.rsqrt %189 : vector<1x128xf32>
    %191 = arith.mulf %190, %173 : vector<1x128xf32>
    %192 = arith.mulf %180, %191 : vector<1x128xf32>
    %193 = arith.subf %174, %192 : vector<1x128xf32>
    %194 = vector.broadcast %191 : vector<1x128xf32> to vector<8x128xf32>
    %195 = arith.mulf %171, %194 : vector<8x128xf32>
    %196 = vector.broadcast %193 : vector<1x128xf32> to vector<8x128xf32>
    %197 = arith.addf %195, %196 : vector<8x128xf32>
    %cst_62 = arith.constant 0.000000e+00 : f32
    %198 = vector.broadcast %cst_62 : f32 to vector<8x128xf32>
    %199 = arith.maximumf %197, %198 : vector<8x128xf32>
    %c0_63 = arith.constant 0 : index
    %c0_64 = arith.constant 0 : index
    %200 = vector.load %arg6[%c0_63, %c0_64] : memref<160x32xf32, #tpu.memory_space<vmem>>, vector<128x32xf32>
    %cst_65 = arith.constant dense<0.000000e+00> : vector<8x32xf32>
    %201 = tpu.matmul %199, %200, %cst_65 {dimension_numbers = #tpu.dot_dimension_numbers<[1], [0], [0], [1], [0, 0, 1, 1], [], []>} : vector<8x128xf32>, vector<128x32xf32>, vector<8x32xf32> -> vector<8x32xf32>
    %c7 = arith.constant 7 : index
    %c0_66 = arith.constant 0 : index
    %202 = vector.load %arg5[%c7, %c0_66] : memref<10x512xf32, #tpu.memory_space<vmem>>, vector<1x32xf32>
    %c8 = arith.constant 8 : index
    %c0_67 = arith.constant 0 : index
    %203 = vector.load %arg5[%c8, %c0_67] : memref<10x512xf32, #tpu.memory_space<vmem>>, vector<1x32xf32>
    %204 = vector.broadcast %4 : vector<8x1xf32> to vector<8x32xf32>
    %205 = arith.mulf %201, %204 : vector<8x32xf32>
    %cst_68 = arith.constant dense<0.000000e+00> : vector<32xf32>
    %206 = vector.multi_reduction <add>, %205, %cst_68 [0] : vector<8x32xf32> to vector<32xf32>
    %207 = vector.shape_cast %206 : vector<32xf32> to vector<1x32xf32>
    %cst_69 = arith.constant 0.166666672 : f32
    %208 = vector.broadcast %cst_69 : f32 to vector<1x32xf32>
    %209 = arith.mulf %207, %208 : vector<1x32xf32>
    %210 = arith.mulf %205, %201 : vector<8x32xf32>
    %cst_70 = arith.constant dense<0.000000e+00> : vector<32xf32>
    %211 = vector.multi_reduction <add>, %210, %cst_70 [0] : vector<8x32xf32> to vector<32xf32>
    %212 = vector.shape_cast %211 : vector<32xf32> to vector<1x32xf32>
    %cst_71 = arith.constant 0.166666672 : f32
    %213 = vector.broadcast %cst_71 : f32 to vector<1x32xf32>
    %214 = arith.mulf %212, %213 : vector<1x32xf32>
    %215 = arith.mulf %209, %209 : vector<1x32xf32>
    %216 = arith.subf %214, %215 : vector<1x32xf32>
    %cst_72 = arith.constant 9.99999974E-6 : f32
    %217 = vector.broadcast %cst_72 : f32 to vector<1x32xf32>
    %218 = arith.addf %216, %217 : vector<1x32xf32>
    %219 = math.rsqrt %218 : vector<1x32xf32>
    %220 = arith.mulf %219, %202 : vector<1x32xf32>
    %221 = arith.mulf %209, %220 : vector<1x32xf32>
    %222 = arith.subf %203, %221 : vector<1x32xf32>
    %223 = vector.broadcast %220 : vector<1x32xf32> to vector<8x32xf32>
    %224 = arith.mulf %201, %223 : vector<8x32xf32>
    %225 = vector.broadcast %222 : vector<1x32xf32> to vector<8x32xf32>
    %226 = arith.addf %224, %225 : vector<8x32xf32>
    %cst_73 = arith.constant 0.000000e+00 : f32
    %227 = vector.broadcast %cst_73 : f32 to vector<8x32xf32>
    %228 = arith.maximumf %226, %227 : vector<8x32xf32>
    %c128 = arith.constant 128 : index
    %c0_74 = arith.constant 0 : index
    %229 = vector.load %arg6[%c128, %c0_74] : memref<160x32xf32, #tpu.memory_space<vmem>>, vector<32x1xf32>
    %cst_75 = arith.constant dense<0.000000e+00> : vector<8x1xf32>
    %230 = tpu.matmul %228, %229, %cst_75 {dimension_numbers = #tpu.dot_dimension_numbers<[1], [0], [0], [1], [0, 0, 1, 1], [], []>} : vector<8x32xf32>, vector<32x1xf32>, vector<8x1xf32> -> vector<8x1xf32>
    %c9 = arith.constant 9 : index
    %c0_76 = arith.constant 0 : index
    %231 = vector.load %arg5[%c9, %c0_76] : memref<10x512xf32, #tpu.memory_space<vmem>>, vector<1x1xf32>
    %232 = vector.broadcast %231 : vector<1x1xf32> to vector<8x1xf32>
    %233 = arith.addf %230, %232 : vector<8x1xf32>
    %234 = arith.negf %233 : vector<8x1xf32>
    %235 = math.exp %234 : vector<8x1xf32>
    %cst_77 = arith.constant 1.000000e+00 : f32
    %236 = vector.broadcast %cst_77 : f32 to vector<8x1xf32>
    %237 = arith.addf %236, %235 : vector<8x1xf32>
    %238 = arith.divf %236, %237 : vector<8x1xf32>
    %239 = vector.shape_cast %238 : vector<8x1xf32> to vector<8x1xf32>
    %240 = vector.broadcast %239 : vector<8x1xf32> to vector<8x128xf32>
    %c0_78 = arith.constant 0 : index
    %c0_79 = arith.constant 0 : index
    %241 = vector.load %arg8[%c0_78, %c0_79] : memref<8x128xf32, #tpu.memory_space<vmem>>, vector<8x128xf32>
    tpu.vector_store %arg8[%c0_78, %c0_79], %240 {strides = array<i32>} : memref<8x128xf32, #tpu.memory_space<vmem>>, vector<8x128xf32>,
    return
  }
}

</mosaic_0001>

<llo_original>
// kernel: discriminator_forward.1
$region0: #{discriminator_forward.1}
  #allocation0 [shape = 'u32[]', space=smem, size = 0x4, offset = 0x4, fixed_abs, tag = 'smem constant byte address 0x4 - core index']
  #allocation1 [shape = 'u32[144,128]{1,0:T(1,128)}', space=vmem, size = 0x12000, scoped, tag = 'internal scratch']
  %s0 = inlined_call_operand.vmem [shape: bf16[8,768], index: 0, kind: input, shape index: {}]
  %s1 = inlined_call_operand.hbm [shape: bf16[768,512], index: 1, kind: input, shape index: {}]
  %s2 = inlined_call_operand.vmem [shape: bf16[512,256], index: 2, kind: input, shape index: {}]
  %s3 = inlined_call_operand.vmem [shape: bf16[256,128], index: 3, kind: input, shape index: {}]
  %s4 = inlined_call_operand.vmem [shape: bf16[128,128], index: 4, kind: input, shape index: {}]
  %s5 = inlined_call_operand.vmem [shape: f32[10,512], index: 5, kind: input, shape index: {}]
  %s6 = inlined_call_operand.vmem [shape: f32[160,32], index: 6, kind: input, shape index: {}]
  %s7 = inlined_call_operand.hbm [shape: f32[8,128], index: 7, kind: output, shape index: {0}]
  %s8 = inlined_call_operand.vmem [shape: f32[8,128], index: 8, kind: output, shape index: {1}]
  %9 = xla_tuple %s7, %s8
  %s10 = sld [smem:[#allocation0]]
  $region50: #{discriminator_forward.1} parent=0
    _
  %s12 = ssub.s32 1, %s10
  %s13 = scalar_select 0, %s12, %s10
  $region1: #{discriminator_forward.1} parent=0
    #allocation2 [shape = 'u8[786432]{0}', space=vmem, size = 0xc0000, scoped, tag = 'input window, operand 1, single buffered']
    #allocation3 [shape = 's32[1]{0}', space=sflag, size = 0x4, scoped, tag = 'scoped memory for discriminator_forward.1']
    #allocation4 [shape = 's32[1]{0}', space=sflag, size = 0x4, scoped, tag = 'scoped memory for discriminator_forward.1']
    #allocation5 [shape = 'u8[4096]{0}', space=vmem, size = 0x1000, scoped, tag = 'output window, operand 0, single buffered']
    %14 = vsyncpa [#allocation3], 0
    %15 = vsyncpa [#allocation4], 0
    // Predicated region
    $region2: #{discriminator_forward.1} parent=1 // pred_check
      _
    $region3: #{discriminator_forward.1} parent=1 // pred_check_branch
      %17 = sbr.rel (0) target = $region5
    $region4: #{discriminator_forward.1} parent=1 // pred_region
      _
    $region5: #{discriminator_forward.1} parent=1 // pred_fallthru
      _
    // Predicated region
    $region6: #{discriminator_forward.1} parent=1 // pred_check
      _
    $region7: #{discriminator_forward.1} parent=1 // pred_check_branch
      %19 = sbr.rel (0) target = $region9
    $region8: #{discriminator_forward.1} parent=1 // pred_region
      %s21 = ssub.s32 24576, 24576
      %22 = vsyncadd [#allocation3], %s21
      %s23 = sshll.u32 [#allocation2], 4
      %s24 = int_to_ptr.vmem [resolvable:$true] %s23
      %29 = dma.hbm_to_vmem [thread:$0]  %s1, 24576, %s24, [#allocation3], 256, 256, 16
    $region9: #{discriminator_forward.1} parent=1 // pred_fallthru
      _
    // Predicated region
    $region10: #{discriminator_forward.1} parent=1 // pred_check
      _
    $region11: #{discriminator_forward.1} parent=1 // pred_check_branch
      %31 = sbr.rel (0) target = $region13
    $region12: #{discriminator_forward.1} parent=1 // pred_region
      _
    $region13: #{discriminator_forward.1} parent=1 // pred_fallthru
      _
    // Predicated region
    $region14: #{discriminator_forward.1} parent=1 // pred_check
      _
    $region15: #{discriminator_forward.1} parent=1 // pred_check_branch
      %33 = sbr.rel (0) target = $region17
    $region16: #{discriminator_forward.1} parent=1 // pred_region
      _
    $region17: #{discriminator_forward.1} parent=1 // pred_fallthru
      _
    // Predicated region
    $region18: #{discriminator_forward.1} parent=1 // pred_check
      _
    $region19: #{discriminator_forward.1} parent=1 // pred_check_branch
      %35 = sbr.rel (0) target = $region21
    $region20: #{discriminator_forward.1} parent=1 // pred_region
      _
    $region21: #{discriminator_forward.1} parent=1 // pred_fallthru
      _
    // Predicated region
    $region22: #{discriminator_forward.1} parent=1 // pred_check
      _
    $region23: #{discriminator_forward.1} parent=1 // pred_check_branch
      %37 = sbr.rel (0) target = $region25
    $region24: #{discriminator_forward.1} parent=1 // pred_region
      _
    $region25: #{discriminator_forward.1} parent=1 // pred_fallthru
      _
    // Predicated region
    $region26: #{discriminator_forward.1} parent=1 // pred_check
      _
    $region27: #{discriminator_forward.1} parent=1 // pred_check_branch
      %39 = sbr.rel (0) target = $region29
    $region28: #{discriminator_forward.1} parent=1 // pred_region
      _
    $region29: #{discriminator_forward.1} parent=1 // pred_fallthru
      _
    // Predicated region
    $region30: #{discriminator_forward.1} parent=1 // pred_check
      _
    $region31: #{discriminator_forward.1} parent=1 // pred_check_branch
      %41 = sbr.rel (0) target = $region33
    $region32: #{discriminator_forward.1} parent=1 // pred_region
      %42 = dma.done [#allocation3], 24576
    $region33: #{discriminator_forward.1} parent=1 // pred_fallthru
      _
    %v44 = vlaneseq
    %v45 = vshrl.u32 %v44, 7
    %vm46 = vcmp.lt.s32.totalorder %v45, 6
    %v47 = vsel %vm46, 1, 0
    %v48 = vcvt.s32.f32 %v47
    %v49 = vld [vmem:[%s0] sm:$0xff]
    %v50 = vld [vmem:[%s0 + $0x8] sm:$0xff]
    %v51 = vld [vmem:[%s0 + $0x10] sm:$0xff]
    %v52 = vld [vmem:[#allocation2] sm:$0xff]
    %v53 = vld [vmem:[#allocation2 + $0x8] sm:$0xff]
    %v54 = vld [vmem:[#allocation2 + $0x10] sm:$0xff]
    %v55 = vld [vmem:[#allocation2 + $0x18] sm:$0xff]
    %v56 = vld [vmem:[#allocation2 + $0x20] sm:$0xff]
    %v57 = vld [vmem:[#allocation2 + $0x28] sm:$0xff]
    %v58 = vld [vmem:[#allocation2 + $0x30] sm:$0xff]
    %v59 = vld [vmem:[#allocation2 + $0x38] sm:$0xff]
    %v60 = vld [vmem:[#allocation2 + $0x40] sm:$0xff]
    %v61 = vld [vmem:[#allocation2 + $0x48] sm:$0xff]
    %v62 = vld [vmem:[#allocation2 + $0x50] sm:$0xff]
    %v63 = vld [vmem:[#allocation2 + $0x58] sm:$0xff]
    %v64 = vld [vmem:[#allocation2 + $0x60] sm:$0xff]
    %v65 = vld [vmem:[#allocation2 + $0x68] sm:$0xff]
    %v66 = vld [vmem:[#allocation2 + $0x70] sm:$0xff]
    %v67 = vld [vmem:[#allocation2 + $0x78] sm:$0xff]
    %v68 = vld [vmem:[#allocation2 + $0x80] sm:$0xff]
    %v69 = vld [vmem:[#allocation2 + $0x88] sm:$0xff]
    %v70 = vld [vmem:[#allocation2 + $0x90] sm:$0xff]
    %v71 = vld [vmem:[#allocation2 + $0x98] sm:$0xff]
    %v72 = vld [vmem:[#allocation2 + $0xa0] sm:$0xff]
    %v73 = vld [vmem:[#allocation2 + $0xa8] sm:$0xff]
    %v74 = vld [vmem:[#allocation2 + $0xb0] sm:$0xff]
    %v75 = vld [vmem:[#allocation2 + $0xb8] sm:$0xff]
    %v76 = vld [vmem:[#allocation2 + $0xc0] sm:$0xff]
    %v77 = vld [vmem:[#allocation2 + $0xc8] sm:$0xff]
    %v78 = vld [vmem:[#allocation2 + $0xd0] sm:$0xff]
    %v79 = vld [vmem:[#allocation2 + $0xd8] sm:$0xff]
    %v80 = vld [vmem:[#allocation2 + $0xe0] sm:$0xff]
    %v81 = vld [vmem:[#allocation2 + $0xe8] sm:$0xff]
    %v82 = vld [vmem:[#allocation2 + $0xf0] sm:$0xff]
    %v83 = vld [vmem:[#allocation2 + $0xf8] sm:$0xff]
    %v84 = vld [vmem:[#allocation2 + $0x100] sm:$0xff]
    %v85 = vld [vmem:[#allocation2 + $0x108] sm:$0xff]
    %v86 = vld [vmem:[#allocation2 + $0x110] sm:$0xff]
    %v87 = vld [vmem:[#allocation2 + $0x118] sm:$0xff]
    %v88 = vld [vmem:[#allocation2 + $0x120] sm:$0xff]
    %v89 = vld [vmem:[#allocation2 + $0x128] sm:$0xff]
    %v90 = vld [vmem:[#allocation2 + $0x130] sm:$0xff]
    %v91 = vld [vmem:[#allocation2 + $0x138] sm:$0xff]
    %v92 = vld [vmem:[#allocation2 + $0x140] sm:$0xff]
    %v93 = vld [vmem:[#allocation2 + $0x148] sm:$0xff]
    %v94 = vld [vmem:[#allocation2 + $0x150] sm:$0xff]
    %v95 = vld [vmem:[#allocation2 + $0x158] sm:$0xff]
    %v96 = vld [vmem:[#allocation2 + $0x160] sm:$0xff]
    %v97 = vld [vmem:[#allocation2 + $0x168] sm:$0xff]
    %v98 = vld [vmem:[#allocation2 + $0x170] sm:$0xff]
    %v99 = vld [vmem:[#allocation2 + $0x178] sm:$0xff]
    %v100 = vld [vmem:[#allocation2 + $0x180] sm:$0xff]
    %v101 = vld [vmem:[#allocation2 + $0x188] sm:$0xff]
    %v102 = vld [vmem:[#allocation2 + $0x190] sm:$0xff]
    %v103 = vld [vmem:[#allocation2 + $0x198] sm:$0xff]
    %v104 = vld [vmem:[#allocation2 + $0x1a0] sm:$0xff]
    %v105 = vld [vmem:[#allocation2 + $0x1a8] sm:$0xff]
    %v106 = vld [vmem:[#allocation2 + $0x1b0] sm:$0xff]
    %v107 = vld [vmem:[#allocation2 + $0x1b8] sm:$0xff]
    %v108 = vld [vmem:[#allocation2 + $0x1c0] sm:$0xff]
    %v109 = vld [vmem:[#allocation2 + $0x1c8] sm:$0xff]
    %v110 = vld [vmem:[#allocation2 + $0x1d0] sm:$0xff]
    %v111 = vld [vmem:[#allocation2 + $0x1d8] sm:$0xff]
    %v112 = vld [vmem:[#allocation2 + $0x1e0] sm:$0xff]
    %v113 = vld [vmem:[#allocation2 + $0x1e8] sm:$0xff]
    %v114 = vld [vmem:[#allocation2 + $0x1f0] sm:$0xff]
    %v115 = vld [vmem:[#allocation2 + $0x1f8] sm:$0xff]
    %v116 = vld [vmem:[#allocation2 + $0x200] sm:$0xff]
    %v117 = vld [vmem:[#allocation2 + $0x208] sm:$0xff]
    %v118 = vld [vmem:[#allocation2 + $0x210] sm:$0xff]
    %v119 = vld [vmem:[#allocation2 + $0x218] sm:$0xff]
    %v120 = vld [vmem:[#allocation2 + $0x220] sm:$0xff]
    %v121 = vld [vmem:[#allocation2 + $0x228] sm:$0xff]
    %v122 = vld [vmem:[#allocation2 + $0x230] sm:$0xff]
    %v123 = vld [vmem:[#allocation2 + $0x238] sm:$0xff]
    %v124 = vld [vmem:[#allocation2 + $0x240] sm:$0xff]
    %v125 = vld [vmem:[#allocation2 + $0x248] sm:$0xff]
    %v126 = vld [vmem:[#allocation2 + $0x250] sm:$0xff]
    %v127 = vld [vmem:[#allocation2 + $0x258] sm:$0xff]
    %v128 = vld [vmem:[#allocation2 + $0x260] sm:$0xff]
    %v129 = vld [vmem:[#allocation2 + $0x268] sm:$0xff]
    %v130 = vld [vmem:[#allocation2 + $0x270] sm:$0xff]
    %v131 = vld [vmem:[#allocation2 + $0x278] sm:$0xff]
    %v132 = vld [vmem:[#allocation2 + $0x280] sm:$0xff]
    %v133 = vld [vmem:[#allocation2 + $0x288] sm:$0xff]
    %v134 = vld [vmem:[#allocation2 + $0x290] sm:$0xff]
    %v135 = vld [vmem:[#allocation2 + $0x298] sm:$0xff]
    %v136 = vld [vmem:[#allocation2 + $0x2a0] sm:$0xff]
    %v137 = vld [vmem:[#allocation2 + $0x2a8] sm:$0xff]
    %v138 = vld [vmem:[#allocation2 + $0x2b0] sm:$0xff]
    %v139 = vld [vmem:[#allocation2 + $0x2b8] sm:$0xff]
    %v140 = vld [vmem:[#allocation2 + $0x2c0] sm:$0xff]
    %v141 = vld [vmem:[#allocation2 + $0x2c8] sm:$0xff]
    %v142 = vld [vmem:[#allocation2 + $0x2d0] sm:$0xff]
    %v143 = vld [vmem:[#allocation2 + $0x2d8] sm:$0xff]
    %v144 = vld [vmem:[#allocation2 + $0x2e0] sm:$0xff]
    %v145 = vld [vmem:[#allocation2 + $0x2e8] sm:$0xff]
    %v146 = vld [vmem:[#allocation2 + $0x2f0] sm:$0xff]
    %v147 = vld [vmem:[#allocation2 + $0x2f8] sm:$0xff]
    %v148 = vld [vmem:[#allocation2 + $0x300] sm:$0xff]
    %v149 = vld [vmem:[#allocation2 + $0x308] sm:$0xff]
    %v150 = vld [vmem:[#allocation2 + $0x310] sm:$0xff]
    %v151 = vld [vmem:[#allocation2 + $0x318] sm:$0xff]
    %v152 = vld [vmem:[#allocation2 + $0x320] sm:$0xff]
    %v153 = vld [vmem:[#allocation2 + $0x328] sm:$0xff]
    %v154 = vld [vmem:[#allocation2 + $0x330] sm:$0xff]
    %v155 = vld [vmem:[#allocation2 + $0x338] sm:$0xff]
    %v156 = vld [vmem:[#allocation2 + $0x340] sm:$0xff]
    %v157 = vld [vmem:[#allocation2 + $0x348] sm:$0xff]
    %v158 = vld [vmem:[#allocation2 + $0x350] sm:$0xff]
    %v159 = vld [vmem:[#allocation2 + $0x358] sm:$0xff]
    %v160 = vld [vmem:[#allocation2 + $0x360] sm:$0xff]
    %v161 = vld [vmem:[#allocation2 + $0x368] sm:$0xff]
    %v162 = vld [vmem:[#allocation2 + $0x370] sm:$0xff]
    %v163 = vld [vmem:[#allocation2 + $0x378] sm:$0xff]
    %v164 = vld [vmem:[#allocation2 + $0x380] sm:$0xff]
    %v165 = vld [vmem:[#allocation2 + $0x388] sm:$0xff]
    %v166 = vld [vmem:[#allocation2 + $0x390] sm:$0xff]
    %v167 = vld [vmem:[#allocation2 + $0x398] sm:$0xff]
    %v168 = vld [vmem:[#allocation2 + $0x3a0] sm:$0xff]
    %v169 = vld [vmem:[#allocation2 + $0x3a8] sm:$0xff]
    %v170 = vld [vmem:[#allocation2 + $0x3b0] sm:$0xff]
    %v171 = vld [vmem:[#allocation2 + $0x3b8] sm:$0xff]
    %v172 = vld [vmem:[#allocation2 + $0x3c0] sm:$0xff]
    %v173 = vld [vmem:[#allocation2 + $0x3c8] sm:$0xff]
    %v174 = vld [vmem:[#allocation2 + $0x3d0] sm:$0xff]
    %v175 = vld [vmem:[#allocation2 + $0x3d8] sm:$0xff]
    %v176 = vld [vmem:[#allocation2 + $0x3e0] sm:$0xff]
    %v177 = vld [vmem:[#allocation2 + $0x3e8] sm:$0xff]
    %v178 = vld [vmem:[#allocation2 + $0x3f0] sm:$0xff]
    %v179 = vld [vmem:[#allocation2 + $0x3f8] sm:$0xff]
    %v180 = vld [vmem:[#allocation2 + $0x400] sm:$0xff]
    %v181 = vld [vmem:[#allocation2 + $0x408] sm:$0xff]
    %v182 = vld [vmem:[#allocation2 + $0x410] sm:$0xff]
    %v183 = vld [vmem:[#allocation2 + $0x418] sm:$0xff]
    %v184 = vld [vmem:[#allocation2 + $0x420] sm:$0xff]
    %v185 = vld [vmem:[#allocation2 + $0x428] sm:$0xff]
    %v186 = vld [vmem:[#allocation2 + $0x430] sm:$0xff]
    %v187 = vld [vmem:[#allocation2 + $0x438] sm:$0xff]
    %v188 = vld [vmem:[#allocation2 + $0x440] sm:$0xff]
    %v189 = vld [vmem:[#allocation2 + $0x448] sm:$0xff]
    %v190 = vld [vmem:[#allocation2 + $0x450] sm:$0xff]
    %v191 = vld [vmem:[#allocation2 + $0x458] sm:$0xff]
    %v192 = vld [vmem:[#allocation2 + $0x460] sm:$0xff]
    %v193 = vld [vmem:[#allocation2 + $0x468] sm:$0xff]
    %v194 = vld [vmem:[#allocation2 + $0x470] sm:$0xff]
    %v195 = vld [vmem:[#allocation2 + $0x478] sm:$0xff]
    %v196 = vld [vmem:[#allocation2 + $0x480] sm:$0xff]
    %v197 = vld [vmem:[#allocation2 + $0x488] sm:$0xff]
    %v198 = vld [vmem:[#allocation2 + $0x490] sm:$0xff]
    %v199 = vld [vmem:[#allocation2 + $0x498] sm:$0xff]
    %v200 = vld [vmem:[#allocation2 + $0x4a0] sm:$0xff]
    %v201 = vld [vmem:[#allocation2 + $0x4a8] sm:$0xff]
    %v202 = vld [vmem:[#allocation2 + $0x4b0] sm:$0xff]
    %v203 = vld [vmem:[#allocation2 + $0x4b8] sm:$0xff]
    %v204 = vld [vmem:[#allocation2 + $0x4c0] sm:$0xff]
    %v205 = vld [vmem:[#allocation2 + $0x4c8] sm:$0xff]
    %v206 = vld [vmem:[#allocation2 + $0x4d0] sm:$0xff]
    %v207 = vld [vmem:[#allocation2 + $0x4d8] sm:$0xff]
    %v208 = vld [vmem:[#allocation2 + $0x4e0] sm:$0xff]
    %v209 = vld [vmem:[#allocation2 + $0x4e8] sm:$0xff]
    %v210 = vld [vmem:[#allocation2 + $0x4f0] sm:$0xff]
    %v211 = vld [vmem:[#allocation2 + $0x4f8] sm:$0xff]
    %v212 = vld [vmem:[#allocation2 + $0x500] sm:$0xff]
    %v213 = vld [vmem:[#allocation2 + $0x508] sm:$0xff]
    %v214 = vld [vmem:[#allocation2 + $0x510] sm:$0xff]
    %v215 = vld [vmem:[#allocation2 + $0x518] sm:$0xff]
    %v216 = vld [vmem:[#allocation2 + $0x520] sm:$0xff]
    %v217 = vld [vmem:[#allocation2 + $0x528] sm:$0xff]
    %v218 = vld [vmem:[#allocation2 + $0x530] sm:$0xff]
    %v219 = vld [vmem:[#allocation2 + $0x538] sm:$0xff]
    %v220 = vld [vmem:[#allocation2 + $0x540] sm:$0xff]
    %v221 = vld [vmem:[#allocation2 + $0x548] sm:$0xff]
    %v222 = vld [vmem:[#allocation2 + $0x550] sm:$0xff]
    %v223 = vld [vmem:[#allocation2 + $0x558] sm:$0xff]
    %v224 = vld [vmem:[#allocation2 + $0x560] sm:$0xff]
    %v225 = vld [vmem:[#allocation2 + $0x568] sm:$0xff]
    %v226 = vld [vmem:[#allocation2 + $0x570] sm:$0xff]
    %v227 = vld [vmem:[#allocation2 + $0x578] sm:$0xff]
    %v228 = vld [vmem:[#allocation2 + $0x580] sm:$0xff]
    %v229 = vld [vmem:[#allocation2 + $0x588] sm:$0xff]
    %v230 = vld [vmem:[#allocation2 + $0x590] sm:$0xff]
    %v231 = vld [vmem:[#allocation2 + $0x598] sm:$0xff]
    %v232 = vld [vmem:[#allocation2 + $0x5a0] sm:$0xff]
    %v233 = vld [vmem:[#allocation2 + $0x5a8] sm:$0xff]
    %v234 = vld [vmem:[#allocation2 + $0x5b0] sm:$0xff]
    %v235 = vld [vmem:[#allocation2 + $0x5b8] sm:$0xff]
    %v236 = vld [vmem:[#allocation2 + $0x5c0] sm:$0xff]
    %v237 = vld [vmem:[#allocation2 + $0x5c8] sm:$0xff]
    %v238 = vld [vmem:[#allocation2 + $0x5d0] sm:$0xff]
    %v239 = vld [vmem:[#allocation2 + $0x5d8] sm:$0xff]
    %v240 = vld [vmem:[#allocation2 + $0x5e0] sm:$0xff]
    %v241 = vld [vmem:[#allocation2 + $0x5e8] sm:$0xff]
    %v242 = vld [vmem:[#allocation2 + $0x5f0] sm:$0xff]
    %v243 = vld [vmem:[#allocation2 + $0x5f8] sm:$0xff]
    %v244 = vld [vmem:[%s5] ss:$8 sm:$0xf]
    %v246 = vlaneseq
    %v247 = vshrl.u32 %v246, 7
    %v248 = vsub.s32 0, %v247
    %v249 = vrot.slane %v244, %v248
    %v250 = vlaneseq
    %v251 = vshrl.u32 %v250, 7
    %v252 = vsub.s32 1, %v251
    %v253 = vrot.slane %v244, %v252
    %v254 = vlaneseq
    %v255 = vshrl.u32 %v254, 7
    %v256 = vsub.s32 2, %v255
    %v257 = vrot.slane %v244, %v256
    %v258 = vlaneseq
    %v259 = vshrl.u32 %v258, 7
    %v260 = vsub.s32 3, %v259
    %v261 = vrot.slane %v244, %v260
    %v269 = vunpack.c.l.b16 %v49
    %v270 = vunpack.c.h.b16 %v49
    %v271 = vunpack.c.l.b16 %v50
    %v272 = vunpack.c.h.b16 %v50
    %v273 = vunpack.c.l.b16 %v51
    %v274 = vunpack.c.h.b16 %v51
    %v275 = vpack.c.b16 %v269, %v269
    %v276 = vpack.c.b16 %v270, %v270
    %v277 = vpack.c.b16 %v271, %v271
    %v278 = vpack.c.b16 %v272, %v272
    %v279 = vpack.c.b16 %v273, %v273
    %v280 = vpack.c.b16 %v274, %v274
    %v479 = vunpack.c.l.b16 %v52
    %v480 = vunpack.c.h.b16 %v52
    %v481 = vunpack.c.l.b16 %v53
    %v482 = vunpack.c.h.b16 %v53
    %v483 = vunpack.c.l.b16 %v54
    %v484 = vunpack.c.h.b16 %v54
    %v485 = vunpack.c.l.b16 %v55
    %v486 = vunpack.c.h.b16 %v55
    %v487 = vunpack.c.l.b16 %v56
    %v488 = vunpack.c.h.b16 %v56
    %v489 = vunpack.c.l.b16 %v57
    %v490 = vunpack.c.h.b16 %v57
    %v491 = vunpack.c.l.b16 %v58
    %v492 = vunpack.c.h.b16 %v58
    %v493 = vunpack.c.l.b16 %v59
    %v494 = vunpack.c.h.b16 %v59
    %v495 = vunpack.c.l.b16 %v60
    %v496 = vunpack.c.h.b16 %v60
    %v497 = vunpack.c.l.b16 %v61
    %v498 = vunpack.c.h.b16 %v61
    %v499 = vunpack.c.l.b16 %v62
    %v500 = vunpack.c.h.b16 %v62
    %v501 = vunpack.c.l.b16 %v63
    %v502 = vunpack.c.h.b16 %v63
    %v503 = vunpack.c.l.b16 %v64
    %v504 = vunpack.c.h.b16 %v64
    %v505 = vunpack.c.l.b16 %v65
    %v506 = vunpack.c.h.b16 %v65
    %v507 = vunpack.c.l.b16 %v66
    %v508 = vunpack.c.h.b16 %v66
    %v509 = vunpack.c.l.b16 %v67
    %v510 = vunpack.c.h.b16 %v67
    %v511 = vunpack.c.l.b16 %v68
    %v512 = vunpack.c.h.b16 %v68
    %v513 = vunpack.c.l.b16 %v69
    %v514 = vunpack.c.h.b16 %v69
    %v515 = vunpack.c.l.b16 %v70
    %v516 = vunpack.c.h.b16 %v70
    %v517 = vunpack.c.l.b16 %v71
    %v518 = vunpack.c.h.b16 %v71
    %v519 = vunpack.c.l.b16 %v72
    %v520 = vunpack.c.h.b16 %v72
    %v521 = vunpack.c.l.b16 %v73
    %v522 = vunpack.c.h.b16 %v73
    %v523 = vunpack.c.l.b16 %v74
    %v524 = vunpack.c.h.b16 %v74
    %v525 = vunpack.c.l.b16 %v75
    %v526 = vunpack.c.h.b16 %v75
    %v527 = vunpack.c.l.b16 %v76
    %v528 = vunpack.c.h.b16 %v76
    %v529 = vunpack.c.l.b16 %v77
    %v530 = vunpack.c.h.b16 %v77
    %v531 = vunpack.c.l.b16 %v78
    %v532 = vunpack.c.h.b16 %v78
    %v533 = vunpack.c.l.b16 %v79
    %v534 = vunpack.c.h.b16 %v79
    %v535 = vunpack.c.l.b16 %v80
    %v536 = vunpack.c.h.b16 %v80
    %v537 = vunpack.c.l.b16 %v81
    %v538 = vunpack.c.h.b16 %v81
    %v539 = vunpack.c.l.b16 %v82
    %v540 = vunpack.c.h.b16 %v82
    %v541 = vunpack.c.l.b16 %v83
    %v542 = vunpack.c.h.b16 %v83
    %v543 = vunpack.c.l.b16 %v84
    %v544 = vunpack.c.h.b16 %v84
    %v545 = vunpack.c.l.b16 %v85
    %v546 = vunpack.c.h.b16 %v85
    %v547 = vunpack.c.l.b16 %v86
    %v548 = vunpack.c.h.b16 %v86
    %v549 = vunpack.c.l.b16 %v87
    %v550 = vunpack.c.h.b16 %v87
    %v551 = vunpack.c.l.b16 %v88
    %v552 = vunpack.c.h.b16 %v88
    %v553 = vunpack.c.l.b16 %v89
    %v554 = vunpack.c.h.b16 %v89
    %v555 = vunpack.c.l.b16 %v90
    %v556 = vunpack.c.h.b16 %v90
    %v557 = vunpack.c.l.b16 %v91
    %v558 = vunpack.c.h.b16 %v91
    %v559 = vunpack.c.l.b16 %v92
    %v560 = vunpack.c.h.b16 %v92
    %v561 = vunpack.c.l.b16 %v93
    %v562 = vunpack.c.h.b16 %v93
    %v563 = vunpack.c.l.b16 %v94
    %v564 = vunpack.c.h.b16 %v94
    %v565 = vunpack.c.l.b16 %v95
    %v566 = vunpack.c.h.b16 %v95
    %v567 = vunpack.c.l.b16 %v96
    %v568 = vunpack.c.h.b16 %v96
    %v569 = vunpack.c.l.b16 %v97
    %v570 = vunpack.c.h.b16 %v97
    %v571 = vunpack.c.l.b16 %v98
    %v572 = vunpack.c.h.b16 %v98
    %v573 = vunpack.c.l.b16 %v99
    %v574 = vunpack.c.h.b16 %v99
    %v575 = vunpack.c.l.b16 %v100
    %v576 = vunpack.c.h.b16 %v100
    %v577 = vunpack.c.l.b16 %v101
    %v578 = vunpack.c.h.b16 %v101
    %v579 = vunpack.c.l.b16 %v102
    %v580 = vunpack.c.h.b16 %v102
    %v581 = vunpack.c.l.b16 %v103
    %v582 = vunpack.c.h.b16 %v103
    %v583 = vunpack.c.l.b16 %v104
    %v584 = vunpack.c.h.b16 %v104
    %v585 = vunpack.c.l.b16 %v105
    %v586 = vunpack.c.h.b16 %v105
    %v587 = vunpack.c.l.b16 %v106
    %v588 = vunpack.c.h.b16 %v106
    %v589 = vunpack.c.l.b16 %v107
    %v590 = vunpack.c.h.b16 %v107
    %v591 = vunpack.c.l.b16 %v108
    %v592 = vunpack.c.h.b16 %v108
    %v593 = vunpack.c.l.b16 %v109
    %v594 = vunpack.c.h.b16 %v109
    %v595 = vunpack.c.l.b16 %v110
    %v596 = vunpack.c.h.b16 %v110
    %v597 = vunpack.c.l.b16 %v111
    %v598 = vunpack.c.h.b16 %v111
    %v599 = vunpack.c.l.b16 %v112
    %v600 = vunpack.c.h.b16 %v112
    %v601 = vunpack.c.l.b16 %v113
    %v602 = vunpack.c.h.b16 %v113
    %v603 = vunpack.c.l.b16 %v114
    %v604 = vunpack.c.h.b16 %v114
    %v605 = vunpack.c.l.b16 %v115
    %v606 = vunpack.c.h.b16 %v115
    %v607 = vunpack.c.l.b16 %v116
    %v608 = vunpack.c.h.b16 %v116
    %v609 = vunpack.c.l.b16 %v117
    %v610 = vunpack.c.h.b16 %v117
    %v611 = vunpack.c.l.b16 %v118
    %v612 = vunpack.c.h.b16 %v118
    %v613 = vunpack.c.l.b16 %v119
    %v614 = vunpack.c.h.b16 %v119
    %v615 = vunpack.c.l.b16 %v120
    %v616 = vunpack.c.h.b16 %v120
    %v617 = vunpack.c.l.b16 %v121
    %v618 = vunpack.c.h.b16 %v121
    %v619 = vunpack.c.l.b16 %v122
    %v620 = vunpack.c.h.b16 %v122
    %v621 = vunpack.c.l.b16 %v123
    %v622 = vunpack.c.h.b16 %v123
    %v623 = vunpack.c.l.b16 %v124
    %v624 = vunpack.c.h.b16 %v124
    %v625 = vunpack.c.l.b16 %v125
    %v626 = vunpack.c.h.b16 %v125
    %v627 = vunpack.c.l.b16 %v126
    %v628 = vunpack.c.h.b16 %v126
    %v629 = vunpack.c.l.b16 %v127
    %v630 = vunpack.c.h.b16 %v127
    %v631 = vunpack.c.l.b16 %v128
    %v632 = vunpack.c.h.b16 %v128
    %v633 = vunpack.c.l.b16 %v129
    %v634 = vunpack.c.h.b16 %v129
    %v635 = vunpack.c.l.b16 %v130
    %v636 = vunpack.c.h.b16 %v130
    %v637 = vunpack.c.l.b16 %v131
    %v638 = vunpack.c.h.b16 %v131
    %v639 = vunpack.c.l.b16 %v132
    %v640 = vunpack.c.h.b16 %v132
    %v641 = vunpack.c.l.b16 %v133
    %v642 = vunpack.c.h.b16 %v133
    %v643 = vunpack.c.l.b16 %v134
    %v644 = vunpack.c.h.b16 %v134
    %v645 = vunpack.c.l.b16 %v135
    %v646 = vunpack.c.h.b16 %v135
    %v647 = vunpack.c.l.b16 %v136
    %v648 = vunpack.c.h.b16 %v136
    %v649 = vunpack.c.l.b16 %v137
    %v650 = vunpack.c.h.b16 %v137
    %v651 = vunpack.c.l.b16 %v138
    %v652 = vunpack.c.h.b16 %v138
    %v653 = vunpack.c.l.b16 %v139
    %v654 = vunpack.c.h.b16 %v139
    %v655 = vunpack.c.l.b16 %v140
    %v656 = vunpack.c.h.b16 %v140
    %v657 = vunpack.c.l.b16 %v141
    %v658 = vunpack.c.h.b16 %v141
    %v659 = vunpack.c.l.b16 %v142
    %v660 = vunpack.c.h.b16 %v142
    %v661 = vunpack.c.l.b16 %v143
    %v662 = vunpack.c.h.b16 %v143
    %v663 = vunpack.c.l.b16 %v144
    %v664 = vunpack.c.h.b16 %v144
    %v665 = vunpack.c.l.b16 %v145
    %v666 = vunpack.c.h.b16 %v145
    %v667 = vunpack.c.l.b16 %v146
    %v668 = vunpack.c.h.b16 %v146
    %v669 = vunpack.c.l.b16 %v147
    %v670 = vunpack.c.h.b16 %v147
    %v671 = vunpack.c.l.b16 %v148
    %v672 = vunpack.c.h.b16 %v148
    %v673 = vunpack.c.l.b16 %v149
    %v674 = vunpack.c.h.b16 %v149
    %v675 = vunpack.c.l.b16 %v150
    %v676 = vunpack.c.h.b16 %v150
    %v677 = vunpack.c.l.b16 %v151
    %v678 = vunpack.c.h.b16 %v151
    %v679 = vunpack.c.l.b16 %v152
    %v680 = vunpack.c.h.b16 %v152
    %v681 = vunpack.c.l.b16 %v153
    %v682 = vunpack.c.h.b16 %v153
    %v683 = vunpack.c.l.b16 %v154
    %v684 = vunpack.c.h.b16 %v154
    %v685 = vunpack.c.l.b16 %v155
    %v686 = vunpack.c.h.b16 %v155
    %v687 = vunpack.c.l.b16 %v156
    %v688 = vunpack.c.h.b16 %v156
    %v689 = vunpack.c.l.b16 %v157
    %v690 = vunpack.c.h.b16 %v157
    %v691 = vunpack.c.l.b16 %v158
    %v692 = vunpack.c.h.b16 %v158
    %v693 = vunpack.c.l.b16 %v159
    %v694 = vunpack.c.h.b16 %v159
    %v695 = vunpack.c.l.b16 %v160
    %v696 = vunpack.c.h.b16 %v160
    %v697 = vunpack.c.l.b16 %v161
    %v698 = vunpack.c.h.b16 %v161
    %v699 = vunpack.c.l.b16 %v162
    %v700 = vunpack.c.h.b16 %v162
    %v701 = vunpack.c.l.b16 %v163
    %v702 = vunpack.c.h.b16 %v163
    %v703 = vunpack.c.l.b16 %v164
    %v704 = vunpack.c.h.b16 %v164
    %v705 = vunpack.c.l.b16 %v165
    %v706 = vunpack.c.h.b16 %v165
    %v707 = vunpack.c.l.b16 %v166
    %v708 = vunpack.c.h.b16 %v166
    %v709 = vunpack.c.l.b16 %v167
    %v710 = vunpack.c.h.b16 %v167
    %v711 = vunpack.c.l.b16 %v168
    %v712 = vunpack.c.h.b16 %v168
    %v713 = vunpack.c.l.b16 %v169
    %v714 = vunpack.c.h.b16 %v169
    %v715 = vunpack.c.l.b16 %v170
    %v716 = vunpack.c.h.b16 %v170
    %v717 = vunpack.c.l.b16 %v171
    %v718 = vunpack.c.h.b16 %v171
    %v719 = vunpack.c.l.b16 %v172
    %v720 = vunpack.c.h.b16 %v172
    %v721 = vunpack.c.l.b16 %v173
    %v722 = vunpack.c.h.b16 %v173
    %v723 = vunpack.c.l.b16 %v174
    %v724 = vunpack.c.h.b16 %v174
    %v725 = vunpack.c.l.b16 %v175
    %v726 = vunpack.c.h.b16 %v175
    %v727 = vunpack.c.l.b16 %v176
    %v728 = vunpack.c.h.b16 %v176
    %v729 = vunpack.c.l.b16 %v177
    %v730 = vunpack.c.h.b16 %v177
    %v731 = vunpack.c.l.b16 %v178
    %v732 = vunpack.c.h.b16 %v178
    %v733 = vunpack.c.l.b16 %v179
    %v734 = vunpack.c.h.b16 %v179
    %v735 = vunpack.c.l.b16 %v180
    %v736 = vunpack.c.h.b16 %v180
    %v737 = vunpack.c.l.b16 %v181
    %v738 = vunpack.c.h.b16 %v181
    %v739 = vunpack.c.l.b16 %v182
    %v740 = vunpack.c.h.b16 %v182
    %v741 = vunpack.c.l.b16 %v183
    %v742 = vunpack.c.h.b16 %v183
    %v743 = vunpack.c.l.b16 %v184
    %v744 = vunpack.c.h.b16 %v184
    %v745 = vunpack.c.l.b16 %v185
    %v746 = vunpack.c.h.b16 %v185
    %v747 = vunpack.c.l.b16 %v186
    %v748 = vunpack.c.h.b16 %v186
    %v749 = vunpack.c.l.b16 %v187
    %v750 = vunpack.c.h.b16 %v187
    %v751 = vunpack.c.l.b16 %v188
    %v752 = vunpack.c.h.b16 %v188
    %v753 = vunpack.c.l.b16 %v189
    %v754 = vunpack.c.h.b16 %v189
    %v755 = vunpack.c.l.b16 %v190
    %v756 = vunpack.c.h.b16 %v190
    %v757 = vunpack.c.l.b16 %v191
    %v758 = vunpack.c.h.b16 %v191
    %v759 = vunpack.c.l.b16 %v192
    %v760 = vunpack.c.h.b16 %v192
    %v761 = vunpack.c.l.b16 %v193
    %v762 = vunpack.c.h.b16 %v193
    %v763 = vunpack.c.l.b16 %v194
    %v764 = vunpack.c.h.b16 %v194
    %v765 = vunpack.c.l.b16 %v195
    %v766 = vunpack.c.h.b16 %v195
    %v767 = vunpack.c.l.b16 %v196
    %v768 = vunpack.c.h.b16 %v196
    %v769 = vunpack.c.l.b16 %v197
    %v770 = vunpack.c.h.b16 %v197
    %v771 = vunpack.c.l.b16 %v198
    %v772 = vunpack.c.h.b16 %v198
    %v773 = vunpack.c.l.b16 %v199
    %v774 = vunpack.c.h.b16 %v199
    %v775 = vunpack.c.l.b16 %v200
    %v776 = vunpack.c.h.b16 %v200
    %v777 = vunpack.c.l.b16 %v201
    %v778 = vunpack.c.h.b16 %v201
    %v779 = vunpack.c.l.b16 %v202
    %v780 = vunpack.c.h.b16 %v202
    %v781 = vunpack.c.l.b16 %v203
    %v782 = vunpack.c.h.b16 %v203
    %v783 = vunpack.c.l.b16 %v204
    %v784 = vunpack.c.h.b16 %v204
    %v785 = vunpack.c.l.b16 %v205
    %v786 = vunpack.c.h.b16 %v205
    %v787 = vunpack.c.l.b16 %v206
    %v788 = vunpack.c.h.b16 %v206
    %v789 = vunpack.c.l.b16 %v207
    %v790 = vunpack.c.h.b16 %v207
    %v791 = vunpack.c.l.b16 %v208
    %v792 = vunpack.c.h.b16 %v208
    %v793 = vunpack.c.l.b16 %v209
    %v794 = vunpack.c.h.b16 %v209
    %v795 = vunpack.c.l.b16 %v210
    %v796 = vunpack.c.h.b16 %v210
    %v797 = vunpack.c.l.b16 %v211
    %v798 = vunpack.c.h.b16 %v211
    %v799 = vunpack.c.l.b16 %v212
    %v800 = vunpack.c.h.b16 %v212
    %v801 = vunpack.c.l.b16 %v213
    %v802 = vunpack.c.h.b16 %v213
    %v803 = vunpack.c.l.b16 %v214
    %v804 = vunpack.c.h.b16 %v214
    %v805 = vunpack.c.l.b16 %v215
    %v806 = vunpack.c.h.b16 %v215
    %v807 = vunpack.c.l.b16 %v216
    %v808 = vunpack.c.h.b16 %v216
    %v809 = vunpack.c.l.b16 %v217
    %v810 = vunpack.c.h.b16 %v217
    %v811 = vunpack.c.l.b16 %v218
    %v812 = vunpack.c.h.b16 %v218
    %v813 = vunpack.c.l.b16 %v219
    %v814 = vunpack.c.h.b16 %v219
    %v815 = vunpack.c.l.b16 %v220
    %v816 = vunpack.c.h.b16 %v220
    %v817 = vunpack.c.l.b16 %v221
    %v818 = vunpack.c.h.b16 %v221
    %v819 = vunpack.c.l.b16 %v222
    %v820 = vunpack.c.h.b16 %v222
    %v821 = vunpack.c.l.b16 %v223
    %v822 = vunpack.c.h.b16 %v223
    %v823 = vunpack.c.l.b16 %v224
    %v824 = vunpack.c.h.b16 %v224
    %v825 = vunpack.c.l.b16 %v225
    %v826 = vunpack.c.h.b16 %v225
    %v827 = vunpack.c.l.b16 %v226
    %v828 = vunpack.c.h.b16 %v226
    %v829 = vunpack.c.l.b16 %v227
    %v830 = vunpack.c.h.b16 %v227
    %v831 = vunpack.c.l.b16 %v228
    %v832 = vunpack.c.h.b16 %v228
    %v833 = vunpack.c.l.b16 %v229
    %v834 = vunpack.c.h.b16 %v229
    %v835 = vunpack.c.l.b16 %v230
    %v836 = vunpack.c.h.b16 %v230
    %v837 = vunpack.c.l.b16 %v231
    %v838 = vunpack.c.h.b16 %v231
    %v839 = vunpack.c.l.b16 %v232
    %v840 = vunpack.c.h.b16 %v232
    %v841 = vunpack.c.l.b16 %v233
    %v842 = vunpack.c.h.b16 %v233
    %v843 = vunpack.c.l.b16 %v234
    %v844 = vunpack.c.h.b16 %v234
    %v845 = vunpack.c.l.b16 %v235
    %v846 = vunpack.c.h.b16 %v235
    %v847 = vunpack.c.l.b16 %v236
    %v848 = vunpack.c.h.b16 %v236
    %v849 = vunpack.c.l.b16 %v237
    %v850 = vunpack.c.h.b16 %v237
    %v851 = vunpack.c.l.b16 %v238
    %v852 = vunpack.c.h.b16 %v238
    %v853 = vunpack.c.l.b16 %v239
    %v854 = vunpack.c.h.b16 %v239
    %v855 = vunpack.c.l.b16 %v240
    %v856 = vunpack.c.h.b16 %v240
    %v857 = vunpack.c.l.b16 %v241
    %v858 = vunpack.c.h.b16 %v241
    %v859 = vunpack.c.l.b16 %v242
    %v860 = vunpack.c.h.b16 %v242
    %v861 = vunpack.c.l.b16 %v243
    %v862 = vunpack.c.h.b16 %v243
    %v863 = vpack.c.b16 %v483, %v479
    %v864 = vpack.c.b16 %v484, %v480
    %v865 = vpack.c.b16 %v485, %v481
    %v866 = vpack.c.b16 %v486, %v482
    %v867 = vpack.c.b16 %v491, %v487
    %v868 = vpack.c.b16 %v492, %v488
    %v869 = vpack.c.b16 %v493, %v489
    %v870 = vpack.c.b16 %v494, %v490
    %v871 = vpack.c.b16 %v499, %v495
    %v872 = vpack.c.b16 %v500, %v496
    %v873 = vpack.c.b16 %v501, %v497
    %v874 = vpack.c.b16 %v502, %v498
    %v875 = vpack.c.b16 %v507, %v503
    %v876 = vpack.c.b16 %v508, %v504
    %v877 = vpack.c.b16 %v509, %v505
    %v878 = vpack.c.b16 %v510, %v506
    %v879 = vpack.c.b16 %v515, %v511
    %v880 = vpack.c.b16 %v516, %v512
    %v881 = vpack.c.b16 %v517, %v513
    %v882 = vpack.c.b16 %v518, %v514
    %v883 = vpack.c.b16 %v523, %v519
    %v884 = vpack.c.b16 %v524, %v520
    %v885 = vpack.c.b16 %v525, %v521
    %v886 = vpack.c.b16 %v526, %v522
    %v887 = vpack.c.b16 %v531, %v527
    %v888 = vpack.c.b16 %v532, %v528
    %v889 = vpack.c.b16 %v533, %v529
    %v890 = vpack.c.b16 %v534, %v530
    %v891 = vpack.c.b16 %v539, %v535
    %v892 = vpack.c.b16 %v540, %v536
    %v893 = vpack.c.b16 %v541, %v537
    %v894 = vpack.c.b16 %v542, %v538
    %v895 = vpack.c.b16 %v547, %v543
    %v896 = vpack.c.b16 %v548, %v544
    %v897 = vpack.c.b16 %v549, %v545
    %v898 = vpack.c.b16 %v550, %v546
    %v899 = vpack.c.b16 %v555, %v551
    %v900 = vpack.c.b16 %v556, %v552
    %v901 = vpack.c.b16 %v557, %v553
    %v902 = vpack.c.b16 %v558, %v554
    %v903 = vpack.c.b16 %v563, %v559
    %v904 = vpack.c.b16 %v564, %v560
    %v905 = vpack.c.b16 %v565, %v561
    %v906 = vpack.c.b16 %v566, %v562
    %v907 = vpack.c.b16 %v571, %v567
    %v908 = vpack.c.b16 %v572, %v568
    %v909 = vpack.c.b16 %v573, %v569
    %v910 = vpack.c.b16 %v574, %v570
    %v911 = vpack.c.b16 %v579, %v575
    %v912 = vpack.c.b16 %v580, %v576
    %v913 = vpack.c.b16 %v581, %v577
    %v914 = vpack.c.b16 %v582, %v578
    %v915 = vpack.c.b16 %v587, %v583
    %v916 = vpack.c.b16 %v588, %v584
    %v917 = vpack.c.b16 %v589, %v585
    %v918 = vpack.c.b16 %v590, %v586
    %v919 = vpack.c.b16 %v595, %v591
    %v920 = vpack.c.b16 %v596, %v592
    %v921 = vpack.c.b16 %v597, %v593
    %v922 = vpack.c.b16 %v598, %v594
    %v923 = vpack.c.b16 %v603, %v599
    %v924 = vpack.c.b16 %v604, %v600
    %v925 = vpack.c.b16 %v605, %v601
    %v926 = vpack.c.b16 %v606, %v602
    %v927 = vpack.c.b16 %v611, %v607
    %v928 = vpack.c.b16 %v612, %v608
    %v929 = vpack.c.b16 %v613, %v609
    %v930 = vpack.c.b16 %v614, %v610
    %v931 = vpack.c.b16 %v619, %v615
    %v932 = vpack.c.b16 %v620, %v616
    %v933 = vpack.c.b16 %v621, %v617
    %v934 = vpack.c.b16 %v622, %v618
    %v935 = vpack.c.b16 %v627, %v623
    %v936 = vpack.c.b16 %v628, %v624
    %v937 = vpack.c.b16 %v629, %v625
    %v938 = vpack.c.b16 %v630, %v626
    %v939 = vpack.c.b16 %v635, %v631
    %v940 = vpack.c.b16 %v636, %v632
    %v941 = vpack.c.b16 %v637, %v633
    %v942 = vpack.c.b16 %v638, %v634
    %v943 = vpack.c.b16 %v643, %v639
    %v944 = vpack.c.b16 %v644, %v640
    %v945 = vpack.c.b16 %v645, %v641
    %v946 = vpack.c.b16 %v646, %v642
    %v947 = vpack.c.b16 %v651, %v647
    %v948 = vpack.c.b16 %v652, %v648
    %v949 = vpack.c.b16 %v653, %v649
    %v950 = vpack.c.b16 %v654, %v650
    %v951 = vpack.c.b16 %v659, %v655
    %v952 = vpack.c.b16 %v660, %v656
    %v953 = vpack.c.b16 %v661, %v657
    %v954 = vpack.c.b16 %v662, %v658
    %v955 = vpack.c.b16 %v667, %v663
    %v956 = vpack.c.b16 %v668, %v664
    %v957 = vpack.c.b16 %v669, %v665
    %v958 = vpack.c.b16 %v670, %v666
    %v959 = vpack.c.b16 %v675, %v671
    %v960 = vpack.c.b16 %v676, %v672
    %v961 = vpack.c.b16 %v677, %v673
    %v962 = vpack.c.b16 %v678, %v674
    %v963 = vpack.c.b16 %v683, %v679
    %v964 = vpack.c.b16 %v684, %v680
    %v965 = vpack.c.b16 %v685, %v681
    %v966 = vpack.c.b16 %v686, %v682
    %v967 = vpack.c.b16 %v691, %v687
    %v968 = vpack.c.b16 %v692, %v688
    %v969 = vpack.c.b16 %v693, %v689
    %v970 = vpack.c.b16 %v694, %v690
    %v971 = vpack.c.b16 %v699, %v695
    %v972 = vpack.c.b16 %v700, %v696
    %v973 = vpack.c.b16 %v701, %v697
    %v974 = vpack.c.b16 %v702, %v698
    %v975 = vpack.c.b16 %v707, %v703
    %v976 = vpack.c.b16 %v708, %v704
    %v977 = vpack.c.b16 %v709, %v705
    %v978 = vpack.c.b16 %v710, %v706
    %v979 = vpack.c.b16 %v715, %v711
    %v980 = vpack.c.b16 %v716, %v712
    %v981 = vpack.c.b16 %v717, %v713
    %v982 = vpack.c.b16 %v718, %v714
    %v983 = vpack.c.b16 %v723, %v719
    %v984 = vpack.c.b16 %v724, %v720
    %v985 = vpack.c.b16 %v725, %v721
    %v986 = vpack.c.b16 %v726, %v722
    %v987 = vpack.c.b16 %v731, %v727
    %v988 = vpack.c.b16 %v732, %v728
    %v989 = vpack.c.b16 %v733, %v729
    %v990 = vpack.c.b16 %v734, %v730
    %v991 = vpack.c.b16 %v739, %v735
    %v992 = vpack.c.b16 %v740, %v736
    %v993 = vpack.c.b16 %v741, %v737
    %v994 = vpack.c.b16 %v742, %v738
    %v995 = vpack.c.b16 %v747, %v743
    %v996 = vpack.c.b16 %v748, %v744
    %v997 = vpack.c.b16 %v749, %v745
    %v998 = vpack.c.b16 %v750, %v746
    %v999 = vpack.c.b16 %v755, %v751
    %v1000 = vpack.c.b16 %v756, %v752
    %v1001 = vpack.c.b16 %v757, %v753
    %v1002 = vpack.c.b16 %v758, %v754
    %v1003 = vpack.c.b16 %v763, %v759
    %v1004 = vpack.c.b16 %v764, %v760
    %v1005 = vpack.c.b16 %v765, %v761
    %v1006 = vpack.c.b16 %v766, %v762
    %v1007 = vpack.c.b16 %v771, %v767
    %v1008 = vpack.c.b16 %v772, %v768
    %v1009 = vpack.c.b16 %v773, %v769
    %v1010 = vpack.c.b16 %v774, %v770
    %v1011 = vpack.c.b16 %v779, %v775
    %v1012 = vpack.c.b16 %v780, %v776
    %v1013 = vpack.c.b16 %v781, %v777
    %v1014 = vpack.c.b16 %v782, %v778
    %v1015 = vpack.c.b16 %v787, %v783
    %v1016 = vpack.c.b16 %v788, %v784
    %v1017 = vpack.c.b16 %v789, %v785
    %v1018 = vpack.c.b16 %v790, %v786
    %v1019 = vpack.c.b16 %v795, %v791
    %v1020 = vpack.c.b16 %v796, %v792
    %v1021 = vpack.c.b16 %v797, %v793
    %v1022 = vpack.c.b16 %v798, %v794
    %v1023 = vpack.c.b16 %v803, %v799
    %v1024 = vpack.c.b16 %v804, %v800
    %v1025 = vpack.c.b16 %v805, %v801
    %v1026 = vpack.c.b16 %v806, %v802
    %v1027 = vpack.c.b16 %v811, %v807
    %v1028 = vpack.c.b16 %v812, %v808
    %v1029 = vpack.c.b16 %v813, %v809
    %v1030 = vpack.c.b16 %v814, %v810
    %v1031 = vpack.c.b16 %v819, %v815
    %v1032 = vpack.c.b16 %v820, %v816
    %v1033 = vpack.c.b16 %v821, %v817
    %v1034 = vpack.c.b16 %v822, %v818
    %v1035 = vpack.c.b16 %v827, %v823
    %v1036 = vpack.c.b16 %v828, %v824
    %v1037 = vpack.c.b16 %v829, %v825
    %v1038 = vpack.c.b16 %v830, %v826
    %v1039 = vpack.c.b16 %v835, %v831
    %v1040 = vpack.c.b16 %v836, %v832
    %v1041 = vpack.c.b16 %v837, %v833
    %v1042 = vpack.c.b16 %v838, %v834
    %v1043 = vpack.c.b16 %v843, %v839
    %v1044 = vpack.c.b16 %v844, %v840
    %v1045 = vpack.c.b16 %v845, %v841
    %v1046 = vpack.c.b16 %v846, %v842
    %v1047 = vpack.c.b16 %v851, %v847
    %v1048 = vpack.c.b16 %v852, %v848
    %v1049 = vpack.c.b16 %v853, %v849
    %v1050 = vpack.c.b16 %v854, %v850
    %v1051 = vpack.c.b16 %v859, %v855
    %v1052 = vpack.c.b16 %v860, %v856
    %v1053 = vpack.c.b16 %v861, %v857
    %v1054 = vpack.c.b16 %v862, %v858
    %1247 = vmatprep.subr.bf16.mxu0 %v892
    %1248 = vmatpush1.bf16.msra.mxu0 %v891
    %1249 = vmatprep.subr.bf16.mxu0 %v888
    %1250 = vmatpush1.bf16.msra.mxu0 %v887
    %1251 = vmatprep.subr.bf16.mxu0 %v884
    %1252 = vmatpush1.bf16.msra.mxu0 %v883
    %1253 = vmatprep.subr.bf16.mxu0 %v880
    %1254 = vmatpush1.bf16.msra.mxu0 %v879
    %1255 = vmatprep.subr.bf16.mxu0 %v876
    %1256 = vmatpush1.bf16.msra.mxu0 %v875
    %1257 = vmatprep.subr.bf16.mxu0 %v872
    %1258 = vmatpush1.bf16.msra.mxu0 %v871
    %1259 = vmatprep.subr.bf16.mxu0 %v868
    %1260 = vmatpush1.bf16.msra.mxu0 %v867
    %1261 = vmatprep.subr.bf16.mxu0 %v864
    %1262 = vmatpush1.bf16.msra.mxu0 %v863
    %1263 = vmatprep.subr.bf16.mxu0 %v924
    %1264 = vmatpush2.bf16.msra.mxu0 %v923
    %1265 = vmatprep.subr.bf16.mxu0 %v920
    %1266 = vmatpush2.bf16.msra.mxu0 %v919
    %1267 = vmatprep.subr.bf16.mxu0 %v916
    %1268 = vmatpush2.bf16.msra.mxu0 %v915
    %1269 = vmatprep.subr.bf16.mxu0 %v912
    %1270 = vmatpush2.bf16.msra.mxu0 %v911
    %1271 = vmatprep.subr.bf16.mxu0 %v908
    %1272 = vmatpush2.bf16.msra.mxu0 %v907
    %1273 = vmatprep.subr.bf16.mxu0 %v904
    %1274 = vmatpush2.bf16.msra.mxu0 %v903
    %1275 = vmatprep.subr.bf16.mxu0 %v900
    %1276 = vmatpush2.bf16.msra.mxu0 %v899
    %1277 = vmatprep.subr.bf16.mxu0 %v896
    %1278 = vmatpush2.bf16.msra.mxu0 %v895
    %1279 = vmatprep.mubr.bf16.mxu0 %v276
    %1280 = vmatmul.mubr.bf16.gmra.mxu0 %v275
    %v1281 = vpop.f32.mrf.mxu0
    %v1282 = vadd.f32 %v249, %v1281
    %v1283 = vpop.f32.mrf.mxu0
    %v1284 = vadd.f32 %v253, %v1283
    %v1285 = vpop.f32.mrf.mxu0
    %v1286 = vpop.f32.mrf.mxu0
    %1287 = vdwg.mxu0
    %1288 = vmatprep.subr.bf16.mxu0 %v956
    %1289 = vmatpush1.bf16.msra.mxu0 %v955
    %1290 = vmatprep.subr.bf16.mxu0 %v952
    %1291 = vmatpush1.bf16.msra.mxu0 %v951
    %1292 = vmatprep.subr.bf16.mxu0 %v948
    %1293 = vmatpush1.bf16.msra.mxu0 %v947
    %1294 = vmatprep.subr.bf16.mxu0 %v944
    %1295 = vmatpush1.bf16.msra.mxu0 %v943
    %1296 = vmatprep.subr.bf16.mxu0 %v940
    %1297 = vmatpush1.bf16.msra.mxu0 %v939
    %1298 = vmatprep.subr.bf16.mxu0 %v936
    %1299 = vmatpush1.bf16.msra.mxu0 %v935
    %1300 = vmatprep.subr.bf16.mxu0 %v932
    %1301 = vmatpush1.bf16.msra.mxu0 %v931
    %1302 = vmatprep.subr.bf16.mxu0 %v928
    %1303 = vmatpush1.bf16.msra.mxu0 %v927
    %1304 = vmatprep.subr.bf16.mxu0 %v988
    %1305 = vmatpush2.bf16.msra.mxu0 %v987
    %1306 = vmatprep.subr.bf16.mxu0 %v984
    %1307 = vmatpush2.bf16.msra.mxu0 %v983
    %1308 = vmatprep.subr.bf16.mxu0 %v980
    %1309 = vmatpush2.bf16.msra.mxu0 %v979
    %1310 = vmatprep.subr.bf16.mxu0 %v976
    %1311 = vmatpush2.bf16.msra.mxu0 %v975
    %1312 = vmatprep.subr.bf16.mxu0 %v972
    %1313 = vmatpush2.bf16.msra.mxu0 %v971
    %1314 = vmatprep.subr.bf16.mxu0 %v968
    %1315 = vmatpush2.bf16.msra.mxu0 %v967
    %1316 = vmatprep.subr.bf16.mxu0 %v964
    %1317 = vmatpush2.bf16.msra.mxu0 %v963
    %1318 = vmatprep.subr.bf16.mxu0 %v960
    %1319 = vmatpush2.bf16.msra.mxu0 %v959
    %1320 = vmatprep.mubr.bf16.mxu0 %v278
    %1321 = vmatmul.mubr.bf16.gmra.mxu0 %v277
    %v1322 = vpop.f32.mrf.mxu0
    %v1323 = vadd.f32 %v1282, %v1322
    %v1324 = vpop.f32.mrf.mxu0
    %v1325 = vadd.f32 %v1284, %v1324
    %v1326 = vpop.f32.mrf.mxu0
    %v1327 = vpop.f32.mrf.mxu0
    %1328 = vdwg.mxu0
    %1329 = vmatprep.subr.bf16.mxu0 %v1020
    %1330 = vmatpush1.bf16.msra.mxu0 %v1019
    %1331 = vmatprep.subr.bf16.mxu0 %v1016
    %1332 = vmatpush1.bf16.msra.mxu0 %v1015
    %1333 = vmatprep.subr.bf16.mxu0 %v1012
    %1334 = vmatpush1.bf16.msra.mxu0 %v1011
    %1335 = vmatprep.subr.bf16.mxu0 %v1008
    %1336 = vmatpush1.bf16.msra.mxu0 %v1007
    %1337 = vmatprep.subr.bf16.mxu0 %v1004
    %1338 = vmatpush1.bf16.msra.mxu0 %v1003
    %1339 = vmatprep.subr.bf16.mxu0 %v1000
    %1340 = vmatpush1.bf16.msra.mxu0 %v999
    %1341 = vmatprep.subr.bf16.mxu0 %v996
    %1342 = vmatpush1.bf16.msra.mxu0 %v995
    %1343 = vmatprep.subr.bf16.mxu0 %v992
    %1344 = vmatpush1.bf16.msra.mxu0 %v991
    %1345 = vmatprep.subr.bf16.mxu0 %v1052
    %1346 = vmatpush2.bf16.msra.mxu0 %v1051
    %1347 = vmatprep.subr.bf16.mxu0 %v1048
    %1348 = vmatpush2.bf16.msra.mxu0 %v1047
    %1349 = vmatprep.subr.bf16.mxu0 %v1044
    %1350 = vmatpush2.bf16.msra.mxu0 %v1043
    %1351 = vmatprep.subr.bf16.mxu0 %v1040
    %1352 = vmatpush2.bf16.msra.mxu0 %v1039
    %1353 = vmatprep.subr.bf16.mxu0 %v1036
    %1354 = vmatpush2.bf16.msra.mxu0 %v1035
    %1355 = vmatprep.subr.bf16.mxu0 %v1032
    %1356 = vmatpush2.bf16.msra.mxu0 %v1031
    %1357 = vmatprep.subr.bf16.mxu0 %v1028
    %1358 = vmatpush2.bf16.msra.mxu0 %v1027
    %1359 = vmatprep.subr.bf16.mxu0 %v1024
    %1360 = vmatpush2.bf16.msra.mxu0 %v1023
    %1361 = vmatprep.mubr.bf16.mxu0 %v280
    %1362 = vmatmul.mubr.bf16.gmra.mxu0 %v279
    %v1363 = vpop.f32.mrf.mxu0
    %v1364 = vadd.f32 %v1323, %v1363
    %v1365 = vpop.f32.mrf.mxu0
    %v1366 = vadd.f32 %v1325, %v1365
    %v1367 = vpop.f32.mrf.mxu0
    %v1368 = vpop.f32.mrf.mxu0
    %1369 = vdwg.mxu0
    %1370 = vmatprep.subr.bf16.mxu0 %v894
    %1371 = vmatpush1.bf16.msra.mxu0 %v893
    %1372 = vmatprep.subr.bf16.mxu0 %v890
    %1373 = vmatpush1.bf16.msra.mxu0 %v889
    %1374 = vmatprep.subr.bf16.mxu0 %v886
    %1375 = vmatpush1.bf16.msra.mxu0 %v885
    %1376 = vmatprep.subr.bf16.mxu0 %v882
    %1377 = vmatpush1.bf16.msra.mxu0 %v881
    %1378 = vmatprep.subr.bf16.mxu0 %v878
    %1379 = vmatpush1.bf16.msra.mxu0 %v877
    %1380 = vmatprep.subr.bf16.mxu0 %v874
    %1381 = vmatpush1.bf16.msra.mxu0 %v873
    %1382 = vmatprep.subr.bf16.mxu0 %v870
    %1383 = vmatpush1.bf16.msra.mxu0 %v869
    %1384 = vmatprep.subr.bf16.mxu0 %v866
    %1385 = vmatpush1.bf16.msra.mxu0 %v865
    %1386 = vmatprep.subr.bf16.mxu0 %v926
    %1387 = vmatpush2.bf16.msra.mxu0 %v925
    %1388 = vmatprep.subr.bf16.mxu0 %v922
    %1389 = vmatpush2.bf16.msra.mxu0 %v921
    %1390 = vmatprep.subr.bf16.mxu0 %v918
    %1391 = vmatpush2.bf16.msra.mxu0 %v917
    %1392 = vmatprep.subr.bf16.mxu0 %v914
    %1393 = vmatpush2.bf16.msra.mxu0 %v913
    %1394 = vmatprep.subr.bf16.mxu0 %v910
    %1395 = vmatpush2.bf16.msra.mxu0 %v909
    %1396 = vmatprep.subr.bf16.mxu0 %v906
    %1397 = vmatpush2.bf16.msra.mxu0 %v905
    %1398 = vmatprep.subr.bf16.mxu0 %v902
    %1399 = vmatpush2.bf16.msra.mxu0 %v901
    %1400 = vmatprep.subr.bf16.mxu0 %v898
    %1401 = vmatpush2.bf16.msra.mxu0 %v897
    %1402 = vmatprep.mubr.bf16.mxu0 %v276
    %1403 = vmatmul.mubr.bf16.gmra.mxu0 %v275
    %v1404 = vpop.f32.mrf.mxu0
    %v1405 = vadd.f32 %v257, %v1404
    %v1406 = vpop.f32.mrf.mxu0
    %v1407 = vadd.f32 %v261, %v1406
    %v1408 = vpop.f32.mrf.mxu0
    %v1409 = vpop.f32.mrf.mxu0
    %1410 = vdwg.mxu0
    %1411 = vmatprep.subr.bf16.mxu0 %v958
    %1412 = vmatpush1.bf16.msra.mxu0 %v957
    %1413 = vmatprep.subr.bf16.mxu0 %v954
    %1414 = vmatpush1.bf16.msra.mxu0 %v953
    %1415 = vmatprep.subr.bf16.mxu0 %v950
    %1416 = vmatpush1.bf16.msra.mxu0 %v949
    %1417 = vmatprep.subr.bf16.mxu0 %v946
    %1418 = vmatpush1.bf16.msra.mxu0 %v945
    %1419 = vmatprep.subr.bf16.mxu0 %v942
    %1420 = vmatpush1.bf16.msra.mxu0 %v941
    %1421 = vmatprep.subr.bf16.mxu0 %v938
    %1422 = vmatpush1.bf16.msra.mxu0 %v937
    %1423 = vmatprep.subr.bf16.mxu0 %v934
    %1424 = vmatpush1.bf16.msra.mxu0 %v933
    %1425 = vmatprep.subr.bf16.mxu0 %v930
    %1426 = vmatpush1.bf16.msra.mxu0 %v929
    %1427 = vmatprep.subr.bf16.mxu0 %v990
    %1428 = vmatpush2.bf16.msra.mxu0 %v989
    %1429 = vmatprep.subr.bf16.mxu0 %v986
    %1430 = vmatpush2.bf16.msra.mxu0 %v985
    %1431 = vmatprep.subr.bf16.mxu0 %v982
    %1432 = vmatpush2.bf16.msra.mxu0 %v981
    %1433 = vmatprep.subr.bf16.mxu0 %v978
    %1434 = vmatpush2.bf16.msra.mxu0 %v977
    %1435 = vmatprep.subr.bf16.mxu0 %v974
    %1436 = vmatpush2.bf16.msra.mxu0 %v973
    %1437 = vmatprep.subr.bf16.mxu0 %v970
    %1438 = vmatpush2.bf16.msra.mxu0 %v969
    %1439 = vmatprep.subr.bf16.mxu0 %v966
    %1440 = vmatpush2.bf16.msra.mxu0 %v965
    %1441 = vmatprep.subr.bf16.mxu0 %v962
    %1442 = vmatpush2.bf16.msra.mxu0 %v961
    %1443 = vmatprep.mubr.bf16.mxu0 %v278
    %1444 = vmatmul.mubr.bf16.gmra.mxu0 %v277
    %v1445 = vpop.f32.mrf.mxu0
    %v1446 = vadd.f32 %v1405, %v1445
    %v1447 = vpop.f32.mrf.mxu0
    %v1448 = vadd.f32 %v1407, %v1447
    %v1449 = vpop.f32.mrf.mxu0
    %v1450 = vpop.f32.mrf.mxu0
    %1451 = vdwg.mxu0
    %1452 = vmatprep.subr.bf16.mxu0 %v1022
    %1453 = vmatpush1.bf16.msra.mxu0 %v1021
    %1454 = vmatprep.subr.bf16.mxu0 %v1018
    %1455 = vmatpush1.bf16.msra.mxu0 %v1017
    %1456 = vmatprep.subr.bf16.mxu0 %v1014
    %1457 = vmatpush1.bf16.msra.mxu0 %v1013
    %1458 = vmatprep.subr.bf16.mxu0 %v1010
    %1459 = vmatpush1.bf16.msra.mxu0 %v1009
    %1460 = vmatprep.subr.bf16.mxu0 %v1006
    %1461 = vmatpush1.bf16.msra.mxu0 %v1005
    %1462 = vmatprep.subr.bf16.mxu0 %v1002
    %1463 = vmatpush1.bf16.msra.mxu0 %v1001
    %1464 = vmatprep.subr.bf16.mxu0 %v998
    %1465 = vmatpush1.bf16.msra.mxu0 %v997
    %1466 = vmatprep.subr.bf16.mxu0 %v994
    %1467 = vmatpush1.bf16.msra.mxu0 %v993
    %1468 = vmatprep.subr.bf16.mxu0 %v1054
    %1469 = vmatpush2.bf16.msra.mxu0 %v1053
    %1470 = vmatprep.subr.bf16.mxu0 %v1050
    %1471 = vmatpush2.bf16.msra.mxu0 %v1049
    %1472 = vmatprep.subr.bf16.mxu0 %v1046
    %1473 = vmatpush2.bf16.msra.mxu0 %v1045
    %1474 = vmatprep.subr.bf16.mxu0 %v1042
    %1475 = vmatpush2.bf16.msra.mxu0 %v1041
    %1476 = vmatprep.subr.bf16.mxu0 %v1038
    %1477 = vmatpush2.bf16.msra.mxu0 %v1037
    %1478 = vmatprep.subr.bf16.mxu0 %v1034
    %1479 = vmatpush2.bf16.msra.mxu0 %v1033
    %1480 = vmatprep.subr.bf16.mxu0 %v1030
    %1481 = vmatpush2.bf16.msra.mxu0 %v1029
    %1482 = vmatprep.subr.bf16.mxu0 %v1026
    %1483 = vmatpush2.bf16.msra.mxu0 %v1025
    %1484 = vmatprep.mubr.bf16.mxu0 %v280
    %1485 = vmatmul.mubr.bf16.gmra.mxu0 %v279
    %v1486 = vpop.f32.mrf.mxu0
    %v1487 = vadd.f32 %v1446, %v1486
    %v1488 = vpop.f32.mrf.mxu0
    %v1489 = vadd.f32 %v1448, %v1488
    %v1490 = vpop.f32.mrf.mxu0
    %v1491 = vpop.f32.mrf.mxu0
    %1492 = vdwg.mxu0
    %v1493 = vmax.f32 %v1364, 0.0
    %v1494 = vmax.f32 %v1366, 0.0
    %v1495 = vmax.f32 %v1487, 0.0
    %v1496 = vmax.f32 %v1489, 0.0
    %v1497 = vpack.c.bf16 %v1493, %v1493
    %v1498 = vpack.c.bf16 %v1494, %v1494
    %v1499 = vpack.c.bf16 %v1495, %v1495
    %v1500 = vpack.c.bf16 %v1496, %v1496
    %v1501 = vld [vmem:[%s2] sm:$0xff]
    %v1502 = vld [vmem:[%s2 + $0x8] sm:$0xff]
    %v1503 = vld [vmem:[%s2 + $0x10] sm:$0xff]
    %v1504 = vld [vmem:[%s2 + $0x18] sm:$0xff]
    %v1505 = vld [vmem:[%s2 + $0x20] sm:$0xff]
    %v1506 = vld [vmem:[%s2 + $0x28] sm:$0xff]
    %v1507 = vld [vmem:[%s2 + $0x30] sm:$0xff]
    %v1508 = vld [vmem:[%s2 + $0x38] sm:$0xff]
    %v1509 = vld [vmem:[%s2 + $0x40] sm:$0xff]
    %v1510 = vld [vmem:[%s2 + $0x48] sm:$0xff]
    %v1511 = vld [vmem:[%s2 + $0x50] sm:$0xff]
    %v1512 = vld [vmem:[%s2 + $0x58] sm:$0xff]
    %v1513 = vld [vmem:[%s2 + $0x60] sm:$0xff]
    %v1514 = vld [vmem:[%s2 + $0x68] sm:$0xff]
    %v1515 = vld [vmem:[%s2 + $0x70] sm:$0xff]
    %v1516 = vld [vmem:[%s2 + $0x78] sm:$0xff]
    %v1517 = vld [vmem:[%s2 + $0x80] sm:$0xff]
    %v1518 = vld [vmem:[%s2 + $0x88] sm:$0xff]
    %v1519 = vld [vmem:[%s2 + $0x90] sm:$0xff]
    %v1520 = vld [vmem:[%s2 + $0x98] sm:$0xff]
    %v1521 = vld [vmem:[%s2 + $0xa0] sm:$0xff]
    %v1522 = vld [vmem:[%s2 + $0xa8] sm:$0xff]
    %v1523 = vld [vmem:[%s2 + $0xb0] sm:$0xff]
    %v1524 = vld [vmem:[%s2 + $0xb8] sm:$0xff]
    %v1525 = vld [vmem:[%s2 + $0xc0] sm:$0xff]
    %v1526 = vld [vmem:[%s2 + $0xc8] sm:$0xff]
    %v1527 = vld [vmem:[%s2 + $0xd0] sm:$0xff]
    %v1528 = vld [vmem:[%s2 + $0xd8] sm:$0xff]
    %v1529 = vld [vmem:[%s2 + $0xe0] sm:$0xff]
    %v1530 = vld [vmem:[%s2 + $0xe8] sm:$0xff]
    %v1531 = vld [vmem:[%s2 + $0xf0] sm:$0xff]
    %v1532 = vld [vmem:[%s2 + $0xf8] sm:$0xff]
    %v1533 = vld [vmem:[%s2 + $0x100] sm:$0xff]
    %v1534 = vld [vmem:[%s2 + $0x108] sm:$0xff]
    %v1535 = vld [vmem:[%s2 + $0x110] sm:$0xff]
    %v1536 = vld [vmem:[%s2 + $0x118] sm:$0xff]
    %v1537 = vld [vmem:[%s2 + $0x120] sm:$0xff]
    %v1538 = vld [vmem:[%s2 + $0x128] sm:$0xff]
    %v1539 = vld [vmem:[%s2 + $0x130] sm:$0xff]
    %v1540 = vld [vmem:[%s2 + $0x138] sm:$0xff]
    %v1541 = vld [vmem:[%s2 + $0x140] sm:$0xff]
    %v1542 = vld [vmem:[%s2 + $0x148] sm:$0xff]
    %v1543 = vld [vmem:[%s2 + $0x150] sm:$0xff]
    %v1544 = vld [vmem:[%s2 + $0x158] sm:$0xff]
    %v1545 = vld [vmem:[%s2 + $0x160] sm:$0xff]
    %v1546 = vld [vmem:[%s2 + $0x168] sm:$0xff]
    %v1547 = vld [vmem:[%s2 + $0x170] sm:$0xff]
    %v1548 = vld [vmem:[%s2 + $0x178] sm:$0xff]
    %v1549 = vld [vmem:[%s2 + $0x180] sm:$0xff]
    %v1550 = vld [vmem:[%s2 + $0x188] sm:$0xff]
    %v1551 = vld [vmem:[%s2 + $0x190] sm:$0xff]
    %v1552 = vld [vmem:[%s2 + $0x198] sm:$0xff]
    %v1553 = vld [vmem:[%s2 + $0x1a0] sm:$0xff]
    %v1554 = vld [vmem:[%s2 + $0x1a8] sm:$0xff]
    %v1555 = vld [vmem:[%s2 + $0x1b0] sm:$0xff]
    %v1556 = vld [vmem:[%s2 + $0x1b8] sm:$0xff]
    %v1557 = vld [vmem:[%s2 + $0x1c0] sm:$0xff]
    %v1558 = vld [vmem:[%s2 + $0x1c8] sm:$0xff]
    %v1559 = vld [vmem:[%s2 + $0x1d0] sm:$0xff]
    %v1560 = vld [vmem:[%s2 + $0x1d8] sm:$0xff]
    %v1561 = vld [vmem:[%s2 + $0x1e0] sm:$0xff]
    %v1562 = vld [vmem:[%s2 + $0x1e8] sm:$0xff]
    %v1563 = vld [vmem:[%s2 + $0x1f0] sm:$0xff]
    %v1564 = vld [vmem:[%s2 + $0x1f8] sm:$0xff]
    %v1629 = vunpack.c.l.b16 %v1501
    %v1630 = vunpack.c.h.b16 %v1501
    %v1631 = vunpack.c.l.b16 %v1502
    %v1632 = vunpack.c.h.b16 %v1502
    %v1633 = vunpack.c.l.b16 %v1503
    %v1634 = vunpack.c.h.b16 %v1503
    %v1635 = vunpack.c.l.b16 %v1504
    %v1636 = vunpack.c.h.b16 %v1504
    %v1637 = vunpack.c.l.b16 %v1505
    %v1638 = vunpack.c.h.b16 %v1505
    %v1639 = vunpack.c.l.b16 %v1506
    %v1640 = vunpack.c.h.b16 %v1506
    %v1641 = vunpack.c.l.b16 %v1507
    %v1642 = vunpack.c.h.b16 %v1507
    %v1643 = vunpack.c.l.b16 %v1508
    %v1644 = vunpack.c.h.b16 %v1508
    %v1645 = vunpack.c.l.b16 %v1509
    %v1646 = vunpack.c.h.b16 %v1509
    %v1647 = vunpack.c.l.b16 %v1510
    %v1648 = vunpack.c.h.b16 %v1510
    %v1649 = vunpack.c.l.b16 %v1511
    %v1650 = vunpack.c.h.b16 %v1511
    %v1651 = vunpack.c.l.b16 %v1512
    %v1652 = vunpack.c.h.b16 %v1512
    %v1653 = vunpack.c.l.b16 %v1513
    %v1654 = vunpack.c.h.b16 %v1513
    %v1655 = vunpack.c.l.b16 %v1514
    %v1656 = vunpack.c.h.b16 %v1514
    %v1657 = vunpack.c.l.b16 %v1515
    %v1658 = vunpack.c.h.b16 %v1515
    %v1659 = vunpack.c.l.b16 %v1516
    %v1660 = vunpack.c.h.b16 %v1516
    %v1661 = vunpack.c.l.b16 %v1517
    %v1662 = vunpack.c.h.b16 %v1517
    %v1663 = vunpack.c.l.b16 %v1518
    %v1664 = vunpack.c.h.b16 %v1518
    %v1665 = vunpack.c.l.b16 %v1519
    %v1666 = vunpack.c.h.b16 %v1519
    %v1667 = vunpack.c.l.b16 %v1520
    %v1668 = vunpack.c.h.b16 %v1520
    %v1669 = vunpack.c.l.b16 %v1521
    %v1670 = vunpack.c.h.b16 %v1521
    %v1671 = vunpack.c.l.b16 %v1522
    %v1672 = vunpack.c.h.b16 %v1522
    %v1673 = vunpack.c.l.b16 %v1523
    %v1674 = vunpack.c.h.b16 %v1523
    %v1675 = vunpack.c.l.b16 %v1524
    %v1676 = vunpack.c.h.b16 %v1524
    %v1677 = vunpack.c.l.b16 %v1525
    %v1678 = vunpack.c.h.b16 %v1525
    %v1679 = vunpack.c.l.b16 %v1526
    %v1680 = vunpack.c.h.b16 %v1526
    %v1681 = vunpack.c.l.b16 %v1527
    %v1682 = vunpack.c.h.b16 %v1527
    %v1683 = vunpack.c.l.b16 %v1528
    %v1684 = vunpack.c.h.b16 %v1528
    %v1685 = vunpack.c.l.b16 %v1529
    %v1686 = vunpack.c.h.b16 %v1529
    %v1687 = vunpack.c.l.b16 %v1530
    %v1688 = vunpack.c.h.b16 %v1530
    %v1689 = vunpack.c.l.b16 %v1531
    %v1690 = vunpack.c.h.b16 %v1531
    %v1691 = vunpack.c.l.b16 %v1532
    %v1692 = vunpack.c.h.b16 %v1532
    %v1693 = vunpack.c.l.b16 %v1533
    %v1694 = vunpack.c.h.b16 %v1533
    %v1695 = vunpack.c.l.b16 %v1534
    %v1696 = vunpack.c.h.b16 %v1534
    %v1697 = vunpack.c.l.b16 %v1535
    %v1698 = vunpack.c.h.b16 %v1535
    %v1699 = vunpack.c.l.b16 %v1536
    %v1700 = vunpack.c.h.b16 %v1536
    %v1701 = vunpack.c.l.b16 %v1537
    %v1702 = vunpack.c.h.b16 %v1537
    %v1703 = vunpack.c.l.b16 %v1538
    %v1704 = vunpack.c.h.b16 %v1538
    %v1705 = vunpack.c.l.b16 %v1539
    %v1706 = vunpack.c.h.b16 %v1539
    %v1707 = vunpack.c.l.b16 %v1540
    %v1708 = vunpack.c.h.b16 %v1540
    %v1709 = vunpack.c.l.b16 %v1541
    %v1710 = vunpack.c.h.b16 %v1541
    %v1711 = vunpack.c.l.b16 %v1542
    %v1712 = vunpack.c.h.b16 %v1542
    %v1713 = vunpack.c.l.b16 %v1543
    %v1714 = vunpack.c.h.b16 %v1543
    %v1715 = vunpack.c.l.b16 %v1544
    %v1716 = vunpack.c.h.b16 %v1544
    %v1717 = vunpack.c.l.b16 %v1545
    %v1718 = vunpack.c.h.b16 %v1545
    %v1719 = vunpack.c.l.b16 %v1546
    %v1720 = vunpack.c.h.b16 %v1546
    %v1721 = vunpack.c.l.b16 %v1547
    %v1722 = vunpack.c.h.b16 %v1547
    %v1723 = vunpack.c.l.b16 %v1548
    %v1724 = vunpack.c.h.b16 %v1548
    %v1725 = vunpack.c.l.b16 %v1549
    %v1726 = vunpack.c.h.b16 %v1549
    %v1727 = vunpack.c.l.b16 %v1550
    %v1728 = vunpack.c.h.b16 %v1550
    %v1729 = vunpack.c.l.b16 %v1551
    %v1730 = vunpack.c.h.b16 %v1551
    %v1731 = vunpack.c.l.b16 %v1552
    %v1732 = vunpack.c.h.b16 %v1552
    %v1733 = vunpack.c.l.b16 %v1553
    %v1734 = vunpack.c.h.b16 %v1553
    %v1735 = vunpack.c.l.b16 %v1554
    %v1736 = vunpack.c.h.b16 %v1554
    %v1737 = vunpack.c.l.b16 %v1555
    %v1738 = vunpack.c.h.b16 %v1555
    %v1739 = vunpack.c.l.b16 %v1556
    %v1740 = vunpack.c.h.b16 %v1556
    %v1741 = vunpack.c.l.b16 %v1557
    %v1742 = vunpack.c.h.b16 %v1557
    %v1743 = vunpack.c.l.b16 %v1558
    %v1744 = vunpack.c.h.b16 %v1558
    %v1745 = vunpack.c.l.b16 %v1559
    %v1746 = vunpack.c.h.b16 %v1559
    %v1747 = vunpack.c.l.b16 %v1560
    %v1748 = vunpack.c.h.b16 %v1560
    %v1749 = vunpack.c.l.b16 %v1561
    %v1750 = vunpack.c.h.b16 %v1561
    %v1751 = vunpack.c.l.b16 %v1562
    %v1752 = vunpack.c.h.b16 %v1562
    %v1753 = vunpack.c.l.b16 %v1563
    %v1754 = vunpack.c.h.b16 %v1563
    %v1755 = vunpack.c.l.b16 %v1564
    %v1756 = vunpack.c.h.b16 %v1564
    %v1757 = vpack.c.b16 %v1631, %v1629
    %v1758 = vpack.c.b16 %v1632, %v1630
    %v1759 = vpack.c.b16 %v1635, %v1633
    %v1760 = vpack.c.b16 %v1636, %v1634
    %v1761 = vpack.c.b16 %v1639, %v1637
    %v1762 = vpack.c.b16 %v1640, %v1638
    %v1763 = vpack.c.b16 %v1643, %v1641
    %v1764 = vpack.c.b16 %v1644, %v1642
    %v1765 = vpack.c.b16 %v1647, %v1645
    %v1766 = vpack.c.b16 %v1648, %v1646
    %v1767 = vpack.c.b16 %v1651, %v1649
    %v1768 = vpack.c.b16 %v1652, %v1650
    %v1769 = vpack.c.b16 %v1655, %v1653
    %v1770 = vpack.c.b16 %v1656, %v1654
    %v1771 = vpack.c.b16 %v1659, %v1657
    %v1772 = vpack.c.b16 %v1660, %v1658
    %v1773 = vpack.c.b16 %v1663, %v1661
    %v1774 = vpack.c.b16 %v1664, %v1662
    %v1775 = vpack.c.b16 %v1667, %v1665
    %v1776 = vpack.c.b16 %v1668, %v1666
    %v1777 = vpack.c.b16 %v1671, %v1669
    %v1778 = vpack.c.b16 %v1672, %v1670
    %v1779 = vpack.c.b16 %v1675, %v1673
    %v1780 = vpack.c.b16 %v1676, %v1674
    %v1781 = vpack.c.b16 %v1679, %v1677
    %v1782 = vpack.c.b16 %v1680, %v1678
    %v1783 = vpack.c.b16 %v1683, %v1681
    %v1784 = vpack.c.b16 %v1684, %v1682
    %v1785 = vpack.c.b16 %v1687, %v1685
    %v1786 = vpack.c.b16 %v1688, %v1686
    %v1787 = vpack.c.b16 %v1691, %v1689
    %v1788 = vpack.c.b16 %v1692, %v1690
    %v1789 = vpack.c.b16 %v1695, %v1693
    %v1790 = vpack.c.b16 %v1696, %v1694
    %v1791 = vpack.c.b16 %v1699, %v1697
    %v1792 = vpack.c.b16 %v1700, %v1698
    %v1793 = vpack.c.b16 %v1703, %v1701
    %v1794 = vpack.c.b16 %v1704, %v1702
    %v1795 = vpack.c.b16 %v1707, %v1705
    %v1796 = vpack.c.b16 %v1708, %v1706
    %v1797 = vpack.c.b16 %v1711, %v1709
    %v1798 = vpack.c.b16 %v1712, %v1710
    %v1799 = vpack.c.b16 %v1715, %v1713
    %v1800 = vpack.c.b16 %v1716, %v1714
    %v1801 = vpack.c.b16 %v1719, %v1717
    %v1802 = vpack.c.b16 %v1720, %v1718
    %v1803 = vpack.c.b16 %v1723, %v1721
    %v1804 = vpack.c.b16 %v1724, %v1722
    %v1805 = vpack.c.b16 %v1727, %v1725
    %v1806 = vpack.c.b16 %v1728, %v1726
    %v1807 = vpack.c.b16 %v1731, %v1729
    %v1808 = vpack.c.b16 %v1732, %v1730
    %v1809 = vpack.c.b16 %v1735, %v1733
    %v1810 = vpack.c.b16 %v1736, %v1734
    %v1811 = vpack.c.b16 %v1739, %v1737
    %v1812 = vpack.c.b16 %v1740, %v1738
    %v1813 = vpack.c.b16 %v1743, %v1741
    %v1814 = vpack.c.b16 %v1744, %v1742
    %v1815 = vpack.c.b16 %v1747, %v1745
    %v1816 = vpack.c.b16 %v1748, %v1746
    %v1817 = vpack.c.b16 %v1751, %v1749
    %v1818 = vpack.c.b16 %v1752, %v1750
    %v1819 = vpack.c.b16 %v1755, %v1753
    %v1820 = vpack.c.b16 %v1756, %v1754
    %1885 = vmatprep.subr.bf16.mxu0 %v1772
    %1886 = vmatpush1.bf16.msra.mxu0 %v1771
    %1887 = vmatprep.subr.bf16.mxu0 %v1770
    %1888 = vmatpush1.bf16.msra.mxu0 %v1769
    %1889 = vmatprep.subr.bf16.mxu0 %v1768
    %1890 = vmatpush1.bf16.msra.mxu0 %v1767
    %1891 = vmatprep.subr.bf16.mxu0 %v1766
    %1892 = vmatpush1.bf16.msra.mxu0 %v1765
    %1893 = vmatprep.subr.bf16.mxu0 %v1764
    %1894 = vmatpush1.bf16.msra.mxu0 %v1763
    %1895 = vmatprep.subr.bf16.mxu0 %v1762
    %1896 = vmatpush1.bf16.msra.mxu0 %v1761
    %1897 = vmatprep.subr.bf16.mxu0 %v1760
    %1898 = vmatpush1.bf16.msra.mxu0 %v1759
    %1899 = vmatprep.subr.bf16.mxu0 %v1758
    %1900 = vmatpush1.bf16.msra.mxu0 %v1757
    %1901 = vmatprep.subr.bf16.mxu0 %v1788
    %1902 = vmatpush2.bf16.msra.mxu0 %v1787
    %1903 = vmatprep.subr.bf16.mxu0 %v1786
    %1904 = vmatpush2.bf16.msra.mxu0 %v1785
    %1905 = vmatprep.subr.bf16.mxu0 %v1784
    %1906 = vmatpush2.bf16.msra.mxu0 %v1783
    %1907 = vmatprep.subr.bf16.mxu0 %v1782
    %1908 = vmatpush2.bf16.msra.mxu0 %v1781
    %1909 = vmatprep.subr.bf16.mxu0 %v1780
    %1910 = vmatpush2.bf16.msra.mxu0 %v1779
    %1911 = vmatprep.subr.bf16.mxu0 %v1778
    %1912 = vmatpush2.bf16.msra.mxu0 %v1777
    %1913 = vmatprep.subr.bf16.mxu0 %v1776
    %1914 = vmatpush2.bf16.msra.mxu0 %v1775
    %1915 = vmatprep.subr.bf16.mxu0 %v1774
    %1916 = vmatpush2.bf16.msra.mxu0 %v1773
    %1917 = vmatprep.mubr.bf16.mxu0 %v1498
    %1918 = vmatmul.mubr.bf16.gmra.mxu0 %v1497
    %v1919 = vpop.f32.mrf.mxu0
    %v1920 = vadd.f32 0.0, %v1919
    %v1921 = vpop.f32.mrf.mxu0
    %v1922 = vadd.f32 0.0, %v1921
    %v1923 = vpop.f32.mrf.mxu0
    %v1924 = vpop.f32.mrf.mxu0
    %1925 = vdwg.mxu0
    %1926 = vmatprep.subr.bf16.mxu0 %v1804
    %1927 = vmatpush1.bf16.msra.mxu0 %v1803
    %1928 = vmatprep.subr.bf16.mxu0 %v1802
    %1929 = vmatpush1.bf16.msra.mxu0 %v1801
    %1930 = vmatprep.subr.bf16.mxu0 %v1800
    %1931 = vmatpush1.bf16.msra.mxu0 %v1799
    %1932 = vmatprep.subr.bf16.mxu0 %v1798
    %1933 = vmatpush1.bf16.msra.mxu0 %v1797
    %1934 = vmatprep.subr.bf16.mxu0 %v1796
    %1935 = vmatpush1.bf16.msra.mxu0 %v1795
    %1936 = vmatprep.subr.bf16.mxu0 %v1794
    %1937 = vmatpush1.bf16.msra.mxu0 %v1793
    %1938 = vmatprep.subr.bf16.mxu0 %v1792
    %1939 = vmatpush1.bf16.msra.mxu0 %v1791
    %1940 = vmatprep.subr.bf16.mxu0 %v1790
    %1941 = vmatpush1.bf16.msra.mxu0 %v1789
    %1942 = vmatprep.subr.bf16.mxu0 %v1820
    %1943 = vmatpush2.bf16.msra.mxu0 %v1819
    %1944 = vmatprep.subr.bf16.mxu0 %v1818
    %1945 = vmatpush2.bf16.msra.mxu0 %v1817
    %1946 = vmatprep.subr.bf16.mxu0 %v1816
    %1947 = vmatpush2.bf16.msra.mxu0 %v1815
    %1948 = vmatprep.subr.bf16.mxu0 %v1814
    %1949 = vmatpush2.bf16.msra.mxu0 %v1813
    %1950 = vmatprep.subr.bf16.mxu0 %v1812
    %1951 = vmatpush2.bf16.msra.mxu0 %v1811
    %1952 = vmatprep.subr.bf16.mxu0 %v1810
    %1953 = vmatpush2.bf16.msra.mxu0 %v1809
    %1954 = vmatprep.subr.bf16.mxu0 %v1808
    %1955 = vmatpush2.bf16.msra.mxu0 %v1807
    %1956 = vmatprep.subr.bf16.mxu0 %v1806
    %1957 = vmatpush2.bf16.msra.mxu0 %v1805
    %1958 = vmatprep.mubr.bf16.mxu0 %v1500
    %1959 = vmatmul.mubr.bf16.gmra.mxu0 %v1499
    %v1960 = vpop.f32.mrf.mxu0
    %v1961 = vadd.f32 %v1920, %v1960
    %v1962 = vpop.f32.mrf.mxu0
    %v1963 = vadd.f32 %v1922, %v1962
    %v1964 = vpop.f32.mrf.mxu0
    %v1965 = vpop.f32.mrf.mxu0
    %1966 = vdwg.mxu0
    %v1967 = vadd.s32 %v45, 8
    %v1968 = vadd.s32 %v45, 16
    %v1969 = vadd.s32 %v45, 24
    %v1970 = vadd.s32 %v45, 32
    %v1971 = vadd.s32 %v45, 40
    %v1972 = vadd.s32 %v45, 48
    %v1973 = vadd.s32 %v45, 56
    %v1974 = vadd.s32 %v45, 64
    %v1975 = vadd.s32 %v45, 72
    %v1976 = vadd.s32 %v45, 80
    %v1977 = vadd.s32 %v45, 88
    %v1978 = vadd.s32 %v45, 96
    %v1979 = vadd.s32 %v45, 104
    %v1980 = vadd.s32 %v45, 112
    %v1981 = vadd.s32 %v45, 120
    %v1982 = vadd.s32 %v45, 128
    %v1983 = vadd.s32 %v45, 136
    %v1984 = vadd.s32 %v45, 144
    %v1985 = vadd.s32 %v45, 152
    %v1986 = vadd.s32 %v45, 160
    %v1987 = vadd.s32 %v45, 168
    %v1988 = vadd.s32 %v45, 176
    %v1989 = vadd.s32 %v45, 184
    %v1990 = vadd.s32 %v45, 192
    %v1991 = vadd.s32 %v45, 200
    %v1992 = vadd.s32 %v45, 208
    %v1993 = vadd.s32 %v45, 216
    %v1994 = vadd.s32 %v45, 224
    %v1995 = vadd.s32 %v45, 232
    %v1996 = vadd.s32 %v45, 240
    %v1997 = vadd.s32 %v45, 248
    %vm1998 = vcmp.lt.s32.totalorder %v45, 0
    %v1999 = vsub.s32 0, %v45
    %v2000 = vsel %vm1998, %v1999, %v45
    %v2001 = vshrl.u32 %v2000, 4
    %v2002 = vand.u32 %v2000, 15
    %v2003 = vsub.s32 0, %v2002
    %v2004 = vsel %vm1998, %v2003, %v2002
    %vm2005 = vcmp.lt.s32.totalorder %v1967, 0
    %v2006 = vsub.s32 0, %v1967
    %v2007 = vsel %vm2005, %v2006, %v1967
    %v2008 = vshrl.u32 %v2007, 4
    %v2009 = vand.u32 %v2007, 15
    %v2010 = vsub.s32 0, %v2009
    %v2011 = vsel %vm2005, %v2010, %v2009
    %vm2012 = vcmp.lt.s32.totalorder %v1968, 0
    %v2013 = vsub.s32 0, %v1968
    %v2014 = vsel %vm2012, %v2013, %v1968
    %v2015 = vshrl.u32 %v2014, 4
    %v2016 = vand.u32 %v2014, 15
    %v2017 = vsub.s32 0, %v2016
    %v2018 = vsel %vm2012, %v2017, %v2016
    %vm2019 = vcmp.lt.s32.totalorder %v1969, 0
    %v2020 = vsub.s32 0, %v1969
    %v2021 = vsel %vm2019, %v2020, %v1969
    %v2022 = vshrl.u32 %v2021, 4
    %v2023 = vand.u32 %v2021, 15
    %v2024 = vsub.s32 0, %v2023
    %v2025 = vsel %vm2019, %v2024, %v2023
    %vm2026 = vcmp.lt.s32.totalorder %v1970, 0
    %v2027 = vsub.s32 0, %v1970
    %v2028 = vsel %vm2026, %v2027, %v1970
    %v2029 = vshrl.u32 %v2028, 4
    %v2030 = vand.u32 %v2028, 15
    %v2031 = vsub.s32 0, %v2030
    %v2032 = vsel %vm2026, %v2031, %v2030
    %vm2033 = vcmp.lt.s32.totalorder %v1971, 0
    %v2034 = vsub.s32 0, %v1971
    %v2035 = vsel %vm2033, %v2034, %v1971
    %v2036 = vshrl.u32 %v2035, 4
    %v2037 = vand.u32 %v2035, 15
    %v2038 = vsub.s32 0, %v2037
    %v2039 = vsel %vm2033, %v2038, %v2037
    %vm2040 = vcmp.lt.s32.totalorder %v1972, 0
    %v2041 = vsub.s32 0, %v1972
    %v2042 = vsel %vm2040, %v2041, %v1972
    %v2043 = vshrl.u32 %v2042, 4
    %v2044 = vand.u32 %v2042, 15
    %v2045 = vsub.s32 0, %v2044
    %v2046 = vsel %vm2040, %v2045, %v2044
    %vm2047 = vcmp.lt.s32.totalorder %v1973, 0
    %v2048 = vsub.s32 0, %v1973
    %v2049 = vsel %vm2047, %v2048, %v1973
    %v2050 = vshrl.u32 %v2049, 4
    %v2051 = vand.u32 %v2049, 15
    %v2052 = vsub.s32 0, %v2051
    %v2053 = vsel %vm2047, %v2052, %v2051
    %vm2054 = vcmp.lt.s32.totalorder %v1974, 0
    %v2055 = vsub.s32 0, %v1974
    %v2056 = vsel %vm2054, %v2055, %v1974
    %v2057 = vshrl.u32 %v2056, 4
    %v2058 = vand.u32 %v2056, 15
    %v2059 = vsub.s32 0, %v2058
    %v2060 = vsel %vm2054, %v2059, %v2058
    %vm2061 = vcmp.lt.s32.totalorder %v1975, 0
    %v2062 = vsub.s32 0, %v1975
    %v2063 = vsel %vm2061, %v2062, %v1975
    %v2064 = vshrl.u32 %v2063, 4
    %v2065 = vand.u32 %v2063, 15
    %v2066 = vsub.s32 0, %v2065
    %v2067 = vsel %vm2061, %v2066, %v2065
    %vm2068 = vcmp.lt.s32.totalorder %v1976, 0
    %v2069 = vsub.s32 0, %v1976
    %v2070 = vsel %vm2068, %v2069, %v1976
    %v2071 = vshrl.u32 %v2070, 4
    %v2072 = vand.u32 %v2070, 15
    %v2073 = vsub.s32 0, %v2072
    %v2074 = vsel %vm2068, %v2073, %v2072
    %vm2075 = vcmp.lt.s32.totalorder %v1977, 0
    %v2076 = vsub.s32 0, %v1977
    %v2077 = vsel %vm2075, %v2076, %v1977
    %v2078 = vshrl.u32 %v2077, 4
    %v2079 = vand.u32 %v2077, 15
    %v2080 = vsub.s32 0, %v2079
    %v2081 = vsel %vm2075, %v2080, %v2079
    %vm2082 = vcmp.lt.s32.totalorder %v1978, 0
    %v2083 = vsub.s32 0, %v1978
    %v2084 = vsel %vm2082, %v2083, %v1978
    %v2085 = vshrl.u32 %v2084, 4
    %v2086 = vand.u32 %v2084, 15
    %v2087 = vsub.s32 0, %v2086
    %v2088 = vsel %vm2082, %v2087, %v2086
    %vm2089 = vcmp.lt.s32.totalorder %v1979, 0
    %v2090 = vsub.s32 0, %v1979
    %v2091 = vsel %vm2089, %v2090, %v1979
    %v2092 = vshrl.u32 %v2091, 4
    %v2093 = vand.u32 %v2091, 15
    %v2094 = vsub.s32 0, %v2093
    %v2095 = vsel %vm2089, %v2094, %v2093
    %vm2096 = vcmp.lt.s32.totalorder %v1980, 0
    %v2097 = vsub.s32 0, %v1980
    %v2098 = vsel %vm2096, %v2097, %v1980
    %v2099 = vshrl.u32 %v2098, 4
    %v2100 = vand.u32 %v2098, 15
    %v2101 = vsub.s32 0, %v2100
    %v2102 = vsel %vm2096, %v2101, %v2100
    %vm2103 = vcmp.lt.s32.totalorder %v1981, 0
    %v2104 = vsub.s32 0, %v1981
    %v2105 = vsel %vm2103, %v2104, %v1981
    %v2106 = vshrl.u32 %v2105, 4
    %v2107 = vand.u32 %v2105, 15
    %v2108 = vsub.s32 0, %v2107
    %v2109 = vsel %vm2103, %v2108, %v2107
    %vm2110 = vcmp.lt.s32.totalorder %v1982, 0
    %v2111 = vsub.s32 0, %v1982
    %v2112 = vsel %vm2110, %v2111, %v1982
    %v2113 = vshrl.u32 %v2112, 4
    %v2114 = vand.u32 %v2112, 15
    %v2115 = vsub.s32 0, %v2114
    %v2116 = vsel %vm2110, %v2115, %v2114
    %vm2117 = vcmp.lt.s32.totalorder %v1983, 0
    %v2118 = vsub.s32 0, %v1983
    %v2119 = vsel %vm2117, %v2118, %v1983
    %v2120 = vshrl.u32 %v2119, 4
    %v2121 = vand.u32 %v2119, 15
    %v2122 = vsub.s32 0, %v2121
    %v2123 = vsel %vm2117, %v2122, %v2121
    %vm2124 = vcmp.lt.s32.totalorder %v1984, 0
    %v2125 = vsub.s32 0, %v1984
    %v2126 = vsel %vm2124, %v2125, %v1984
    %v2127 = vshrl.u32 %v2126, 4
    %v2128 = vand.u32 %v2126, 15
    %v2129 = vsub.s32 0, %v2128
    %v2130 = vsel %vm2124, %v2129, %v2128
    %vm2131 = vcmp.lt.s32.totalorder %v1985, 0
    %v2132 = vsub.s32 0, %v1985
    %v2133 = vsel %vm2131, %v2132, %v1985
    %v2134 = vshrl.u32 %v2133, 4
    %v2135 = vand.u32 %v2133, 15
    %v2136 = vsub.s32 0, %v2135
    %v2137 = vsel %vm2131, %v2136, %v2135
    %vm2138 = vcmp.lt.s32.totalorder %v1986, 0
    %v2139 = vsub.s32 0, %v1986
    %v2140 = vsel %vm2138, %v2139, %v1986
    %v2141 = vshrl.u32 %v2140, 4
    %v2142 = vand.u32 %v2140, 15
    %v2143 = vsub.s32 0, %v2142
    %v2144 = vsel %vm2138, %v2143, %v2142
    %vm2145 = vcmp.lt.s32.totalorder %v1987, 0
    %v2146 = vsub.s32 0, %v1987
    %v2147 = vsel %vm2145, %v2146, %v1987
    %v2148 = vshrl.u32 %v2147, 4
    %v2149 = vand.u32 %v2147, 15
    %v2150 = vsub.s32 0, %v2149
    %v2151 = vsel %vm2145, %v2150, %v2149
    %vm2152 = vcmp.lt.s32.totalorder %v1988, 0
    %v2153 = vsub.s32 0, %v1988
    %v2154 = vsel %vm2152, %v2153, %v1988
    %v2155 = vshrl.u32 %v2154, 4
    %v2156 = vand.u32 %v2154, 15
    %v2157 = vsub.s32 0, %v2156
    %v2158 = vsel %vm2152, %v2157, %v2156
    %vm2159 = vcmp.lt.s32.totalorder %v1989, 0
    %v2160 = vsub.s32 0, %v1989
    %v2161 = vsel %vm2159, %v2160, %v1989
    %v2162 = vshrl.u32 %v2161, 4
    %v2163 = vand.u32 %v2161, 15
    %v2164 = vsub.s32 0, %v2163
    %v2165 = vsel %vm2159, %v2164, %v2163
    %vm2166 = vcmp.lt.s32.totalorder %v1990, 0
    %v2167 = vsub.s32 0, %v1990
    %v2168 = vsel %vm2166, %v2167, %v1990
    %v2169 = vshrl.u32 %v2168, 4
    %v2170 = vand.u32 %v2168, 15
    %v2171 = vsub.s32 0, %v2170
    %v2172 = vsel %vm2166, %v2171, %v2170
    %vm2173 = vcmp.lt.s32.totalorder %v1991, 0
    %v2174 = vsub.s32 0, %v1991
    %v2175 = vsel %vm2173, %v2174, %v1991
    %v2176 = vshrl.u32 %v2175, 4
    %v2177 = vand.u32 %v2175, 15
    %v2178 = vsub.s32 0, %v2177
    %v2179 = vsel %vm2173, %v2178, %v2177
    %vm2180 = vcmp.lt.s32.totalorder %v1992, 0
    %v2181 = vsub.s32 0, %v1992
    %v2182 = vsel %vm2180, %v2181, %v1992
    %v2183 = vshrl.u32 %v2182, 4
    %v2184 = vand.u32 %v2182, 15
    %v2185 = vsub.s32 0, %v2184
    %v2186 = vsel %vm2180, %v2185, %v2184
    %vm2187 = vcmp.lt.s32.totalorder %v1993, 0
    %v2188 = vsub.s32 0, %v1993
    %v2189 = vsel %vm2187, %v2188, %v1993
    %v2190 = vshrl.u32 %v2189, 4
    %v2191 = vand.u32 %v2189, 15
    %v2192 = vsub.s32 0, %v2191
    %v2193 = vsel %vm2187, %v2192, %v2191
    %vm2194 = vcmp.lt.s32.totalorder %v1994, 0
    %v2195 = vsub.s32 0, %v1994
    %v2196 = vsel %vm2194, %v2195, %v1994
    %v2197 = vshrl.u32 %v2196, 4
    %v2198 = vand.u32 %v2196, 15
    %v2199 = vsub.s32 0, %v2198
    %v2200 = vsel %vm2194, %v2199, %v2198
    %vm2201 = vcmp.lt.s32.totalorder %v1995, 0
    %v2202 = vsub.s32 0, %v1995
    %v2203 = vsel %vm2201, %v2202, %v1995
    %v2204 = vshrl.u32 %v2203, 4
    %v2205 = vand.u32 %v2203, 15
    %v2206 = vsub.s32 0, %v2205
    %v2207 = vsel %vm2201, %v2206, %v2205
    %vm2208 = vcmp.lt.s32.totalorder %v1996, 0
    %v2209 = vsub.s32 0, %v1996
    %v2210 = vsel %vm2208, %v2209, %v1996
    %v2211 = vshrl.u32 %v2210, 4
    %v2212 = vand.u32 %v2210, 15
    %v2213 = vsub.s32 0, %v2212
    %v2214 = vsel %vm2208, %v2213, %v2212
    %vm2215 = vcmp.lt.s32.totalorder %v1997, 0
    %v2216 = vsub.s32 0, %v1997
    %v2217 = vsel %vm2215, %v2216, %v1997
    %v2218 = vshrl.u32 %v2217, 4
    %v2219 = vand.u32 %v2217, 15
    %v2220 = vsub.s32 0, %v2219
    %v2221 = vsel %vm2215, %v2220, %v2219
    %vm2222 = vcmp.ne.s32.totalorder %v2004, 0
    %vm2223 = vcmp.ne.s32.totalorder %v2011, 0
    %vm2224 = vcmp.ne.s32.totalorder %v2018, 0
    %vm2225 = vcmp.ne.s32.totalorder %v2025, 0
    %vm2226 = vcmp.ne.s32.totalorder %v2032, 0
    %vm2227 = vcmp.ne.s32.totalorder %v2039, 0
    %vm2228 = vcmp.ne.s32.totalorder %v2046, 0
    %vm2229 = vcmp.ne.s32.totalorder %v2053, 0
    %vm2230 = vcmp.ne.s32.totalorder %v2060, 0
    %vm2231 = vcmp.ne.s32.totalorder %v2067, 0
    %vm2232 = vcmp.ne.s32.totalorder %v2074, 0
    %vm2233 = vcmp.ne.s32.totalorder %v2081, 0
    %vm2234 = vcmp.ne.s32.totalorder %v2088, 0
    %vm2235 = vcmp.ne.s32.totalorder %v2095, 0
    %vm2236 = vcmp.ne.s32.totalorder %v2102, 0
    %vm2237 = vcmp.ne.s32.totalorder %v2109, 0
    %vm2238 = vcmp.ne.s32.totalorder %v2116, 0
    %vm2239 = vcmp.ne.s32.totalorder %v2123, 0
    %vm2240 = vcmp.ne.s32.totalorder %v2130, 0
    %vm2241 = vcmp.ne.s32.totalorder %v2137, 0
    %vm2242 = vcmp.ne.s32.totalorder %v2144, 0
    %vm2243 = vcmp.ne.s32.totalorder %v2151, 0
    %vm2244 = vcmp.ne.s32.totalorder %v2158, 0
    %vm2245 = vcmp.ne.s32.totalorder %v2165, 0
    %vm2246 = vcmp.ne.s32.totalorder %v2172, 0
    %vm2247 = vcmp.ne.s32.totalorder %v2179, 0
    %vm2248 = vcmp.ne.s32.totalorder %v2186, 0
    %vm2249 = vcmp.ne.s32.totalorder %v2193, 0
    %vm2250 = vcmp.ne.s32.totalorder %v2200, 0
    %vm2251 = vcmp.ne.s32.totalorder %v2207, 0
    %vm2252 = vcmp.ne.s32.totalorder %v2214, 0
    %vm2253 = vcmp.ne.s32.totalorder %v2221, 0
    %vm2254 = vcmp.lt.s32.totalorder %v2004, 0
    %vm2255 = vcmp.lt.s32.totalorder %v2011, 0
    %vm2256 = vcmp.lt.s32.totalorder %v2018, 0
    %vm2257 = vcmp.lt.s32.totalorder %v2025, 0
    %vm2258 = vcmp.lt.s32.totalorder %v2032, 0
    %vm2259 = vcmp.lt.s32.totalorder %v2039, 0
    %vm2260 = vcmp.lt.s32.totalorder %v2046, 0
    %vm2261 = vcmp.lt.s32.totalorder %v2053, 0
    %vm2262 = vcmp.lt.s32.totalorder %v2060, 0
    %vm2263 = vcmp.lt.s32.totalorder %v2067, 0
    %vm2264 = vcmp.lt.s32.totalorder %v2074, 0
    %vm2265 = vcmp.lt.s32.totalorder %v2081, 0
    %vm2266 = vcmp.lt.s32.totalorder %v2088, 0
    %vm2267 = vcmp.lt.s32.totalorder %v2095, 0
    %vm2268 = vcmp.lt.s32.totalorder %v2102, 0
    %vm2269 = vcmp.lt.s32.totalorder %v2109, 0
    %vm2270 = vcmp.lt.s32.totalorder %v2116, 0
    %vm2271 = vcmp.lt.s32.totalorder %v2123, 0
    %vm2272 = vcmp.lt.s32.totalorder %v2130, 0
    %vm2273 = vcmp.lt.s32.totalorder %v2137, 0
    %vm2274 = vcmp.lt.s32.totalorder %v2144, 0
    %vm2275 = vcmp.lt.s32.totalorder %v2151, 0
    %vm2276 = vcmp.lt.s32.totalorder %v2158, 0
    %vm2277 = vcmp.lt.s32.totalorder %v2165, 0
    %vm2278 = vcmp.lt.s32.totalorder %v2172, 0
    %vm2279 = vcmp.lt.s32.totalorder %v2179, 0
    %vm2280 = vcmp.lt.s32.totalorder %v2186, 0
    %vm2281 = vcmp.lt.s32.totalorder %v2193, 0
    %vm2282 = vcmp.lt.s32.totalorder %v2200, 0
    %vm2283 = vcmp.lt.s32.totalorder %v2207, 0
    %vm2284 = vcmp.lt.s32.totalorder %v2214, 0
    %vm2285 = vcmp.lt.s32.totalorder %v2221, 0
    %vm2286 = vmand %vm2254, %vm2222
    %vm2287 = vmand %vm2255, %vm2223
    %vm2288 = vmand %vm2256, %vm2224
    %vm2289 = vmand %vm2257, %vm2225
    %vm2290 = vmand %vm2258, %vm2226
    %vm2291 = vmand %vm2259, %vm2227
    %vm2292 = vmand %vm2260, %vm2228
    %vm2293 = vmand %vm2261, %vm2229
    %vm2294 = vmand %vm2262, %vm2230
    %vm2295 = vmand %vm2263, %vm2231
    %vm2296 = vmand %vm2264, %vm2232
    %vm2297 = vmand %vm2265, %vm2233
    %vm2298 = vmand %vm2266, %vm2234
    %vm2299 = vmand %vm2267, %vm2235
    %vm2300 = vmand %vm2268, %vm2236
    %vm2301 = vmand %vm2269, %vm2237
    %vm2302 = vmand %vm2270, %vm2238
    %vm2303 = vmand %vm2271, %vm2239
    %vm2304 = vmand %vm2272, %vm2240
    %vm2305 = vmand %vm2273, %vm2241
    %vm2306 = vmand %vm2274, %vm2242
    %vm2307 = vmand %vm2275, %vm2243
    %vm2308 = vmand %vm2276, %vm2244
    %vm2309 = vmand %vm2277, %vm2245
    %vm2310 = vmand %vm2278, %vm2246
    %vm2311 = vmand %vm2279, %vm2247
    %vm2312 = vmand %vm2280, %vm2248
    %vm2313 = vmand %vm2281, %vm2249
    %vm2314 = vmand %vm2282, %vm2250
    %vm2315 = vmand %vm2283, %vm2251
    %vm2316 = vmand %vm2284, %vm2252
    %vm2317 = vmand %vm2285, %vm2253
    %v2318 = vadd.s32 %v2004, 16
    %v2319 = vadd.s32 %v2011, 16
    %v2320 = vadd.s32 %v2018, 16
    %v2321 = vadd.s32 %v2025, 16
    %v2322 = vadd.s32 %v2032, 16
    %v2323 = vadd.s32 %v2039, 16
    %v2324 = vadd.s32 %v2046, 16
    %v2325 = vadd.s32 %v2053, 16
    %v2326 = vadd.s32 %v2060, 16
    %v2327 = vadd.s32 %v2067, 16
    %v2328 = vadd.s32 %v2074, 16
    %v2329 = vadd.s32 %v2081, 16
    %v2330 = vadd.s32 %v2088, 16
    %v2331 = vadd.s32 %v2095, 16
    %v2332 = vadd.s32 %v2102, 16
    %v2333 = vadd.s32 %v2109, 16
    %v2334 = vadd.s32 %v2116, 16
    %v2335 = vadd.s32 %v2123, 16
    %v2336 = vadd.s32 %v2130, 16
    %v2337 = vadd.s32 %v2137, 16
    %v2338 = vadd.s32 %v2144, 16
    %v2339 = vadd.s32 %v2151, 16
    %v2340 = vadd.s32 %v2158, 16
    %v2341 = vadd.s32 %v2165, 16
    %v2342 = vadd.s32 %v2172, 16
    %v2343 = vadd.s32 %v2179, 16
    %v2344 = vadd.s32 %v2186, 16
    %v2345 = vadd.s32 %v2193, 16
    %v2346 = vadd.s32 %v2200, 16
    %v2347 = vadd.s32 %v2207, 16
    %v2348 = vadd.s32 %v2214, 16
    %v2349 = vadd.s32 %v2221, 16
    %v2350 = vsel %vm2286, %v2318, %v2004
    %v2351 = vsel %vm2287, %v2319, %v2011
    %v2352 = vsel %vm2288, %v2320, %v2018
    %v2353 = vsel %vm2289, %v2321, %v2025
    %v2354 = vsel %vm2290, %v2322, %v2032
    %v2355 = vsel %vm2291, %v2323, %v2039
    %v2356 = vsel %vm2292, %v2324, %v2046
    %v2357 = vsel %vm2293, %v2325, %v2053
    %v2358 = vsel %vm2294, %v2326, %v2060
    %v2359 = vsel %vm2295, %v2327, %v2067
    %v2360 = vsel %vm2296, %v2328, %v2074
    %v2361 = vsel %vm2297, %v2329, %v2081
    %v2362 = vsel %vm2298, %v2330, %v2088
    %v2363 = vsel %vm2299, %v2331, %v2095
    %v2364 = vsel %vm2300, %v2332, %v2102
    %v2365 = vsel %vm2301, %v2333, %v2109
    %v2366 = vsel %vm2302, %v2334, %v2116
    %v2367 = vsel %vm2303, %v2335, %v2123
    %v2368 = vsel %vm2304, %v2336, %v2130
    %v2369 = vsel %vm2305, %v2337, %v2137
    %v2370 = vsel %vm2306, %v2338, %v2144
    %v2371 = vsel %vm2307, %v2339, %v2151
    %v2372 = vsel %vm2308, %v2340, %v2158
    %v2373 = vsel %vm2309, %v2341, %v2165
    %v2374 = vsel %vm2310, %v2342, %v2172
    %v2375 = vsel %vm2311, %v2343, %v2179
    %v2376 = vsel %vm2312, %v2344, %v2186
    %v2377 = vsel %vm2313, %v2345, %v2193
    %v2378 = vsel %vm2314, %v2346, %v2200
    %v2379 = vsel %vm2315, %v2347, %v2207
    %v2380 = vsel %vm2316, %v2348, %v2214
    %v2381 = vsel %vm2317, %v2349, %v2221
    %v2382 = vlaneseq
    %v2383 = vand.u32 %v2382, 127
    %vm2384 = vcmp.eq.s32.totalorder %v2350, %v2383
    %vm2385 = vcmp.eq.s32.totalorder %v2351, %v2383
    %vm2386 = vcmp.eq.s32.totalorder %v2352, %v2383
    %vm2387 = vcmp.eq.s32.totalorder %v2353, %v2383
    %vm2388 = vcmp.eq.s32.totalorder %v2354, %v2383
    %vm2389 = vcmp.eq.s32.totalorder %v2355, %v2383
    %vm2390 = vcmp.eq.s32.totalorder %v2356, %v2383
    %vm2391 = vcmp.eq.s32.totalorder %v2357, %v2383
    %vm2392 = vcmp.eq.s32.totalorder %v2358, %v2383
    %vm2393 = vcmp.eq.s32.totalorder %v2359, %v2383
    %vm2394 = vcmp.eq.s32.totalorder %v2360, %v2383
    %vm2395 = vcmp.eq.s32.totalorder %v2361, %v2383
    %vm2396 = vcmp.eq.s32.totalorder %v2362, %v2383
    %vm2397 = vcmp.eq.s32.totalorder %v2363, %v2383
    %vm2398 = vcmp.eq.s32.totalorder %v2364, %v2383
    %vm2399 = vcmp.eq.s32.totalorder %v2365, %v2383
    %vm2400 = vcmp.eq.s32.totalorder %v2366, %v2383
    %vm2401 = vcmp.eq.s32.totalorder %v2367, %v2383
    %vm2402 = vcmp.eq.s32.totalorder %v2368, %v2383
    %vm2403 = vcmp.eq.s32.totalorder %v2369, %v2383
    %vm2404 = vcmp.eq.s32.totalorder %v2370, %v2383
    %vm2405 = vcmp.eq.s32.totalorder %v2371, %v2383
    %vm2406 = vcmp.eq.s32.totalorder %v2372, %v2383
    %vm2407 = vcmp.eq.s32.totalorder %v2373, %v2383
    %vm2408 = vcmp.eq.s32.totalorder %v2374, %v2383
    %vm2409 = vcmp.eq.s32.totalorder %v2375, %v2383
    %vm2410 = vcmp.eq.s32.totalorder %v2376, %v2383
    %vm2411 = vcmp.eq.s32.totalorder %v2377, %v2383
    %vm2412 = vcmp.eq.s32.totalorder %v2378, %v2383
    %vm2413 = vcmp.eq.s32.totalorder %v2379, %v2383
    %vm2414 = vcmp.eq.s32.totalorder %v2380, %v2383
    %vm2415 = vcmp.eq.s32.totalorder %v2381, %v2383
    %v2416 = vsel %vm2384, 1, 0
    %v2417 = vsel %vm2385, 1, 0
    %v2418 = vsel %vm2386, 1, 0
    %v2419 = vsel %vm2387, 1, 0
    %v2420 = vsel %vm2388, 1, 0
    %v2421 = vsel %vm2389, 1, 0
    %v2422 = vsel %vm2390, 1, 0
    %v2423 = vsel %vm2391, 1, 0
    %v2424 = vsel %vm2392, 1, 0
    %v2425 = vsel %vm2393, 1, 0
    %v2426 = vsel %vm2394, 1, 0
    %v2427 = vsel %vm2395, 1, 0
    %v2428 = vsel %vm2396, 1, 0
    %v2429 = vsel %vm2397, 1, 0
    %v2430 = vsel %vm2398, 1, 0
    %v2431 = vsel %vm2399, 1, 0
    %v2432 = vsel %vm2400, 1, 0
    %v2433 = vsel %vm2401, 1, 0
    %v2434 = vsel %vm2402, 1, 0
    %v2435 = vsel %vm2403, 1, 0
    %v2436 = vsel %vm2404, 1, 0
    %v2437 = vsel %vm2405, 1, 0
    %v2438 = vsel %vm2406, 1, 0
    %v2439 = vsel %vm2407, 1, 0
    %v2440 = vsel %vm2408, 1, 0
    %v2441 = vsel %vm2409, 1, 0
    %v2442 = vsel %vm2410, 1, 0
    %v2443 = vsel %vm2411, 1, 0
    %v2444 = vsel %vm2412, 1, 0
    %v2445 = vsel %vm2413, 1, 0
    %v2446 = vsel %vm2414, 1, 0
    %v2447 = vsel %vm2415, 1, 0
    %v2448 = vcvt.s32.f32 %v2416
    %v2449 = vcvt.s32.f32 %v2417
    %v2450 = vcvt.s32.f32 %v2418
    %v2451 = vcvt.s32.f32 %v2419
    %v2452 = vcvt.s32.f32 %v2420
    %v2453 = vcvt.s32.f32 %v2421
    %v2454 = vcvt.s32.f32 %v2422
    %v2455 = vcvt.s32.f32 %v2423
    %v2456 = vcvt.s32.f32 %v2424
    %v2457 = vcvt.s32.f32 %v2425
    %v2458 = vcvt.s32.f32 %v2426
    %v2459 = vcvt.s32.f32 %v2427
    %v2460 = vcvt.s32.f32 %v2428
    %v2461 = vcvt.s32.f32 %v2429
    %v2462 = vcvt.s32.f32 %v2430
    %v2463 = vcvt.s32.f32 %v2431
    %v2464 = vcvt.s32.f32 %v2432
    %v2465 = vcvt.s32.f32 %v2433
    %v2466 = vcvt.s32.f32 %v2434
    %v2467 = vcvt.s32.f32 %v2435
    %v2468 = vcvt.s32.f32 %v2436
    %v2469 = vcvt.s32.f32 %v2437
    %v2470 = vcvt.s32.f32 %v2438
    %v2471 = vcvt.s32.f32 %v2439
    %v2472 = vcvt.s32.f32 %v2440
    %v2473 = vcvt.s32.f32 %v2441
    %v2474 = vcvt.s32.f32 %v2442
    %v2475 = vcvt.s32.f32 %v2443
    %v2476 = vcvt.s32.f32 %v2444
    %v2477 = vcvt.s32.f32 %v2445
    %v2478 = vcvt.s32.f32 %v2446
    %v2479 = vcvt.s32.f32 %v2447
    %v2480 = vadd.s32 %v2383, 128
    %vm2481 = vcmp.lt.s32.totalorder %v2383, 0
    %v2482 = vsub.s32 0, %v2383
    %v2483 = vsel %vm2481, %v2482, %v2383
    %v2484 = vshrl.u32 %v2483, 4
    %v2485 = vand.u32 %v2483, 15
    %v2486 = vsub.s32 0, %v2485
    %v2487 = vsel %vm2481, %v2486, %v2485
    %vm2488 = vcmp.lt.s32.totalorder %v2480, 0
    %v2489 = vsub.s32 0, %v2480
    %v2490 = vsel %vm2488, %v2489, %v2480
    %v2491 = vshrl.u32 %v2490, 4
    %v2492 = vand.u32 %v2490, 15
    %v2493 = vsub.s32 0, %v2492
    %v2494 = vsel %vm2488, %v2493, %v2492
    %vm2495 = vcmp.ne.s32.totalorder %v2487, 0
    %vm2496 = vcmp.ne.s32.totalorder %v2494, 0
    %vm2497 = vcmp.lt.s32.totalorder %v2487, 0
    %vm2498 = vcmp.lt.s32.totalorder %v2494, 0
    %vm2499 = vmand %vm2497, %vm2495
    %vm2500 = vmand %vm2498, %vm2496
    %v2501 = vadd.s32 %v2487, 16
    %v2502 = vadd.s32 %v2494, 16
    %v2503 = vsel %vm2499, %v2501, %v2487
    %v2504 = vsel %vm2500, %v2502, %v2494
    %vm2505 = vcmp.eq.s32.totalorder %v2503, %v45
    %vm2506 = vcmp.eq.s32.totalorder %v2504, %v45
    %vm2507 = vcmp.eq.s32.totalorder %v2503, %v1967
    %vm2508 = vcmp.eq.s32.totalorder %v2504, %v1967
    %v2509 = vsel %vm2505, 1, 0
    %v2510 = vsel %vm2506, 1, 0
    %v2511 = vsel %vm2507, 1, 0
    %v2512 = vsel %vm2508, 1, 0
    %v2513 = vcvt.s32.f32 %v2509
    %v2514 = vcvt.s32.f32 %v2510
    %v2515 = vcvt.s32.f32 %v2511
    %v2516 = vcvt.s32.f32 %v2512
    %v2517 = vld [vmem:[%s5 + $0x1] ss:$0 sm:$0xff]
    %v2518 = vld [vmem:[%s5 + $0x2] ss:$0 sm:$0xff]
    %v2519 = vmul.f32 %v1961, %v48
    %v2520 = vmul.f32 %v1963, %v48
    %v2521 = vrot.slane %v2519, 4
    %v2522 = vadd.f32 %v2519, %v2521
    %v2523 = vrot.slane %v2522, 2
    %v2524 = vadd.f32 %v2522, %v2523
    %v2525 = vrot.slane %v2524, 1
    %v2526 = vadd.f32 %v2524, %v2525
    %v2527 = vrot.slane %v2520, 4
    %v2528 = vadd.f32 %v2520, %v2527
    %v2529 = vrot.slane %v2528, 2
    %v2530 = vadd.f32 %v2528, %v2529
    %v2531 = vrot.slane %v2530, 1
    %v2532 = vadd.f32 %v2530, %v2531
    %v2533 = vmul.f32 %v2519, %v1961
    %v2534 = vmul.f32 %v2520, %v1963
    %v2535 = vrot.slane %v2533, 4
    %v2536 = vadd.f32 %v2533, %v2535
    %v2537 = vrot.slane %v2536, 2
    %v2538 = vadd.f32 %v2536, %v2537
    %v2539 = vrot.slane %v2538, 1
    %v2540 = vadd.f32 %v2538, %v2539
    %v2541 = vrot.slane %v2534, 4
    %v2542 = vadd.f32 %v2534, %v2541
    %v2543 = vrot.slane %v2542, 2
    %v2544 = vadd.f32 %v2542, %v2543
    %v2545 = vrot.slane %v2544, 1
    %v2546 = vadd.f32 %v2544, %v2545
    %vm2547 = vcmask 1040384
    %v2548 = vsel %vm2547, %v2526, %v2540
    %v2549 = vsel %vm2547, %v2532, %v2546
    %2550 = vmatprep.subr.mxu0 0.0
    %2551 = vmatpush1.msra.mxu0 %v2463
    %2552 = vmatprep.subr.mxu0 0.0
    %2553 = vmatpush1.msra.mxu0 %v2462
    %2554 = vmatprep.subr.mxu0 0.0
    %2555 = vmatpush1.msra.mxu0 %v2461
    %2556 = vmatprep.subr.mxu0 0.0
    %2557 = vmatpush1.msra.mxu0 %v2460
    %2558 = vmatprep.subr.mxu0 0.0
    %2559 = vmatpush1.msra.mxu0 %v2459
    %2560 = vmatprep.subr.mxu0 0.0
    %2561 = vmatpush1.msra.mxu0 %v2458
    %2562 = vmatprep.subr.mxu0 0.0
    %2563 = vmatpush1.msra.mxu0 %v2457
    %2564 = vmatprep.subr.mxu0 0.0
    %2565 = vmatpush1.msra.mxu0 %v2456
    %2566 = vmatprep.subr.mxu0 0.0
    %2567 = vmatpush1.msra.mxu0 %v2455
    %2568 = vmatprep.subr.mxu0 0.0
    %2569 = vmatpush1.msra.mxu0 %v2454
    %2570 = vmatprep.subr.mxu0 0.0
    %2571 = vmatpush1.msra.mxu0 %v2453
    %2572 = vmatprep.subr.mxu0 0.0
    %2573 = vmatpush1.msra.mxu0 %v2452
    %2574 = vmatprep.subr.mxu0 0.0
    %2575 = vmatpush1.msra.mxu0 %v2451
    %2576 = vmatprep.subr.mxu0 0.0
    %2577 = vmatpush1.msra.mxu0 %v2450
    %2578 = vmatprep.subr.mxu0 0.0
    %2579 = vmatpush1.msra.mxu0 %v2449
    %2580 = vmatprep.subr.mxu0 0.0
    %2581 = vmatpush1.msra.mxu0 %v2448
    %2582 = vmatprep.subr.mxu0 0.0
    %2583 = vmatpush2.msra.mxu0 %v2479
    %2584 = vmatprep.subr.mxu0 0.0
    %2585 = vmatpush2.msra.mxu0 %v2478
    %2586 = vmatprep.subr.mxu0 0.0
    %2587 = vmatpush2.msra.mxu0 %v2477
    %2588 = vmatprep.subr.mxu0 0.0
    %2589 = vmatpush2.msra.mxu0 %v2476
    %2590 = vmatprep.subr.mxu0 0.0
    %2591 = vmatpush2.msra.mxu0 %v2475
    %2592 = vmatprep.subr.mxu0 0.0
    %2593 = vmatpush2.msra.mxu0 %v2474
    %2594 = vmatprep.subr.mxu0 0.0
    %2595 = vmatpush2.msra.mxu0 %v2473
    %2596 = vmatprep.subr.mxu0 0.0
    %2597 = vmatpush2.msra.mxu0 %v2472
    %2598 = vmatprep.subr.mxu0 0.0
    %2599 = vmatpush2.msra.mxu0 %v2471
    %2600 = vmatprep.subr.mxu0 0.0
    %2601 = vmatpush2.msra.mxu0 %v2470
    %2602 = vmatprep.subr.mxu0 0.0
    %2603 = vmatpush2.msra.mxu0 %v2469
    %2604 = vmatprep.subr.mxu0 0.0
    %2605 = vmatpush2.msra.mxu0 %v2468
    %2606 = vmatprep.subr.mxu0 0.0
    %2607 = vmatpush2.msra.mxu0 %v2467
    %2608 = vmatprep.subr.mxu0 0.0
    %2609 = vmatpush2.msra.mxu0 %v2466
    %2610 = vmatprep.subr.mxu0 0.0
    %2611 = vmatpush2.msra.mxu0 %v2465
    %2612 = vmatprep.subr.mxu0 0.0
    %2613 = vmatpush2.msra.mxu0 %v2464
    %2614 = vmatprep.mubr.f32.mxu0 %v2549
    %2615 = vmatmul.mubr.f32.gmra.mxu0 %v2548
    %v2616 = vpop.f32.mrf.mxu0
    %v2617 = vadd.f32 0.0, %v2616
    %v2618 = vpop.f32.mrf.mxu0
    %2619 = vdwg.mxu0
    %v2620 = vmul.f32 %v2617, 0.010416667
    %v2621 = vmul.f32 %v2620, %v2620
    %v2623 = vrot.slane %v2621, 7
    %v2625 = vsub.f32 %v2620, %v2623
    %v2626 = vadd.f32 %v2625, 1e-05
    %v2627 = vrsqrt.pop %v2626
    %v2628 = vmul.f32 %v2627, %v2517
    %v2630 = vrot.slane %v2628, 1
    %v2632 = vmul.f32 %v2620, %v2630
    %v2633 = vsub.f32 %v2518, %v2632
    %v2635 = vrot.slane %v2633, 7
    %v2637 = vsel %vm2547, %v2630, %v2635
    %vm2638 = vcmask 130048
    %v2640 = vsel %vm2638, %v2637, 0
    %2642 = vmatprep.subr.mxu0 0.0
    %2643 = vmatpush1.msra.mxu0 0.0
    %2644 = vmatprep.subr.mxu0 0.0
    %2645 = vmatpush1.msra.mxu0 0.0
    %2646 = vmatprep.subr.mxu0 0.0
    %2647 = vmatpush1.msra.mxu0 0.0
    %2648 = vmatprep.subr.mxu0 0.0
    %2649 = vmatpush1.msra.mxu0 0.0
    %2650 = vmatprep.subr.mxu0 0.0
    %2651 = vmatpush1.msra.mxu0 0.0
    %2652 = vmatprep.subr.mxu0 0.0
    %2653 = vmatpush1.msra.mxu0 0.0
    %2654 = vmatprep.subr.mxu0 0.0
    %2655 = vmatpush1.msra.mxu0 0.0
    %2656 = vmatprep.subr.mxu0 0.0
    %2657 = vmatpush1.msra.mxu0 0.0
    %2658 = vmatprep.subr.mxu0 0.0
    %2659 = vmatpush1.msra.mxu0 0.0
    %2660 = vmatprep.subr.mxu0 0.0
    %2661 = vmatpush1.msra.mxu0 0.0
    %2662 = vmatprep.subr.mxu0 0.0
    %2663 = vmatpush1.msra.mxu0 0.0
    %2664 = vmatprep.subr.mxu0 0.0
    %2665 = vmatpush1.msra.mxu0 0.0
    %2666 = vmatprep.subr.mxu0 0.0
    %2667 = vmatpush1.msra.mxu0 0.0
    %2668 = vmatprep.subr.mxu0 0.0
    %2669 = vmatpush1.msra.mxu0 0.0
    %2670 = vmatprep.subr.mxu0 %v2516
    %2671 = vmatpush1.msra.mxu0 %v2515
    %2672 = vmatprep.subr.mxu0 %v2514
    %2673 = vmatpush1.msra.mxu0 %v2513
    %2674 = vmatprep.subr.mxu0 0.0
    %2675 = vmatpush2.msra.mxu0 0.0
    %2676 = vmatprep.subr.mxu0 0.0
    %2677 = vmatpush2.msra.mxu0 0.0
    %2678 = vmatprep.subr.mxu0 0.0
    %2679 = vmatpush2.msra.mxu0 0.0
    %2680 = vmatprep.subr.mxu0 0.0
    %2681 = vmatpush2.msra.mxu0 0.0
    %2682 = vmatprep.subr.mxu0 0.0
    %2683 = vmatpush2.msra.mxu0 0.0
    %2684 = vmatprep.subr.mxu0 0.0
    %2685 = vmatpush2.msra.mxu0 0.0
    %2686 = vmatprep.subr.mxu0 0.0
    %2687 = vmatpush2.msra.mxu0 0.0
    %2688 = vmatprep.subr.mxu0 0.0
    %2689 = vmatpush2.msra.mxu0 0.0
    %2690 = vmatprep.subr.mxu0 0.0
    %2691 = vmatpush2.msra.mxu0 0.0
    %2692 = vmatprep.subr.mxu0 0.0
    %2693 = vmatpush2.msra.mxu0 0.0
    %2694 = vmatprep.subr.mxu0 0.0
    %2695 = vmatpush2.msra.mxu0 0.0
    %2696 = vmatprep.subr.mxu0 0.0
    %2697 = vmatpush2.msra.mxu0 0.0
    %2698 = vmatprep.subr.mxu0 0.0
    %2699 = vmatpush2.msra.mxu0 0.0
    %2700 = vmatprep.subr.mxu0 0.0
    %2701 = vmatpush2.msra.mxu0 0.0
    %2702 = vmatprep.subr.mxu0 0.0
    %2703 = vmatpush2.msra.mxu0 0.0
    %2704 = vmatprep.subr.mxu0 0.0
    %2705 = vmatpush2.msra.mxu0 0.0
    %2706 = vmatprep.mubr.f32.mxu0 0.0
    %2707 = vmatmul.mubr.f32.gmra.mxu0 %v2640
    %v2708 = vpop.f32.mrf.mxu0
    %v2709 = vadd.f32 0.0, %v2708
    %v2710 = vpop.f32.mrf.mxu0
    %v2711 = vadd.f32 0.0, %v2710
    %2712 = vdwg.mxu0
    %v2713 = vlaneseq
    %v2714 = vshrl.u32 %v2713, 7
    %v2715 = vsub.s32 0, %v2714
    %v2716 = vrot.slane %v2709, %v2715
    %v2717 = vlaneseq
    %v2718 = vshrl.u32 %v2717, 7
    %v2719 = vsub.s32 0, %v2718
    %v2720 = vrot.slane %v2711, %v2719
    %v2721 = vmul.f32 %v1961, %v2716
    %v2722 = vmul.f32 %v1963, %v2720
    %v2723 = vlaneseq
    %v2724 = vshrl.u32 %v2723, 7
    %v2725 = vsub.s32 1, %v2724
    %v2726 = vrot.slane %v2709, %v2725
    %v2727 = vlaneseq
    %v2728 = vshrl.u32 %v2727, 7
    %v2729 = vsub.s32 1, %v2728
    %v2730 = vrot.slane %v2711, %v2729
    %v2731 = vadd.f32 %v2721, %v2726
    %v2732 = vadd.f32 %v2722, %v2730
    %v2733 = vmax.f32 %v2731, 0.0
    %v2734 = vmax.f32 %v2732, 0.0
    %v2735 = vpack.c.bf16 %v2733, %v2733
    %v2736 = vpack.c.bf16 %v2734, %v2734
    %v2737 = vld [vmem:[%s3] sm:$0xf]
    %v2738 = vld [vmem:[%s3 + $0x4] sm:$0xf]
    %v2739 = vld [vmem:[%s3 + $0x8] sm:$0xf]
    %v2740 = vld [vmem:[%s3 + $0xc] sm:$0xf]
    %v2741 = vld [vmem:[%s3 + $0x10] sm:$0xf]
    %v2742 = vld [vmem:[%s3 + $0x14] sm:$0xf]
    %v2743 = vld [vmem:[%s3 + $0x18] sm:$0xf]
    %v2744 = vld [vmem:[%s3 + $0x1c] sm:$0xf]
    %v2745 = vld [vmem:[%s3 + $0x20] sm:$0xf]
    %v2746 = vld [vmem:[%s3 + $0x24] sm:$0xf]
    %v2747 = vld [vmem:[%s3 + $0x28] sm:$0xf]
    %v2748 = vld [vmem:[%s3 + $0x2c] sm:$0xf]
    %v2749 = vld [vmem:[%s3 + $0x30] sm:$0xf]
    %v2750 = vld [vmem:[%s3 + $0x34] sm:$0xf]
    %v2751 = vld [vmem:[%s3 + $0x38] sm:$0xf]
    %v2752 = vld [vmem:[%s3 + $0x3c] sm:$0xf]
    %v2753 = vld [vmem:[%s3 + $0x40] sm:$0xf]
    %v2754 = vld [vmem:[%s3 + $0x44] sm:$0xf]
    %v2755 = vld [vmem:[%s3 + $0x48] sm:$0xf]
    %v2756 = vld [vmem:[%s3 + $0x4c] sm:$0xf]
    %v2757 = vld [vmem:[%s3 + $0x50] sm:$0xf]
    %v2758 = vld [vmem:[%s3 + $0x54] sm:$0xf]
    %v2759 = vld [vmem:[%s3 + $0x58] sm:$0xf]
    %v2760 = vld [vmem:[%s3 + $0x5c] sm:$0xf]
    %v2761 = vld [vmem:[%s3 + $0x60] sm:$0xf]
    %v2762 = vld [vmem:[%s3 + $0x64] sm:$0xf]
    %v2763 = vld [vmem:[%s3 + $0x68] sm:$0xf]
    %v2764 = vld [vmem:[%s3 + $0x6c] sm:$0xf]
    %v2765 = vld [vmem:[%s3 + $0x70] sm:$0xf]
    %v2766 = vld [vmem:[%s3 + $0x74] sm:$0xf]
    %v2767 = vld [vmem:[%s3 + $0x78] sm:$0xf]
    %v2768 = vld [vmem:[%s3 + $0x7c] sm:$0xf]
    %v2801 = vunpack.c.l.b16 %v2737
    %v2802 = vunpack.c.l.b16 %v2738
    %v2803 = vunpack.c.l.b16 %v2739
    %v2804 = vunpack.c.l.b16 %v2740
    %v2805 = vunpack.c.l.b16 %v2741
    %v2806 = vunpack.c.l.b16 %v2742
    %v2807 = vunpack.c.l.b16 %v2743
    %v2808 = vunpack.c.l.b16 %v2744
    %v2809 = vunpack.c.l.b16 %v2745
    %v2810 = vunpack.c.l.b16 %v2746
    %v2811 = vunpack.c.l.b16 %v2747
    %v2812 = vunpack.c.l.b16 %v2748
    %v2813 = vunpack.c.l.b16 %v2749
    %v2814 = vunpack.c.l.b16 %v2750
    %v2815 = vunpack.c.l.b16 %v2751
    %v2816 = vunpack.c.l.b16 %v2752
    %v2817 = vunpack.c.l.b16 %v2753
    %v2818 = vunpack.c.l.b16 %v2754
    %v2819 = vunpack.c.l.b16 %v2755
    %v2820 = vunpack.c.l.b16 %v2756
    %v2821 = vunpack.c.l.b16 %v2757
    %v2822 = vunpack.c.l.b16 %v2758
    %v2823 = vunpack.c.l.b16 %v2759
    %v2824 = vunpack.c.l.b16 %v2760
    %v2825 = vunpack.c.l.b16 %v2761
    %v2826 = vunpack.c.l.b16 %v2762
    %v2827 = vunpack.c.l.b16 %v2763
    %v2828 = vunpack.c.l.b16 %v2764
    %v2829 = vunpack.c.l.b16 %v2765
    %v2830 = vunpack.c.l.b16 %v2766
    %v2831 = vunpack.c.l.b16 %v2767
    %v2832 = vunpack.c.l.b16 %v2768
    %v2833 = vpack.c.b16 %v2802, %v2801
    %v2834 = vpack.c.b16 %v2804, %v2803
    %v2835 = vpack.c.b16 %v2806, %v2805
    %v2836 = vpack.c.b16 %v2808, %v2807
    %v2837 = vpack.c.b16 %v2810, %v2809
    %v2838 = vpack.c.b16 %v2812, %v2811
    %v2839 = vpack.c.b16 %v2814, %v2813
    %v2840 = vpack.c.b16 %v2816, %v2815
    %v2841 = vpack.c.b16 %v2818, %v2817
    %v2842 = vpack.c.b16 %v2820, %v2819
    %v2843 = vpack.c.b16 %v2822, %v2821
    %v2844 = vpack.c.b16 %v2824, %v2823
    %v2845 = vpack.c.b16 %v2826, %v2825
    %v2846 = vpack.c.b16 %v2828, %v2827
    %v2847 = vpack.c.b16 %v2830, %v2829
    %v2848 = vpack.c.b16 %v2832, %v2831
    %2865 = vmatprep.subr.bf16.mxu0 0
    %2866 = vmatpush1.bf16.msra.mxu0 %v2840
    %2867 = vmatprep.subr.bf16.mxu0 0
    %2868 = vmatpush1.bf16.msra.mxu0 %v2839
    %2869 = vmatprep.subr.bf16.mxu0 0
    %2870 = vmatpush1.bf16.msra.mxu0 %v2838
    %2871 = vmatprep.subr.bf16.mxu0 0
    %2872 = vmatpush1.bf16.msra.mxu0 %v2837
    %2873 = vmatprep.subr.bf16.mxu0 0
    %2874 = vmatpush1.bf16.msra.mxu0 %v2836
    %2875 = vmatprep.subr.bf16.mxu0 0
    %2876 = vmatpush1.bf16.msra.mxu0 %v2835
    %2877 = vmatprep.subr.bf16.mxu0 0
    %2878 = vmatpush1.bf16.msra.mxu0 %v2834
    %2879 = vmatprep.subr.bf16.mxu0 0
    %2880 = vmatpush1.bf16.msra.mxu0 %v2833
    %2881 = vmatprep.subr.bf16.mxu0 0
    %2882 = vmatpush2.bf16.msra.mxu0 %v2848
    %2883 = vmatprep.subr.bf16.mxu0 0
    %2884 = vmatpush2.bf16.msra.mxu0 %v2847
    %2885 = vmatprep.subr.bf16.mxu0 0
    %2886 = vmatpush2.bf16.msra.mxu0 %v2846
    %2887 = vmatprep.subr.bf16.mxu0 0
    %2888 = vmatpush2.bf16.msra.mxu0 %v2845
    %2889 = vmatprep.subr.bf16.mxu0 0
    %2890 = vmatpush2.bf16.msra.mxu0 %v2844
    %2891 = vmatprep.subr.bf16.mxu0 0
    %2892 = vmatpush2.bf16.msra.mxu0 %v2843
    %2893 = vmatprep.subr.bf16.mxu0 0
    %2894 = vmatpush2.bf16.msra.mxu0 %v2842
    %2895 = vmatprep.subr.bf16.mxu0 0
    %2896 = vmatpush2.bf16.msra.mxu0 %v2841
    %2897 = vmatprep.mubr.bf16.mxu0 %v2736
    %2898 = vmatmul.mubr.bf16.gmra.mxu0 %v2735
    %v2899 = vpop.f32.mrf.mxu0
    %v2900 = vadd.f32 0.0, %v2899
    %v2901 = vpop.f32.mrf.mxu0
    %v2902 = vpop.f32.mrf.mxu0
    %v2903 = vpop.f32.mrf.mxu0
    %2904 = vdwg.mxu0
    %vm2905 = vcmp.lt.s32.totalorder %v45, 0
    %v2906 = vsub.s32 0, %v45
    %v2907 = vsel %vm2905, %v2906, %v45
    %v2908 = vshrl.u32 %v2907, 5
    %v2909 = vand.u32 %v2907, 31
    %v2910 = vsub.s32 0, %v2909
    %v2911 = vsel %vm2905, %v2910, %v2909
    %vm2912 = vcmp.lt.s32.totalorder %v1967, 0
    %v2913 = vsub.s32 0, %v1967
    %v2914 = vsel %vm2912, %v2913, %v1967
    %v2915 = vshrl.u32 %v2914, 5
    %v2916 = vand.u32 %v2914, 31
    %v2917 = vsub.s32 0, %v2916
    %v2918 = vsel %vm2912, %v2917, %v2916
    %vm2919 = vcmp.lt.s32.totalorder %v1968, 0
    %v2920 = vsub.s32 0, %v1968
    %v2921 = vsel %vm2919, %v2920, %v1968
    %v2922 = vshrl.u32 %v2921, 5
    %v2923 = vand.u32 %v2921, 31
    %v2924 = vsub.s32 0, %v2923
    %v2925 = vsel %vm2919, %v2924, %v2923
    %vm2926 = vcmp.lt.s32.totalorder %v1969, 0
    %v2927 = vsub.s32 0, %v1969
    %v2928 = vsel %vm2926, %v2927, %v1969
    %v2929 = vshrl.u32 %v2928, 5
    %v2930 = vand.u32 %v2928, 31
    %v2931 = vsub.s32 0, %v2930
    %v2932 = vsel %vm2926, %v2931, %v2930
    %vm2933 = vcmp.lt.s32.totalorder %v1970, 0
    %v2934 = vsub.s32 0, %v1970
    %v2935 = vsel %vm2933, %v2934, %v1970
    %v2936 = vshrl.u32 %v2935, 5
    %v2937 = vand.u32 %v2935, 31
    %v2938 = vsub.s32 0, %v2937
    %v2939 = vsel %vm2933, %v2938, %v2937
    %vm2940 = vcmp.lt.s32.totalorder %v1971, 0
    %v2941 = vsub.s32 0, %v1971
    %v2942 = vsel %vm2940, %v2941, %v1971
    %v2943 = vshrl.u32 %v2942, 5
    %v2944 = vand.u32 %v2942, 31
    %v2945 = vsub.s32 0, %v2944
    %v2946 = vsel %vm2940, %v2945, %v2944
    %vm2947 = vcmp.lt.s32.totalorder %v1972, 0
    %v2948 = vsub.s32 0, %v1972
    %v2949 = vsel %vm2947, %v2948, %v1972
    %v2950 = vshrl.u32 %v2949, 5
    %v2951 = vand.u32 %v2949, 31
    %v2952 = vsub.s32 0, %v2951
    %v2953 = vsel %vm2947, %v2952, %v2951
    %vm2954 = vcmp.lt.s32.totalorder %v1973, 0
    %v2955 = vsub.s32 0, %v1973
    %v2956 = vsel %vm2954, %v2955, %v1973
    %v2957 = vshrl.u32 %v2956, 5
    %v2958 = vand.u32 %v2956, 31
    %v2959 = vsub.s32 0, %v2958
    %v2960 = vsel %vm2954, %v2959, %v2958
    %vm2961 = vcmp.lt.s32.totalorder %v1974, 0
    %v2962 = vsub.s32 0, %v1974
    %v2963 = vsel %vm2961, %v2962, %v1974
    %v2964 = vshrl.u32 %v2963, 5
    %v2965 = vand.u32 %v2963, 31
    %v2966 = vsub.s32 0, %v2965
    %v2967 = vsel %vm2961, %v2966, %v2965
    %vm2968 = vcmp.lt.s32.totalorder %v1975, 0
    %v2969 = vsub.s32 0, %v1975
    %v2970 = vsel %vm2968, %v2969, %v1975
    %v2971 = vshrl.u32 %v2970, 5
    %v2972 = vand.u32 %v2970, 31
    %v2973 = vsub.s32 0, %v2972
    %v2974 = vsel %vm2968, %v2973, %v2972
    %vm2975 = vcmp.lt.s32.totalorder %v1976, 0
    %v2976 = vsub.s32 0, %v1976
    %v2977 = vsel %vm2975, %v2976, %v1976
    %v2978 = vshrl.u32 %v2977, 5
    %v2979 = vand.u32 %v2977, 31
    %v2980 = vsub.s32 0, %v2979
    %v2981 = vsel %vm2975, %v2980, %v2979
    %vm2982 = vcmp.lt.s32.totalorder %v1977, 0
    %v2983 = vsub.s32 0, %v1977
    %v2984 = vsel %vm2982, %v2983, %v1977
    %v2985 = vshrl.u32 %v2984, 5
    %v2986 = vand.u32 %v2984, 31
    %v2987 = vsub.s32 0, %v2986
    %v2988 = vsel %vm2982, %v2987, %v2986
    %vm2989 = vcmp.lt.s32.totalorder %v1978, 0
    %v2990 = vsub.s32 0, %v1978
    %v2991 = vsel %vm2989, %v2990, %v1978
    %v2992 = vshrl.u32 %v2991, 5
    %v2993 = vand.u32 %v2991, 31
    %v2994 = vsub.s32 0, %v2993
    %v2995 = vsel %vm2989, %v2994, %v2993
    %vm2996 = vcmp.lt.s32.totalorder %v1979, 0
    %v2997 = vsub.s32 0, %v1979
    %v2998 = vsel %vm2996, %v2997, %v1979
    %v2999 = vshrl.u32 %v2998, 5
    %v3000 = vand.u32 %v2998, 31
    %v3001 = vsub.s32 0, %v3000
    %v3002 = vsel %vm2996, %v3001, %v3000
    %vm3003 = vcmp.lt.s32.totalorder %v1980, 0
    %v3004 = vsub.s32 0, %v1980
    %v3005 = vsel %vm3003, %v3004, %v1980
    %v3006 = vshrl.u32 %v3005, 5
    %v3007 = vand.u32 %v3005, 31
    %v3008 = vsub.s32 0, %v3007
    %v3009 = vsel %vm3003, %v3008, %v3007
    %vm3010 = vcmp.lt.s32.totalorder %v1981, 0
    %v3011 = vsub.s32 0, %v1981
    %v3012 = vsel %vm3010, %v3011, %v1981
    %v3013 = vshrl.u32 %v3012, 5
    %v3014 = vand.u32 %v3012, 31
    %v3015 = vsub.s32 0, %v3014
    %v3016 = vsel %vm3010, %v3015, %v3014
    %vm3017 = vcmp.ne.s32.totalorder %v2911, 0
    %vm3018 = vcmp.ne.s32.totalorder %v2918, 0
    %vm3019 = vcmp.ne.s32.totalorder %v2925, 0
    %vm3020 = vcmp.ne.s32.totalorder %v2932, 0
    %vm3021 = vcmp.ne.s32.totalorder %v2939, 0
    %vm3022 = vcmp.ne.s32.totalorder %v2946, 0
    %vm3023 = vcmp.ne.s32.totalorder %v2953, 0
    %vm3024 = vcmp.ne.s32.totalorder %v2960, 0
    %vm3025 = vcmp.ne.s32.totalorder %v2967, 0
    %vm3026 = vcmp.ne.s32.totalorder %v2974, 0
    %vm3027 = vcmp.ne.s32.totalorder %v2981, 0
    %vm3028 = vcmp.ne.s32.totalorder %v2988, 0
    %vm3029 = vcmp.ne.s32.totalorder %v2995, 0
    %vm3030 = vcmp.ne.s32.totalorder %v3002, 0
    %vm3031 = vcmp.ne.s32.totalorder %v3009, 0
    %vm3032 = vcmp.ne.s32.totalorder %v3016, 0
    %vm3033 = vcmp.lt.s32.totalorder %v2911, 0
    %vm3034 = vcmp.lt.s32.totalorder %v2918, 0
    %vm3035 = vcmp.lt.s32.totalorder %v2925, 0
    %vm3036 = vcmp.lt.s32.totalorder %v2932, 0
    %vm3037 = vcmp.lt.s32.totalorder %v2939, 0
    %vm3038 = vcmp.lt.s32.totalorder %v2946, 0
    %vm3039 = vcmp.lt.s32.totalorder %v2953, 0
    %vm3040 = vcmp.lt.s32.totalorder %v2960, 0
    %vm3041 = vcmp.lt.s32.totalorder %v2967, 0
    %vm3042 = vcmp.lt.s32.totalorder %v2974, 0
    %vm3043 = vcmp.lt.s32.totalorder %v2981, 0
    %vm3044 = vcmp.lt.s32.totalorder %v2988, 0
    %vm3045 = vcmp.lt.s32.totalorder %v2995, 0
    %vm3046 = vcmp.lt.s32.totalorder %v3002, 0
    %vm3047 = vcmp.lt.s32.totalorder %v3009, 0
    %vm3048 = vcmp.lt.s32.totalorder %v3016, 0
    %vm3049 = vmand %vm3033, %vm3017
    %vm3050 = vmand %vm3034, %vm3018
    %vm3051 = vmand %vm3035, %vm3019
    %vm3052 = vmand %vm3036, %vm3020
    %vm3053 = vmand %vm3037, %vm3021
    %vm3054 = vmand %vm3038, %vm3022
    %vm3055 = vmand %vm3039, %vm3023
    %vm3056 = vmand %vm3040, %vm3024
    %vm3057 = vmand %vm3041, %vm3025
    %vm3058 = vmand %vm3042, %vm3026
    %vm3059 = vmand %vm3043, %vm3027
    %vm3060 = vmand %vm3044, %vm3028
    %vm3061 = vmand %vm3045, %vm3029
    %vm3062 = vmand %vm3046, %vm3030
    %vm3063 = vmand %vm3047, %vm3031
    %vm3064 = vmand %vm3048, %vm3032
    %v3065 = vadd.s32 %v2911, 32
    %v3066 = vadd.s32 %v2918, 32
    %v3067 = vadd.s32 %v2925, 32
    %v3068 = vadd.s32 %v2932, 32
    %v3069 = vadd.s32 %v2939, 32
    %v3070 = vadd.s32 %v2946, 32
    %v3071 = vadd.s32 %v2953, 32
    %v3072 = vadd.s32 %v2960, 32
    %v3073 = vadd.s32 %v2967, 32
    %v3074 = vadd.s32 %v2974, 32
    %v3075 = vadd.s32 %v2981, 32
    %v3076 = vadd.s32 %v2988, 32
    %v3077 = vadd.s32 %v2995, 32
    %v3078 = vadd.s32 %v3002, 32
    %v3079 = vadd.s32 %v3009, 32
    %v3080 = vadd.s32 %v3016, 32
    %v3081 = vsel %vm3049, %v3065, %v2911
    %v3082 = vsel %vm3050, %v3066, %v2918
    %v3083 = vsel %vm3051, %v3067, %v2925
    %v3084 = vsel %vm3052, %v3068, %v2932
    %v3085 = vsel %vm3053, %v3069, %v2939
    %v3086 = vsel %vm3054, %v3070, %v2946
    %v3087 = vsel %vm3055, %v3071, %v2953
    %v3088 = vsel %vm3056, %v3072, %v2960
    %v3089 = vsel %vm3057, %v3073, %v2967
    %v3090 = vsel %vm3058, %v3074, %v2974
    %v3091 = vsel %vm3059, %v3075, %v2981
    %v3092 = vsel %vm3060, %v3076, %v2988
    %v3093 = vsel %vm3061, %v3077, %v2995
    %v3094 = vsel %vm3062, %v3078, %v3002
    %v3095 = vsel %vm3063, %v3079, %v3009
    %v3096 = vsel %vm3064, %v3080, %v3016
    %vm3097 = vcmp.eq.s32.totalorder %v3081, %v2383
    %vm3098 = vcmp.eq.s32.totalorder %v3082, %v2383
    %vm3099 = vcmp.eq.s32.totalorder %v3083, %v2383
    %vm3100 = vcmp.eq.s32.totalorder %v3084, %v2383
    %vm3101 = vcmp.eq.s32.totalorder %v3085, %v2383
    %vm3102 = vcmp.eq.s32.totalorder %v3086, %v2383
    %vm3103 = vcmp.eq.s32.totalorder %v3087, %v2383
    %vm3104 = vcmp.eq.s32.totalorder %v3088, %v2383
    %vm3105 = vcmp.eq.s32.totalorder %v3089, %v2383
    %vm3106 = vcmp.eq.s32.totalorder %v3090, %v2383
    %vm3107 = vcmp.eq.s32.totalorder %v3091, %v2383
    %vm3108 = vcmp.eq.s32.totalorder %v3092, %v2383
    %vm3109 = vcmp.eq.s32.totalorder %v3093, %v2383
    %vm3110 = vcmp.eq.s32.totalorder %v3094, %v2383
    %vm3111 = vcmp.eq.s32.totalorder %v3095, %v2383
    %vm3112 = vcmp.eq.s32.totalorder %v3096, %v2383
    %v3113 = vsel %vm3097, 1, 0
    %v3114 = vsel %vm3098, 1, 0
    %v3115 = vsel %vm3099, 1, 0
    %v3116 = vsel %vm3100, 1, 0
    %v3117 = vsel %vm3101, 1, 0
    %v3118 = vsel %vm3102, 1, 0
    %v3119 = vsel %vm3103, 1, 0
    %v3120 = vsel %vm3104, 1, 0
    %v3121 = vsel %vm3105, 1, 0
    %v3122 = vsel %vm3106, 1, 0
    %v3123 = vsel %vm3107, 1, 0
    %v3124 = vsel %vm3108, 1, 0
    %v3125 = vsel %vm3109, 1, 0
    %v3126 = vsel %vm3110, 1, 0
    %v3127 = vsel %vm3111, 1, 0
    %v3128 = vsel %vm3112, 1, 0
    %v3129 = vcvt.s32.f32 %v3113
    %v3130 = vcvt.s32.f32 %v3114
    %v3131 = vcvt.s32.f32 %v3115
    %v3132 = vcvt.s32.f32 %v3116
    %v3133 = vcvt.s32.f32 %v3117
    %v3134 = vcvt.s32.f32 %v3118
    %v3135 = vcvt.s32.f32 %v3119
    %v3136 = vcvt.s32.f32 %v3120
    %v3137 = vcvt.s32.f32 %v3121
    %v3138 = vcvt.s32.f32 %v3122
    %v3139 = vcvt.s32.f32 %v3123
    %v3140 = vcvt.s32.f32 %v3124
    %v3141 = vcvt.s32.f32 %v3125
    %v3142 = vcvt.s32.f32 %v3126
    %v3143 = vcvt.s32.f32 %v3127
    %v3144 = vcvt.s32.f32 %v3128
    %vm3145 = vcmp.lt.s32.totalorder %v2383, 0
    %v3146 = vsub.s32 0, %v2383
    %v3147 = vsel %vm3145, %v3146, %v2383
    %v3148 = vshrl.u32 %v3147, 5
    %v3149 = vand.u32 %v3147, 31
    %v3150 = vsub.s32 0, %v3149
    %v3151 = vsel %vm3145, %v3150, %v3149
    %vm3152 = vcmp.ne.s32.totalorder %v3151, 0
    %vm3153 = vcmp.lt.s32.totalorder %v3151, 0
    %vm3154 = vmand %vm3153, %vm3152
    %v3155 = vadd.s32 %v3151, 32
    %v3156 = vsel %vm3154, %v3155, %v3151
    %vm3157 = vcmp.eq.s32.totalorder %v3156, %v45
    %vm3158 = vcmp.eq.s32.totalorder %v3156, %v1967
    %vm3159 = vcmp.eq.s32.totalorder %v3156, %v1968
    %vm3160 = vcmp.eq.s32.totalorder %v3156, %v1969
    %v3161 = vsel %vm3157, 1, 0
    %v3162 = vsel %vm3158, 1, 0
    %v3163 = vsel %vm3159, 1, 0
    %v3164 = vsel %vm3160, 1, 0
    %v3165 = vcvt.s32.f32 %v3161
    %v3166 = vcvt.s32.f32 %v3162
    %v3167 = vcvt.s32.f32 %v3163
    %v3168 = vcvt.s32.f32 %v3164
    %v3169 = vld [vmem:[%s5 + $0x3] ss:$0 sm:$0xff]
    %v3170 = vld [vmem:[%s5 + $0x4] ss:$0 sm:$0xff]
    %v3171 = vmul.f32 %v2900, %v48
    %v3172 = vrot.slane %v3171, 4
    %v3173 = vadd.f32 %v3171, %v3172
    %v3174 = vrot.slane %v3173, 2
    %v3175 = vadd.f32 %v3173, %v3174
    %v3176 = vrot.slane %v3175, 1
    %v3177 = vadd.f32 %v3175, %v3176
    %v3178 = vmul.f32 %v3171, %v2900
    %v3179 = vrot.slane %v3178, 4
    %v3180 = vadd.f32 %v3178, %v3179
    %v3181 = vrot.slane %v3180, 2
    %v3182 = vadd.f32 %v3180, %v3181
    %v3183 = vrot.slane %v3182, 1
    %v3184 = vadd.f32 %v3182, %v3183
    %v3185 = vsel %vm2547, %v3177, %v3184
    %3186 = vmatprep.subr.mxu0 0.0
    %3187 = vmatpush1.msra.mxu0 %v3144
    %3188 = vmatprep.subr.mxu0 0.0
    %3189 = vmatpush1.msra.mxu0 %v3143
    %3190 = vmatprep.subr.mxu0 0.0
    %3191 = vmatpush1.msra.mxu0 %v3142
    %3192 = vmatprep.subr.mxu0 0.0
    %3193 = vmatpush1.msra.mxu0 %v3141
    %3194 = vmatprep.subr.mxu0 0.0
    %3195 = vmatpush1.msra.mxu0 %v3140
    %3196 = vmatprep.subr.mxu0 0.0
    %3197 = vmatpush1.msra.mxu0 %v3139
    %3198 = vmatprep.subr.mxu0 0.0
    %3199 = vmatpush1.msra.mxu0 %v3138
    %3200 = vmatprep.subr.mxu0 0.0
    %3201 = vmatpush1.msra.mxu0 %v3137
    %3202 = vmatprep.subr.mxu0 0.0
    %3203 = vmatpush1.msra.mxu0 %v3136
    %3204 = vmatprep.subr.mxu0 0.0
    %3205 = vmatpush1.msra.mxu0 %v3135
    %3206 = vmatprep.subr.mxu0 0.0
    %3207 = vmatpush1.msra.mxu0 %v3134
    %3208 = vmatprep.subr.mxu0 0.0
    %3209 = vmatpush1.msra.mxu0 %v3133
    %3210 = vmatprep.subr.mxu0 0.0
    %3211 = vmatpush1.msra.mxu0 %v3132
    %3212 = vmatprep.subr.mxu0 0.0
    %3213 = vmatpush1.msra.mxu0 %v3131
    %3214 = vmatprep.subr.mxu0 0.0
    %3215 = vmatpush1.msra.mxu0 %v3130
    %3216 = vmatprep.subr.mxu0 0.0
    %3217 = vmatpush1.msra.mxu0 %v3129
    %3218 = vmatprep.subr.mxu0 0.0
    %3219 = vmatpush2.msra.mxu0 0.0
    %3220 = vmatprep.subr.mxu0 0.0
    %3221 = vmatpush2.msra.mxu0 0.0
    %3222 = vmatprep.subr.mxu0 0.0
    %3223 = vmatpush2.msra.mxu0 0.0
    %3224 = vmatprep.subr.mxu0 0.0
    %3225 = vmatpush2.msra.mxu0 0.0
    %3226 = vmatprep.subr.mxu0 0.0
    %3227 = vmatpush2.msra.mxu0 0.0
    %3228 = vmatprep.subr.mxu0 0.0
    %3229 = vmatpush2.msra.mxu0 0.0
    %3230 = vmatprep.subr.mxu0 0.0
    %3231 = vmatpush2.msra.mxu0 0.0
    %3232 = vmatprep.subr.mxu0 0.0
    %3233 = vmatpush2.msra.mxu0 0.0
    %3234 = vmatprep.subr.mxu0 0.0
    %3235 = vmatpush2.msra.mxu0 0.0
    %3236 = vmatprep.subr.mxu0 0.0
    %3237 = vmatpush2.msra.mxu0 0.0
    %3238 = vmatprep.subr.mxu0 0.0
    %3239 = vmatpush2.msra.mxu0 0.0
    %3240 = vmatprep.subr.mxu0 0.0
    %3241 = vmatpush2.msra.mxu0 0.0
    %3242 = vmatprep.subr.mxu0 0.0
    %3243 = vmatpush2.msra.mxu0 0.0
    %3244 = vmatprep.subr.mxu0 0.0
    %3245 = vmatpush2.msra.mxu0 0.0
    %3246 = vmatprep.subr.mxu0 0.0
    %3247 = vmatpush2.msra.mxu0 0.0
    %3248 = vmatprep.subr.mxu0 0.0
    %3249 = vmatpush2.msra.mxu0 0.0
    %3250 = vmatprep.mubr.f32.mxu0 0.0
    %3251 = vmatmul.mubr.f32.gmra.mxu0 %v3185
    %v3252 = vpop.f32.mrf.mxu0
    %v3253 = vadd.f32 0.0, %v3252
    %v3254 = vpop.f32.mrf.mxu0
    %3255 = vdwg.mxu0
    %v3256 = vmul.f32 %v3253, 0.041666668
    %v3257 = vmul.f32 %v3256, %v3256
    %v3259 = vrot.slane %v3257, 7
    %v3261 = vsub.f32 %v3256, %v3259
    %v3262 = vadd.f32 %v3261, 1e-05
    %v3263 = vrsqrt.pop %v3262
    %v3264 = vmul.f32 %v3263, %v3169
    %v3266 = vrot.slane %v3264, 1
    %v3268 = vmul.f32 %v3256, %v3266
    %v3269 = vsub.f32 %v3170, %v3268
    %v3271 = vrot.slane %v3269, 7
    %v3273 = vsel %vm2547, %v3266, %v3271
    %vm3274 = vcmask 261120
    %v3276 = vsel %vm3274, %v3273, 0
    %3278 = vmatprep.subr.mxu0 0.0
    %3279 = vmatpush1.msra.mxu0 0.0
    %3280 = vmatprep.subr.mxu0 0.0
    %3281 = vmatpush1.msra.mxu0 0.0
    %3282 = vmatprep.subr.mxu0 0.0
    %3283 = vmatpush1.msra.mxu0 0.0
    %3284 = vmatprep.subr.mxu0 0.0
    %3285 = vmatpush1.msra.mxu0 0.0
    %3286 = vmatprep.subr.mxu0 0.0
    %3287 = vmatpush1.msra.mxu0 0.0
    %3288 = vmatprep.subr.mxu0 0.0
    %3289 = vmatpush1.msra.mxu0 0.0
    %3290 = vmatprep.subr.mxu0 0.0
    %3291 = vmatpush1.msra.mxu0 0.0
    %3292 = vmatprep.subr.mxu0 0.0
    %3293 = vmatpush1.msra.mxu0 0.0
    %3294 = vmatprep.subr.mxu0 0.0
    %3295 = vmatpush1.msra.mxu0 0.0
    %3296 = vmatprep.subr.mxu0 0.0
    %3297 = vmatpush1.msra.mxu0 0.0
    %3298 = vmatprep.subr.mxu0 0.0
    %3299 = vmatpush1.msra.mxu0 0.0
    %3300 = vmatprep.subr.mxu0 0.0
    %3301 = vmatpush1.msra.mxu0 0.0
    %3302 = vmatprep.subr.mxu0 0.0
    %3303 = vmatpush1.msra.mxu0 %v3168
    %3304 = vmatprep.subr.mxu0 0.0
    %3305 = vmatpush1.msra.mxu0 %v3167
    %3306 = vmatprep.subr.mxu0 0.0
    %3307 = vmatpush1.msra.mxu0 %v3166
    %3308 = vmatprep.subr.mxu0 0.0
    %3309 = vmatpush1.msra.mxu0 %v3165
    %3310 = vmatprep.subr.mxu0 0.0
    %3311 = vmatpush2.msra.mxu0 0.0
    %3312 = vmatprep.subr.mxu0 0.0
    %3313 = vmatpush2.msra.mxu0 0.0
    %3314 = vmatprep.subr.mxu0 0.0
    %3315 = vmatpush2.msra.mxu0 0.0
    %3316 = vmatprep.subr.mxu0 0.0
    %3317 = vmatpush2.msra.mxu0 0.0
    %3318 = vmatprep.subr.mxu0 0.0
    %3319 = vmatpush2.msra.mxu0 0.0
    %3320 = vmatprep.subr.mxu0 0.0
    %3321 = vmatpush2.msra.mxu0 0.0
    %3322 = vmatprep.subr.mxu0 0.0
    %3323 = vmatpush2.msra.mxu0 0.0
    %3324 = vmatprep.subr.mxu0 0.0
    %3325 = vmatpush2.msra.mxu0 0.0
    %3326 = vmatprep.subr.mxu0 0.0
    %3327 = vmatpush2.msra.mxu0 0.0
    %3328 = vmatprep.subr.mxu0 0.0
    %3329 = vmatpush2.msra.mxu0 0.0
    %3330 = vmatprep.subr.mxu0 0.0
    %3331 = vmatpush2.msra.mxu0 0.0
    %3332 = vmatprep.subr.mxu0 0.0
    %3333 = vmatpush2.msra.mxu0 0.0
    %3334 = vmatprep.subr.mxu0 0.0
    %3335 = vmatpush2.msra.mxu0 0.0
    %3336 = vmatprep.subr.mxu0 0.0
    %3337 = vmatpush2.msra.mxu0 0.0
    %3338 = vmatprep.subr.mxu0 0.0
    %3339 = vmatpush2.msra.mxu0 0.0
    %3340 = vmatprep.subr.mxu0 0.0
    %3341 = vmatpush2.msra.mxu0 0.0
    %3342 = vmatprep.mubr.f32.mxu0 0.0
    %3343 = vmatmul.mubr.f32.gmra.mxu0 %v3276
    %v3344 = vpop.f32.mrf.mxu0
    %v3345 = vadd.f32 0.0, %v3344
    %v3346 = vpop.f32.mrf.mxu0
    %3347 = vdwg.mxu0
    %v3348 = vlaneseq
    %v3349 = vshrl.u32 %v3348, 7
    %v3350 = vsub.s32 0, %v3349
    %v3351 = vrot.slane %v3345, %v3350
    %v3352 = vmul.f32 %v2900, %v3351
    %v3353 = vlaneseq
    %v3354 = vshrl.u32 %v3353, 7
    %v3355 = vsub.s32 1, %v3354
    %v3356 = vrot.slane %v3345, %v3355
    %v3357 = vadd.f32 %v3352, %v3356
    %v3358 = vmax.f32 %v3357, 0.0
    %v3359 = vpack.c.bf16 %v3358, %v3358
    %v3360 = vld [vmem:[%s4] sm:$0xf]
    %v3361 = vld [vmem:[%s4 + $0x4] sm:$0xf]
    %v3362 = vld [vmem:[%s4 + $0x8] sm:$0xf]
    %v3363 = vld [vmem:[%s4 + $0xc] sm:$0xf]
    %v3364 = vld [vmem:[%s4 + $0x10] sm:$0xf]
    %v3365 = vld [vmem:[%s4 + $0x14] sm:$0xf]
    %v3366 = vld [vmem:[%s4 + $0x18] sm:$0xf]
    %v3367 = vld [vmem:[%s4 + $0x1c] sm:$0xf]
    %v3368 = vld [vmem:[%s4 + $0x20] sm:$0xf]
    %v3369 = vld [vmem:[%s4 + $0x24] sm:$0xf]
    %v3370 = vld [vmem:[%s4 + $0x28] sm:$0xf]
    %v3371 = vld [vmem:[%s4 + $0x2c] sm:$0xf]
    %v3372 = vld [vmem:[%s4 + $0x30] sm:$0xf]
    %v3373 = vld [vmem:[%s4 + $0x34] sm:$0xf]
    %v3374 = vld [vmem:[%s4 + $0x38] sm:$0xf]
    %v3375 = vld [vmem:[%s4 + $0x3c] sm:$0xf]
    %v3392 = vunpack.c.l.b16 %v3360
    %v3393 = vunpack.c.l.b16 %v3361
    %v3394 = vunpack.c.l.b16 %v3362
    %v3395 = vunpack.c.l.b16 %v3363
    %v3396 = vunpack.c.l.b16 %v3364
    %v3397 = vunpack.c.l.b16 %v3365
    %v3398 = vunpack.c.l.b16 %v3366
    %v3399 = vunpack.c.l.b16 %v3367
    %v3400 = vunpack.c.l.b16 %v3368
    %v3401 = vunpack.c.l.b16 %v3369
    %v3402 = vunpack.c.l.b16 %v3370
    %v3403 = vunpack.c.l.b16 %v3371
    %v3404 = vunpack.c.l.b16 %v3372
    %v3405 = vunpack.c.l.b16 %v3373
    %v3406 = vunpack.c.l.b16 %v3374
    %v3407 = vunpack.c.l.b16 %v3375
    %v3408 = vpack.c.b16 %v3393, %v3392
    %v3409 = vpack.c.b16 %v3395, %v3394
    %v3410 = vpack.c.b16 %v3397, %v3396
    %v3411 = vpack.c.b16 %v3399, %v3398
    %v3412 = vpack.c.b16 %v3401, %v3400
    %v3413 = vpack.c.b16 %v3403, %v3402
    %v3414 = vpack.c.b16 %v3405, %v3404
    %v3415 = vpack.c.b16 %v3407, %v3406
    %3424 = vmatprep.subr.bf16.mxu0 0
    %3425 = vmatpush1.bf16.msra.mxu0 %v3415
    %3426 = vmatprep.subr.bf16.mxu0 0
    %3427 = vmatpush1.bf16.msra.mxu0 %v3414
    %3428 = vmatprep.subr.bf16.mxu0 0
    %3429 = vmatpush1.bf16.msra.mxu0 %v3413
    %3430 = vmatprep.subr.bf16.mxu0 0
    %3431 = vmatpush1.bf16.msra.mxu0 %v3412
    %3432 = vmatprep.subr.bf16.mxu0 0
    %3433 = vmatpush1.bf16.msra.mxu0 %v3411
    %3434 = vmatprep.subr.bf16.mxu0 0
    %3435 = vmatpush1.bf16.msra.mxu0 %v3410
    %3436 = vmatprep.subr.bf16.mxu0 0
    %3437 = vmatpush1.bf16.msra.mxu0 %v3409
    %3438 = vmatprep.subr.bf16.mxu0 0
    %3439 = vmatpush1.bf16.msra.mxu0 %v3408
    %3440 = vmatprep.subr.bf16.mxu0 0
    %3441 = vmatpush2.bf16.msra.mxu0 0
    %3442 = vmatprep.subr.bf16.mxu0 0
    %3443 = vmatpush2.bf16.msra.mxu0 0
    %3444 = vmatprep.subr.bf16.mxu0 0
    %3445 = vmatpush2.bf16.msra.mxu0 0
    %3446 = vmatprep.subr.bf16.mxu0 0
    %3447 = vmatpush2.bf16.msra.mxu0 0
    %3448 = vmatprep.subr.bf16.mxu0 0
    %3449 = vmatpush2.bf16.msra.mxu0 0
    %3450 = vmatprep.subr.bf16.mxu0 0
    %3451 = vmatpush2.bf16.msra.mxu0 0
    %3452 = vmatprep.subr.bf16.mxu0 0
    %3453 = vmatpush2.bf16.msra.mxu0 0
    %3454 = vmatprep.subr.bf16.mxu0 0
    %3455 = vmatpush2.bf16.msra.mxu0 0
    %3456 = vmatprep.mubr.bf16.mxu0 0
    %3457 = vmatmul.mubr.bf16.gmra.mxu0 %v3359
    %v3458 = vpop.f32.mrf.mxu0
    %v3459 = vadd.f32 0.0, %v3458
    %v3460 = vpop.f32.mrf.mxu0
    %v3461 = vpop.f32.mrf.mxu0
    %v3462 = vpop.f32.mrf.mxu0
    %3463 = vdwg.mxu0
    %3464 = vst [vmem:[#allocation5] sm:$0xff] %v3459
    %v3465 = vld [vmem:[%s5 + $0x5] ss:$0 sm:$0xff]
    %v3466 = vld [vmem:[%s5 + $0x6] ss:$0 sm:$0xff]
    %v3467 = vmul.f32 %v3459, %v48
    %v3468 = vrot.slane %v3467, 4
    %v3469 = vadd.f32 %v3467, %v3468
    %v3470 = vrot.slane %v3469, 2
    %v3471 = vadd.f32 %v3469, %v3470
    %v3472 = vrot.slane %v3471, 1
    %v3473 = vadd.f32 %v3471, %v3472
    %v3474 = vmul.f32 %v3473, 0.16666667
    %v3475 = vmul.f32 %v3467, %v3459
    %v3476 = vrot.slane %v3475, 4
    %v3477 = vadd.f32 %v3475, %v3476
    %v3478 = vrot.slane %v3477, 2
    %v3479 = vadd.f32 %v3477, %v3478
    %v3480 = vrot.slane %v3479, 1
    %v3481 = vadd.f32 %v3479, %v3480
    %v3482 = vmul.f32 %v3481, 0.16666667
    %v3483 = vmul.f32 %v3474, %v3474
    %v3484 = vsub.f32 %v3482, %v3483
    %v3485 = vadd.f32 %v3484, 1e-05
    %v3486 = vrsqrt.pop %v3485
    %v3487 = vmul.f32 %v3486, %v3465
    %v3488 = vmul.f32 %v3474, %v3487
    %v3489 = vsub.f32 %v3466, %v3488
    %v3490 = vmul.f32 %v3459, %v3487
    %v3491 = vadd.f32 %v3490, %v3489
    %v3492 = vmax.f32 %v3491, 0.0
    %v3493 = vld [vmem:[%s6] sm:$0xff]
    %v3494 = vld [vmem:[%s6 + $0x8] sm:$0xff]
    %v3495 = vld [vmem:[%s6 + $0x10] sm:$0xff]
    %v3496 = vld [vmem:[%s6 + $0x18] sm:$0xff]
    %v3497 = vld [vmem:[%s6 + $0x20] sm:$0xff]
    %v3498 = vld [vmem:[%s6 + $0x28] sm:$0xff]
    %v3499 = vld [vmem:[%s6 + $0x30] sm:$0xff]
    %v3500 = vld [vmem:[%s6 + $0x38] sm:$0xff]
    %v3501 = vld [vmem:[%s6 + $0x40] sm:$0xff]
    %v3502 = vld [vmem:[%s6 + $0x48] sm:$0xff]
    %v3503 = vld [vmem:[%s6 + $0x50] sm:$0xff]
    %v3504 = vld [vmem:[%s6 + $0x58] sm:$0xff]
    %v3505 = vld [vmem:[%s6 + $0x60] sm:$0xff]
    %v3506 = vld [vmem:[%s6 + $0x68] sm:$0xff]
    %v3507 = vld [vmem:[%s6 + $0x70] sm:$0xff]
    %v3508 = vld [vmem:[%s6 + $0x78] sm:$0xff]
    %3509 = vmatprep.subr.mxu0 0.0
    %3510 = vmatpush1.msra.mxu0 %v3508
    %3511 = vmatprep.subr.mxu0 0.0
    %3512 = vmatpush1.msra.mxu0 %v3507
    %3513 = vmatprep.subr.mxu0 0.0
    %3514 = vmatpush1.msra.mxu0 %v3506
    %3515 = vmatprep.subr.mxu0 0.0
    %3516 = vmatpush1.msra.mxu0 %v3505
    %3517 = vmatprep.subr.mxu0 0.0
    %3518 = vmatpush1.msra.mxu0 %v3504
    %3519 = vmatprep.subr.mxu0 0.0
    %3520 = vmatpush1.msra.mxu0 %v3503
    %3521 = vmatprep.subr.mxu0 0.0
    %3522 = vmatpush1.msra.mxu0 %v3502
    %3523 = vmatprep.subr.mxu0 0.0
    %3524 = vmatpush1.msra.mxu0 %v3501
    %3525 = vmatprep.subr.mxu0 0.0
    %3526 = vmatpush1.msra.mxu0 %v3500
    %3527 = vmatprep.subr.mxu0 0.0
    %3528 = vmatpush1.msra.mxu0 %v3499
    %3529 = vmatprep.subr.mxu0 0.0
    %3530 = vmatpush1.msra.mxu0 %v3498
    %3531 = vmatprep.subr.mxu0 0.0
    %3532 = vmatpush1.msra.mxu0 %v3497
    %3533 = vmatprep.subr.mxu0 0.0
    %3534 = vmatpush1.msra.mxu0 %v3496
    %3535 = vmatprep.subr.mxu0 0.0
    %3536 = vmatpush1.msra.mxu0 %v3495
    %3537 = vmatprep.subr.mxu0 0.0
    %3538 = vmatpush1.msra.mxu0 %v3494
    %3539 = vmatprep.subr.mxu0 0.0
    %3540 = vmatpush1.msra.mxu0 %v3493
    %3541 = vmatprep.subr.mxu0 0.0
    %3542 = vmatpush2.msra.mxu0 0.0
    %3543 = vmatprep.subr.mxu0 0.0
    %3544 = vmatpush2.msra.mxu0 0.0
    %3545 = vmatprep.subr.mxu0 0.0
    %3546 = vmatpush2.msra.mxu0 0.0
    %3547 = vmatprep.subr.mxu0 0.0
    %3548 = vmatpush2.msra.mxu0 0.0
    %3549 = vmatprep.subr.mxu0 0.0
    %3550 = vmatpush2.msra.mxu0 0.0
    %3551 = vmatprep.subr.mxu0 0.0
    %3552 = vmatpush2.msra.mxu0 0.0
    %3553 = vmatprep.subr.mxu0 0.0
    %3554 = vmatpush2.msra.mxu0 0.0
    %3555 = vmatprep.subr.mxu0 0.0
    %3556 = vmatpush2.msra.mxu0 0.0
    %3557 = vmatprep.subr.mxu0 0.0
    %3558 = vmatpush2.msra.mxu0 0.0
    %3559 = vmatprep.subr.mxu0 0.0
    %3560 = vmatpush2.msra.mxu0 0.0
    %3561 = vmatprep.subr.mxu0 0.0
    %3562 = vmatpush2.msra.mxu0 0.0
    %3563 = vmatprep.subr.mxu0 0.0
    %3564 = vmatpush2.msra.mxu0 0.0
    %3565 = vmatprep.subr.mxu0 0.0
    %3566 = vmatpush2.msra.mxu0 0.0
    %3567 = vmatprep.subr.mxu0 0.0
    %3568 = vmatpush2.msra.mxu0 0.0
    %3569 = vmatprep.subr.mxu0 0.0
    %3570 = vmatpush2.msra.mxu0 0.0
    %3571 = vmatprep.subr.mxu0 0.0
    %3572 = vmatpush2.msra.mxu0 0.0
    %3573 = vmatprep.mubr.f32.mxu0 0.0
    %3574 = vmatmul.mubr.f32.gmra.mxu0 %v3492
    %v3575 = vpop.f32.mrf.mxu0
    %v3576 = vadd.f32 0.0, %v3575
    %v3577 = vpop.f32.mrf.mxu0
    %3578 = vdwg.mxu0
    %v3579 = vld [vmem:[%s5 + $0x7] ss:$0 sm:$0xff]
    %v3580 = vld [vmem:[%s5 + $0x20] ss:$0 sm:$0xff]
    %v3581 = vmul.f32 %v3576, %v48
    %v3582 = vsel %vm3274, %v3581, 0.0
    %v3583 = vrot.slane %v3582, 4
    %v3584 = vadd.f32 %v3582, %v3583
    %v3585 = vrot.slane %v3584, 2
    %v3586 = vadd.f32 %v3584, %v3585
    %v3587 = vrot.slane %v3586, 1
    %v3588 = vadd.f32 %v3586, %v3587
    %v3589 = vmul.f32 %v3588, 0.16666667
    %v3590 = vmul.f32 %v3581, %v3576
    %v3591 = vsel %vm3274, %v3590, 0.0
    %v3592 = vrot.slane %v3591, 4
    %v3593 = vadd.f32 %v3591, %v3592
    %v3594 = vrot.slane %v3593, 2
    %v3595 = vadd.f32 %v3593, %v3594
    %v3596 = vrot.slane %v3595, 1
    %v3597 = vadd.f32 %v3595, %v3596
    %v3598 = vmul.f32 %v3597, 0.16666667
    %v3599 = vmul.f32 %v3589, %v3589
    %v3600 = vsub.f32 %v3598, %v3599
    %v3601 = vadd.f32 %v3600, 1e-05
    %v3602 = vrsqrt.pop %v3601
    %v3603 = vmul.f32 %v3602, %v3579
    %v3604 = vmul.f32 %v3589, %v3603
    %v3605 = vsub.f32 %v3580, %v3604
    %v3606 = vmul.f32 %v3576, %v3603
    %v3607 = vadd.f32 %v3606, %v3605
    %v3608 = vmax.f32 %v3607, 0.0
    %v3609 = vld [vmem:[%s6 + $0x80] sm:$0xff]
    %v3610 = vld [vmem:[%s6 + $0x88] sm:$0xff]
    %v3611 = vld [vmem:[%s6 + $0x90] sm:$0xff]
    %v3612 = vld [vmem:[%s6 + $0x98] sm:$0xff]
    %v3613 = vld [vmem:[%s5 + $0x21] ss:$0 sm:$0xff]
    %v3615 = vsel %vm3274, %v3608, 0
    %3617 = vmatprep.subr.mxu0 0.0
    %3618 = vmatpush1.msra.mxu0 0.0
    %3619 = vmatprep.subr.mxu0 0.0
    %3620 = vmatpush1.msra.mxu0 0.0
    %3621 = vmatprep.subr.mxu0 0.0
    %3622 = vmatpush1.msra.mxu0 0.0
    %3623 = vmatprep.subr.mxu0 0.0
    %3624 = vmatpush1.msra.mxu0 0.0
    %3625 = vmatprep.subr.mxu0 0.0
    %3626 = vmatpush1.msra.mxu0 0.0
    %3627 = vmatprep.subr.mxu0 0.0
    %3628 = vmatpush1.msra.mxu0 0.0
    %3629 = vmatprep.subr.mxu0 0.0
    %3630 = vmatpush1.msra.mxu0 0.0
    %3631 = vmatprep.subr.mxu0 0.0
    %3632 = vmatpush1.msra.mxu0 0.0
    %3633 = vmatprep.subr.mxu0 0.0
    %3634 = vmatpush1.msra.mxu0 0.0
    %3635 = vmatprep.subr.mxu0 0.0
    %3636 = vmatpush1.msra.mxu0 0.0
    %3637 = vmatprep.subr.mxu0 0.0
    %3638 = vmatpush1.msra.mxu0 0.0
    %3639 = vmatprep.subr.mxu0 0.0
    %3640 = vmatpush1.msra.mxu0 0.0
    %3641 = vmatprep.subr.mxu0 0.0
    %3642 = vmatpush1.msra.mxu0 %v3612
    %3643 = vmatprep.subr.mxu0 0.0
    %3644 = vmatpush1.msra.mxu0 %v3611
    %3645 = vmatprep.subr.mxu0 0.0
    %3646 = vmatpush1.msra.mxu0 %v3610
    %3647 = vmatprep.subr.mxu0 0.0
    %3648 = vmatpush1.msra.mxu0 %v3609
    %3649 = vmatprep.subr.mxu0 0.0
    %3650 = vmatpush2.msra.mxu0 0.0
    %3651 = vmatprep.subr.mxu0 0.0
    %3652 = vmatpush2.msra.mxu0 0.0
    %3653 = vmatprep.subr.mxu0 0.0
    %3654 = vmatpush2.msra.mxu0 0.0
    %3655 = vmatprep.subr.mxu0 0.0
    %3656 = vmatpush2.msra.mxu0 0.0
    %3657 = vmatprep.subr.mxu0 0.0
    %3658 = vmatpush2.msra.mxu0 0.0
    %3659 = vmatprep.subr.mxu0 0.0
    %3660 = vmatpush2.msra.mxu0 0.0
    %3661 = vmatprep.subr.mxu0 0.0
    %3662 = vmatpush2.msra.mxu0 0.0
    %3663 = vmatprep.subr.mxu0 0.0
    %3664 = vmatpush2.msra.mxu0 0.0
    %3665 = vmatprep.subr.mxu0 0.0
    %3666 = vmatpush2.msra.mxu0 0.0
    %3667 = vmatprep.subr.mxu0 0.0
    %3668 = vmatpush2.msra.mxu0 0.0
    %3669 = vmatprep.subr.mxu0 0.0
    %3670 = vmatpush2.msra.mxu0 0.0
    %3671 = vmatprep.subr.mxu0 0.0
    %3672 = vmatpush2.msra.mxu0 0.0
    %3673 = vmatprep.subr.mxu0 0.0
    %3674 = vmatpush2.msra.mxu0 0.0
    %3675 = vmatprep.subr.mxu0 0.0
    %3676 = vmatpush2.msra.mxu0 0.0
    %3677 = vmatprep.subr.mxu0 0.0
    %3678 = vmatpush2.msra.mxu0 0.0
    %3679 = vmatprep.subr.mxu0 0.0
    %3680 = vmatpush2.msra.mxu0 0.0
    %3681 = vmatprep.mubr.f32.mxu0 0.0
    %3682 = vmatmul.mubr.f32.gmra.mxu0 %v3615
    %v3683 = vpop.f32.mrf.mxu0
    %v3684 = vadd.f32 %v3613, %v3683
    %v3685 = vpop.f32.mrf.mxu0
    %3686 = vdwg.mxu0
    %v3687 = vxor.u32 %v3684, 2147483648
    %v3688 = vmul.f32 %v3687, 1.442695
    %v3689 = vpow.pop %v3688
    %v3690 = vadd.f32 %v3689, 1.0
    %v3691 = vrcp.pop %v3690
    %v3692 = vmul.f32 1.0, %v3691
    %3694 = vset.pattern.permute.xlu0 0
    %3695 = vperm.xlu0 %3694, %v3692
    %v3696 = vpop.permute.xlu0 %3695
    %3698 = vst [vmem:[%s8] sm:$0xff] %v3696
    // Predicated region
    $region34: #{discriminator_forward.1} parent=1 // pred_check
      _
    $region35: #{discriminator_forward.1} parent=1 // pred_check_branch
      %3700 = sbr.rel (0) target = $region37
    $region36: #{discriminator_forward.1} parent=1 // pred_region
      %s3702 = ssub.s32 128, 128
      %3703 = vsyncadd [#allocation4], %s3702
      %s3705 = sshll.u32 [#allocation5], 4
      %s3706 = int_to_ptr.vmem [resolvable:$true] %s3705
      %3708 = dma.vmem_to_hbm [thread:$0]  %s3706, 128, %s7, [#allocation4]
    $region37: #{discriminator_forward.1} parent=1 // pred_fallthru
      _
    // Predicated region
    $region38: #{discriminator_forward.1} parent=1 // pred_check
      _
    $region39: #{discriminator_forward.1} parent=1 // pred_check_branch
      %3710 = sbr.rel (0) target = $region41
    $region40: #{discriminator_forward.1} parent=1 // pred_region
      _
    $region41: #{discriminator_forward.1} parent=1 // pred_fallthru
      _
    // Predicated region
    $region42: #{discriminator_forward.1} parent=1 // pred_check
      _
    $region43: #{discriminator_forward.1} parent=1 // pred_check_branch
      %3712 = sbr.rel (0) target = $region45
    $region44: #{discriminator_forward.1} parent=1 // pred_region
      %3713 = dma.done [#allocation4], 128
    $region45: #{discriminator_forward.1} parent=1 // pred_fallthru
      _
    // Predicated region
    $region46: #{discriminator_forward.1} parent=1 // pred_check
      _
    $region47: #{discriminator_forward.1} parent=1 // pred_check_branch
      %3715 = sbr.rel (0) target = $region49
    $region48: #{discriminator_forward.1} parent=1 // pred_region
      _
    $region49: #{discriminator_forward.1} parent=1 // pred_fallthru
      _
    %3716 = vsyncpa [#allocation3], 1
    %3717 = vsyncpa [#allocation4], 1

</llo_original>
